<compile_context>
chip_gen: v6e
topology: v6e:2x2x1
jax: 0.10.0
libtpu: 0.0.40
codegen_flags: <defaults>
</compile_context>

<pallas_src>
import jax
import jax.numpy as jnp
import numpy as np
from jax import lax
from jax.experimental import pallas as pl
from jax.experimental.pallas import tpu as pltpu

H, W = 16, 16            # spatial size
C1, C2 = 32, 64          # conv channel counts
K1 = 16                  # conv1 im2col K: 9 taps zero-padded to 16
NUM_CLASSES = 10
BATCH = 2


def cnn1_kernel(p1_ref, w1_ref, b1_ref, w2_ref, b2_ref, wfc_ref, bfc_ref,
                out_ref, pad_ref):
    BT = p1_ref.shape[0]                                   # images per grid step (static)
    H2, W2 = H // 2, W // 2

    # ---- Conv1 (1 -> 32, 3x3, pad=1): one MXU matmul over the im2col taps -------------
    # p1_ref: (BT, 16, 256)  = (batch, taps, h*16+w), lane-dense (256 lanes).
    p1 = p1_ref[...]
    patches1 = jnp.transpose(p1, (0, 2, 1)).reshape(BT * H * W, K1)   # (BT*256, 16)
    h1 = jnp.dot(patches1, w1_ref[...], preferred_element_type=jnp.float32)
    h1 = jnp.maximum(h1 + b1_ref[...], 0.0)                # (BT*256, 32), rows = b*256+h*16+w

    # ---- MaxPool2d(2): vectorized reshape + max (w-pairs, then h-pairs) ---------------
    hpw = jnp.max(h1.reshape(BT * H * W2, 2, C1), axis=1)             # (BT*128, 32)
    pooled = jnp.max(hpw.reshape(BT * H2, 2, W2, C1), axis=1)         # (BT*8, 8, 32)
    pooled4 = pooled.reshape(BT, H2, W2, C1)                          # (BT, 8, 8, 32)

    # ---- zero-padded (pad=1) pooled activations in a VMEM scratch (no concatenates) ---
    pad_ref[...] = jnp.zeros_like(pad_ref)                            # (BT, 10, 10, 32)
    pad_ref[:, 1:1 + H2, 1:1 + W2, :] = pooled4
    p = pad_ref[...]

    # ---- Conv2 (32 -> 64, 3x3, pad=1): one fused im2col matmul, K = 9*32 = 288 --------
    cols = [p[:, kh:kh + H2, kw:kw + W2, :].reshape(BT * H2 * W2, C1)
            for kh in range(3) for kw in range(3)]
    patches2 = jnp.concatenate(cols, axis=-1)                         # (BT*64, 288)
    h2 = jnp.dot(patches2, w2_ref[...], preferred_element_type=jnp.float32)
    h2 = jnp.maximum(h2 + b2_ref[...], 0.0)                           # (BT*64, 64)

    # ---- AdaptiveAvgPool2d((1,1)) == mean over the 64 spatial positions per image -----
    gap = jnp.mean(h2.reshape(BT, H2 * W2, C2), axis=1)               # (BT, 64)

    # ---- Linear(64 -> num_classes): one (BT, nc) slab per grid step -------------------
    logits = jnp.dot(gap, wfc_ref[...], preferred_element_type=jnp.float32) + bfc_ref[...]
    out_ref[...] = logits


def cnn1_forward(x_nchw, w1_oihw, b1, w2_oihw, b2, wfc, bfc):
    """x_nchw: (B, 1, 16, 16) f32, params in PyTorch layouts. Returns (B, num_classes)."""
    B = x_nchw.shape[0]
    nc = wfc.shape[0]

    # --- parameter layout massaging (pure transposes/reshapes, done once by XLA) -------
    w1_k = jnp.transpose(w1_oihw, (2, 3, 1, 0)).reshape(9, C1)        # (tap=3kh+kw, cout)
    w1_k = jnp.pad(w1_k, ((0, K1 - 9), (0, 0)))                       # pad taps 9 -> 16
    w2_k = jnp.transpose(w2_oihw, (2, 3, 1, 0)).reshape(9 * C1, C2)   # ((3kh+kw)*32+cin, cout)
    wfc_k = wfc.T                                                     # (64, nc)
    b1_k = b1.reshape(1, C1)
    b2_k = b2.reshape(1, C2)
    bfc_k = bfc.reshape(1, nc)

    # --- input: squeeze channel-1 dim, zero-pad, im2col (transposed => lane-dense) -----
    x = x_nchw[:, 0, :, :].astype(jnp.float32)                        # (B, 16, 16)
    xp = jnp.pad(x, ((0, 0), (1, 1), (1, 1)))                         # (B, 18, 18)
    taps = [xp[:, kh:kh + H, kw:kw + W].reshape(B, 1, H * W)
            for kh in range(3) for kw in range(3)]
    taps.append(jnp.zeros((B, K1 - 9, H * W), jnp.float32))
    p1 = jnp.concatenate(taps, axis=1)                                # (B, 16, 256)

    # --- batch tiling: BT images per grid step ------------------------------------------
    BT = B if B <= 8 else 8
    Bp = -(-B // BT) * BT
    if Bp != B:
        p1 = jnp.pad(p1, ((0, Bp - B), (0, 0), (0, 0)))

    out = pl.pallas_call(
        cnn1_kernel,
        out_shape=jax.ShapeDtypeStruct((Bp, nc), jnp.float32),
        grid_spec=pltpu.PrefetchScalarGridSpec(
            num_scalar_prefetch=0,
            grid=(Bp // BT,),
            in_specs=[
                pl.BlockSpec((BT, K1, H * W), lambda i: (i, 0, 0)),   # conv1 im2col patches
                pl.BlockSpec((K1, C1), lambda i: (0, 0)),             # conv1 weight (padded)
                pl.BlockSpec((1, C1), lambda i: (0, 0)),              # conv1 bias
                pl.BlockSpec((9 * C1, C2), lambda i: (0, 0)),         # conv2 weight (im2col)
                pl.BlockSpec((1, C2), lambda i: (0, 0)),              # conv2 bias
                pl.BlockSpec((C2, nc), lambda i: (0, 0)),             # fc weight
                pl.BlockSpec((1, nc), lambda i: (0, 0)),              # fc bias
            ],
            out_specs=pl.BlockSpec((BT, nc), lambda i: (i, 0)),
            scratch_shapes=[pltpu.VMEM((BT, H // 2 + 2, W // 2 + 2, C1), jnp.float32)],
        ),
        compiler_params=pltpu.CompilerParams(dimension_semantics=("parallel",)),
    )(p1, w1_k, b1_k, w2_k, b2_k, wfc_k, bfc_k)
    return out[:B]


def reference_forward(x_nchw, w1_oihw, b1, w2_oihw, b2, wfc_t, bfc):
    """Pure-JAX reference matching the PyTorch module semantics."""
    x = jnp.transpose(x_nchw, (0, 2, 3, 1))                            # NHWC
    h = lax.conv_general_dilated(
        x, jnp.transpose(w1_oihw, (2, 3, 1, 0)), (1, 1), "SAME",
        dimension_numbers=("NHWC", "HWIO", "NHWC"), precision=lax.Precision.HIGHEST)
    h = jax.nn.relu(h + b1)
    h = lax.reduce_window(h, -jnp.inf, lax.max, (1, 2, 2, 1), (1, 2, 2, 1), "VALID")
    h = lax.conv_general_dilated(
        h, jnp.transpose(w2_oihw, (2, 3, 1, 0)), (1, 1), "SAME",
        dimension_numbers=("NHWC", "HWIO", "NHWC"), precision=lax.Precision.HIGHEST)
    h = jax.nn.relu(h + b2)
    g = jnp.mean(h, axis=(1, 2))                                       # (B, 64)
    return jnp.dot(g, wfc_t.T, precision=lax.Precision.HIGHEST) + bfc


if __name__ == "__main__":
    key = jax.random.PRNGKey(0)
    kx, k1, k2, k3, k4, k5, k6 = jax.random.split(key, 7)

    # Deterministic parameters (PyTorch shapes: OIHW convs, (out,in) linear).
    w1_oihw = 0.2 * jax.random.normal(k1, (C1, 1, 3, 3), jnp.float32)
    b1 = 0.1 * jax.random.normal(k2, (C1,), jnp.float32)
    w2_oihw = 0.05 * jax.random.normal(k3, (C2, C1, 3, 3), jnp.float32)
    b2 = 0.1 * jax.random.normal(k4, (C2,), jnp.float32)
    wfc = 0.1 * jax.random.normal(k5, (NUM_CLASSES, C2), jnp.float32)   # (out, in)
    bfc = 0.1 * jax.random.normal(k6, (NUM_CLASSES,), jnp.float32)

    x = jax.random.normal(kx, (BATCH, 1, H, W), jnp.float32)            # NCHW input

    out = jax.block_until_ready(cnn1_forward(x, w1_oihw, b1, w2_oihw, b2, wfc, bfc))

    ref = reference_forward(x, w1_oihw, b1, w2_oihw, b2, wfc, bfc)
    np.testing.assert_allclose(np.asarray(out), np.asarray(ref), rtol=2e-2, atol=2e-2)

    print("KERNEL_OK")
</pallas_src>

<mosaic_0001>
module attributes {stable_mosaic.version = 11 : i64} {
  func.func @cnn1_kernel(%arg0: i32, %arg1: memref<2x16x256xf32, #tpu.memory_space<vmem>>, %arg2: memref<16x32xf32, #tpu.memory_space<vmem>>, %arg3: memref<1x32xf32, #tpu.memory_space<vmem>>, %arg4: memref<288x64xf32, #tpu.memory_space<vmem>>, %arg5: memref<1x64xf32, #tpu.memory_space<vmem>>, %arg6: memref<64x10xf32, #tpu.memory_space<vmem>>, %arg7: memref<1x10xf32, #tpu.memory_space<vmem>>, %arg8: memref<2x10xf32, #tpu.memory_space<vmem>>, %arg9: memref<2x10x10x32xf32, #tpu.memory_space<vmem>>) attributes {dimension_semantics = [#tpu.dimension_semantics<parallel>], iteration_bounds = array<i64: 1>, scalar_prefetch = 0 : i64, scratch_operands = 1 : i64, tpu.core_type = #tpu.core_type<tc>, window_params = [{transform_indices = @transform_0, window_bounds = array<i64: 2, 16, 256>}, {pipeline_mode = #tpu.pipeline_mode<synchronous>, transform_indices = @transform_1, window_bounds = array<i64: 16, 32>}, {pipeline_mode = #tpu.pipeline_mode<synchronous>, transform_indices = @transform_2, window_bounds = array<i64: 1, 32>}, {pipeline_mode = #tpu.pipeline_mode<synchronous>, transform_indices = @transform_3, window_bounds = array<i64: 288, 64>}, {pipeline_mode = #tpu.pipeline_mode<synchronous>, transform_indices = @transform_4, window_bounds = array<i64: 1, 64>}, {pipeline_mode = #tpu.pipeline_mode<synchronous>, transform_indices = @transform_5, window_bounds = array<i64: 64, 10>}, {pipeline_mode = #tpu.pipeline_mode<synchronous>, transform_indices = @transform_6, window_bounds = array<i64: 1, 10>}, {transform_indices = @transform_7, window_bounds = array<i64: 2, 10>}]} {
    %c0 = arith.constant 0 : index
    %c0_0 = arith.constant 0 : index
    %c0_1 = arith.constant 0 : index
    %0 = vector.load %arg1[%c0, %c0_0, %c0_1] : memref<2x16x256xf32, #tpu.memory_space<vmem>>, vector<2x16x256xf32>
    %1 = tpu.transpose %0, [0, 2, 1] : vector<2x16x256xf32> -> vector<2x256x16xf32>
    %2 = vector.shape_cast %1 : vector<2x256x16xf32> to vector<512x16xf32>
    %c0_2 = arith.constant 0 : index
    %c0_3 = arith.constant 0 : index
    %3 = vector.load %arg2[%c0_2, %c0_3] : memref<16x32xf32, #tpu.memory_space<vmem>>, vector<16x32xf32>
    %cst = arith.constant dense<0.000000e+00> : vector<512x32xf32>
    %4 = tpu.matmul %2, %3, %cst {dimension_numbers = #tpu.dot_dimension_numbers<[1], [0], [0], [1], [0, 0, 1, 1], [], []>} : vector<512x16xf32>, vector<16x32xf32>, vector<512x32xf32> -> vector<512x32xf32>
    %c0_4 = arith.constant 0 : index
    %c0_5 = arith.constant 0 : index
    %5 = vector.load %arg3[%c0_4, %c0_5] : memref<1x32xf32, #tpu.memory_space<vmem>>, vector<1x32xf32>
    %6 = vector.broadcast %5 : vector<1x32xf32> to vector<512x32xf32>
    %7 = arith.addf %4, %6 : vector<512x32xf32>
    %cst_6 = arith.constant 0.000000e+00 : f32
    %8 = vector.broadcast %cst_6 : f32 to vector<512x32xf32>
    %9 = arith.maximumf %7, %8 : vector<512x32xf32>
    %10 = vector.shape_cast %9 : vector<512x32xf32> to vector<256x2x32xf32>
    %cst_7 = arith.constant dense<0xFF800000> : vector<256x32xf32>
    %11 = vector.multi_reduction <maximumf>, %10, %cst_7 [1] : vector<256x2x32xf32> to vector<256x32xf32>
    %12 = vector.shape_cast %11 : vector<256x32xf32> to vector<16x2x8x32xf32>
    %cst_8 = arith.constant dense<0xFF800000> : vector<16x8x32xf32>
    %13 = vector.multi_reduction <maximumf>, %12, %cst_8 [1] : vector<16x2x8x32xf32> to vector<16x8x32xf32>
    %14 = vector.shape_cast %13 : vector<16x8x32xf32> to vector<2x8x8x32xf32>
    %cst_9 = arith.constant 0.000000e+00 : f32
    %15 = vector.broadcast %cst_9 : f32 to vector<2x10x10x32xf32>
    %c0_10 = arith.constant 0 : index
    %c0_11 = arith.constant 0 : index
    %c0_12 = arith.constant 0 : index
    %c0_13 = arith.constant 0 : index
    %16 = vector.load %arg9[%c0_10, %c0_11, %c0_12, %c0_13] : memref<2x10x10x32xf32, #tpu.memory_space<vmem>>, vector<2x10x10x32xf32>
    tpu.vector_store %arg9[%c0_10, %c0_11, %c0_12, %c0_13], %15 {strides = array<i32>} : memref<2x10x10x32xf32, #tpu.memory_space<vmem>>, vector<2x10x10x32xf32>,
    %c0_14 = arith.constant 0 : index
    %c1 = arith.constant 1 : index
    %c1_15 = arith.constant 1 : index
    %c0_16 = arith.constant 0 : index
    %17 = vector.load %arg9[%c0_14, %c1, %c1_15, %c0_16] : memref<2x10x10x32xf32, #tpu.memory_space<vmem>>, vector<2x8x8x32xf32>
    tpu.vector_store %arg9[%c0_14, %c1, %c1_15, %c0_16], %14 {strides = array<i32>} : memref<2x10x10x32xf32, #tpu.memory_space<vmem>>, vector<2x8x8x32xf32>,
    %c0_17 = arith.constant 0 : index
    %c0_18 = arith.constant 0 : index
    %c0_19 = arith.constant 0 : index
    %c0_20 = arith.constant 0 : index
    %18 = vector.load %arg9[%c0_17, %c0_18, %c0_19, %c0_20] : memref<2x10x10x32xf32, #tpu.memory_space<vmem>>, vector<2x10x10x32xf32>
    %19 = vector.extract_strided_slice %18 {offsets = [0, 0, 0, 0], sizes = [2, 8, 8, 32], strides = [1, 1, 1, 1]} : vector<2x10x10x32xf32> to vector<2x8x8x32xf32>
    %20 = vector.shape_cast %19 : vector<2x8x8x32xf32> to vector<128x32xf32>
    %21 = vector.extract_strided_slice %18 {offsets = [0, 0, 1, 0], sizes = [2, 8, 8, 32], strides = [1, 1, 1, 1]} : vector<2x10x10x32xf32> to vector<2x8x8x32xf32>
    %22 = vector.shape_cast %21 : vector<2x8x8x32xf32> to vector<128x32xf32>
    %23 = vector.extract_strided_slice %18 {offsets = [0, 0, 2, 0], sizes = [2, 8, 8, 32], strides = [1, 1, 1, 1]} : vector<2x10x10x32xf32> to vector<2x8x8x32xf32>
    %24 = vector.shape_cast %23 : vector<2x8x8x32xf32> to vector<128x32xf32>
    %25 = vector.extract_strided_slice %18 {offsets = [0, 1, 0, 0], sizes = [2, 8, 8, 32], strides = [1, 1, 1, 1]} : vector<2x10x10x32xf32> to vector<2x8x8x32xf32>
    %26 = vector.shape_cast %25 : vector<2x8x8x32xf32> to vector<128x32xf32>
    %27 = vector.extract_strided_slice %18 {offsets = [0, 1, 1, 0], sizes = [2, 8, 8, 32], strides = [1, 1, 1, 1]} : vector<2x10x10x32xf32> to vector<2x8x8x32xf32>
    %28 = vector.shape_cast %27 : vector<2x8x8x32xf32> to vector<128x32xf32>
    %29 = vector.extract_strided_slice %18 {offsets = [0, 1, 2, 0], sizes = [2, 8, 8, 32], strides = [1, 1, 1, 1]} : vector<2x10x10x32xf32> to vector<2x8x8x32xf32>
    %30 = vector.shape_cast %29 : vector<2x8x8x32xf32> to vector<128x32xf32>
    %31 = vector.extract_strided_slice %18 {offsets = [0, 2, 0, 0], sizes = [2, 8, 8, 32], strides = [1, 1, 1, 1]} : vector<2x10x10x32xf32> to vector<2x8x8x32xf32>
    %32 = vector.shape_cast %31 : vector<2x8x8x32xf32> to vector<128x32xf32>
    %33 = vector.extract_strided_slice %18 {offsets = [0, 2, 1, 0], sizes = [2, 8, 8, 32], strides = [1, 1, 1, 1]} : vector<2x10x10x32xf32> to vector<2x8x8x32xf32>
    %34 = vector.shape_cast %33 : vector<2x8x8x32xf32> to vector<128x32xf32>
    %35 = vector.extract_strided_slice %18 {offsets = [0, 2, 2, 0], sizes = [2, 8, 8, 32], strides = [1, 1, 1, 1]} : vector<2x10x10x32xf32> to vector<2x8x8x32xf32>
    %36 = vector.shape_cast %35 : vector<2x8x8x32xf32> to vector<128x32xf32>
    %37 = tpu.concatenate %20, %22, %24, %26, %28, %30, %32, %34, %36 in 1 : vector<128x32xf32>, vector<128x32xf32>, vector<128x32xf32>, vector<128x32xf32>, vector<128x32xf32>, vector<128x32xf32>, vector<128x32xf32>, vector<128x32xf32>, vector<128x32xf32> -> vector<128x288xf32>
    %c0_21 = arith.constant 0 : index
    %c0_22 = arith.constant 0 : index
    %38 = vector.load %arg4[%c0_21, %c0_22] : memref<288x64xf32, #tpu.memory_space<vmem>>, vector<288x64xf32>
    %cst_23 = arith.constant dense<0.000000e+00> : vector<128x64xf32>
    %39 = tpu.matmul %37, %38, %cst_23 {dimension_numbers = #tpu.dot_dimension_numbers<[1], [0], [0], [1], [0, 0, 1, 1], [], []>} : vector<128x288xf32>, vector<288x64xf32>, vector<128x64xf32> -> vector<128x64xf32>
    %c0_24 = arith.constant 0 : index
    %c0_25 = arith.constant 0 : index
    %40 = vector.load %arg5[%c0_24, %c0_25] : memref<1x64xf32, #tpu.memory_space<vmem>>, vector<1x64xf32>
    %41 = vector.broadcast %40 : vector<1x64xf32> to vector<128x64xf32>
    %42 = arith.addf %39, %41 : vector<128x64xf32>
    %cst_26 = arith.constant 0.000000e+00 : f32
    %43 = vector.broadcast %cst_26 : f32 to vector<128x64xf32>
    %44 = arith.maximumf %42, %43 : vector<128x64xf32>
    %45 = vector.shape_cast %44 : vector<128x64xf32> to vector<2x64x64xf32>
    %cst_27 = arith.constant dense<0.000000e+00> : vector<2x64xf32>
    %46 = vector.multi_reduction <add>, %45, %cst_27 [1] : vector<2x64x64xf32> to vector<2x64xf32>
    %cst_28 = arith.constant 6.400000e+01 : f32
    %47 = vector.broadcast %cst_28 : f32 to vector<2x64xf32>
    %48 = arith.divf %46, %47 : vector<2x64xf32>
    %c0_29 = arith.constant 0 : index
    %c0_30 = arith.constant 0 : index
    %49 = vector.load %arg6[%c0_29, %c0_30] : memref<64x10xf32, #tpu.memory_space<vmem>>, vector<64x10xf32>
    %cst_31 = arith.constant dense<0.000000e+00> : vector<2x10xf32>
    %50 = tpu.matmul %48, %49, %cst_31 {dimension_numbers = #tpu.dot_dimension_numbers<[1], [0], [0], [1], [0, 0, 1, 1], [], []>} : vector<2x64xf32>, vector<64x10xf32>, vector<2x10xf32> -> vector<2x10xf32>
    %c0_32 = arith.constant 0 : index
    %c0_33 = arith.constant 0 : index
    %51 = vector.load %arg7[%c0_32, %c0_33] : memref<1x10xf32, #tpu.memory_space<vmem>>, vector<1x10xf32>
    %52 = vector.broadcast %51 : vector<1x10xf32> to vector<2x10xf32>
    %53 = arith.addf %50, %52 : vector<2x10xf32>
    %c0_34 = arith.constant 0 : index
    %c0_35 = arith.constant 0 : index
    %54 = vector.load %arg8[%c0_34, %c0_35] : memref<2x10xf32, #tpu.memory_space<vmem>>, vector<2x10xf32>
    tpu.vector_store %arg8[%c0_34, %c0_35], %53 {strides = array<i32>} : memref<2x10xf32, #tpu.memory_space<vmem>>, vector<2x10xf32>,
    return
  }
  func.func @transform_0(%arg0: i32) -> (i32, i32, i32) {
    %c0_i32 = arith.constant 0 : i32
    %c0_i32_0 = arith.constant 0 : i32
    %c0_i32_1 = arith.constant 0 : i32
    return %arg0, %c0_i32, %c0_i32_0 : i32, i32, i32
  }
  func.func @transform_1(%arg0: i32) -> (i32, i32) {
    %c0_i32 = arith.constant 0 : i32
    %c0_i32_0 = arith.constant 0 : i32
    %c0_i32_1 = arith.constant 0 : i32
    return %c0_i32, %c0_i32_0 : i32, i32
  }
  func.func @transform_2(%arg0: i32) -> (i32, i32) {
    %c0_i32 = arith.constant 0 : i32
    %c0_i32_0 = arith.constant 0 : i32
    %c0_i32_1 = arith.constant 0 : i32
    return %c0_i32, %c0_i32_0 : i32, i32
  }
  func.func @transform_3(%arg0: i32) -> (i32, i32) {
    %c0_i32 = arith.constant 0 : i32
    %c0_i32_0 = arith.constant 0 : i32
    %c0_i32_1 = arith.constant 0 : i32
    return %c0_i32, %c0_i32_0 : i32, i32
  }
  func.func @transform_4(%arg0: i32) -> (i32, i32) {
    %c0_i32 = arith.constant 0 : i32
    %c0_i32_0 = arith.constant 0 : i32
    %c0_i32_1 = arith.constant 0 : i32
    return %c0_i32, %c0_i32_0 : i32, i32
  }
  func.func @transform_5(%arg0: i32) -> (i32, i32) {
    %c0_i32 = arith.constant 0 : i32
    %c0_i32_0 = arith.constant 0 : i32
    %c0_i32_1 = arith.constant 0 : i32
    return %c0_i32, %c0_i32_0 : i32, i32
  }
  func.func @transform_6(%arg0: i32) -> (i32, i32) {
    %c0_i32 = arith.constant 0 : i32
    %c0_i32_0 = arith.constant 0 : i32
    %c0_i32_1 = arith.constant 0 : i32
    return %c0_i32, %c0_i32_0 : i32, i32
  }
  func.func @transform_7(%arg0: i32) -> (i32, i32) {
    %c0_i32 = arith.constant 0 : i32
    %c0_i32_0 = arith.constant 0 : i32
    return %arg0, %c0_i32 : i32, i32
  }
}

</mosaic_0001>

<llo_original>
// kernel: tpu_custom_call.1
$region0: #{tpu_custom_call.1}
  #allocation0 [shape = 'u32[]', space=smem, size = 0x4, offset = 0x4, fixed_abs, tag = 'smem constant byte address 0x4 - core index']
  #allocation1 [shape = 'u32[144,128]{1,0:T(1,128)}', space=vmem, size = 0x12000, scoped, tag = 'internal scratch']
  #allocation2 [shape = 'f32[2,10,10,32]{3,2,1,0:T(8,128)}', space=vmem, size = 0x28000, scoped, tag = 'scratch operand']
  %s0 = inlined_call_operand.vmem [shape: f32[2,16,256], index: 0, kind: input, shape index: {}]
  %s1 = inlined_call_operand.vmem [shape: f32[16,32], index: 1, kind: input, shape index: {}]
  %s2 = inlined_call_operand.vmem [shape: f32[1,32], index: 2, kind: input, shape index: {}]
  %s3 = inlined_call_operand.vmem [shape: f32[288,64], index: 3, kind: input, shape index: {}]
  %s4 = inlined_call_operand.vmem [shape: f32[1,64], index: 4, kind: input, shape index: {}]
  %s5 = inlined_call_operand.vmem [shape: f32[64,10], index: 5, kind: input, shape index: {}]
  %s6 = inlined_call_operand.vmem [shape: f32[1,10], index: 6, kind: input, shape index: {}]
  %s7 = inlined_call_operand.hbm [shape: f32[2,10], index: 7, kind: output, shape index: {}]
  %s8 = sld [smem:[#allocation0]]
  $region38: #{tpu_custom_call.1} parent=0
    _
  %s10 = ssub.s32 1, %s8
  %s11 = scalar_select 0, %s10, %s8
  $region1: #{tpu_custom_call.1} parent=0
    #allocation3 [shape = 'u8[1024]{0}', space=vmem, size = 0x400, scoped, tag = 'output window, operand 0, single buffered']
    #allocation4 [shape = 's32[1]{0}', space=sflag, size = 0x4, scoped, tag = 'scoped memory for tpu_custom_call.1']
    %12 = vsyncpa [#allocation4], 0
    // Predicated region
    $region2: #{tpu_custom_call.1} parent=1 // pred_check
      _
    $region3: #{tpu_custom_call.1} parent=1 // pred_check_branch
      %14 = sbr.rel (0) target = $region5
    $region4: #{tpu_custom_call.1} parent=1 // pred_region
      _
    $region5: #{tpu_custom_call.1} parent=1 // pred_fallthru
      _
    // Predicated region
    $region6: #{tpu_custom_call.1} parent=1 // pred_check
      _
    $region7: #{tpu_custom_call.1} parent=1 // pred_check_branch
      %16 = sbr.rel (0) target = $region9
    $region8: #{tpu_custom_call.1} parent=1 // pred_region
      _
    $region9: #{tpu_custom_call.1} parent=1 // pred_fallthru
      _
    // Predicated region
    $region10: #{tpu_custom_call.1} parent=1 // pred_check
      _
    $region11: #{tpu_custom_call.1} parent=1 // pred_check_branch
      %18 = sbr.rel (0) target = $region13
    $region12: #{tpu_custom_call.1} parent=1 // pred_region
      _
    $region13: #{tpu_custom_call.1} parent=1 // pred_fallthru
      _
    // Predicated region
    $region14: #{tpu_custom_call.1} parent=1 // pred_check
      _
    $region15: #{tpu_custom_call.1} parent=1 // pred_check_branch
      %20 = sbr.rel (0) target = $region17
    $region16: #{tpu_custom_call.1} parent=1 // pred_region
      _
    $region17: #{tpu_custom_call.1} parent=1 // pred_fallthru
      _
    // Predicated region
    $region18: #{tpu_custom_call.1} parent=1 // pred_check
      _
    $region19: #{tpu_custom_call.1} parent=1 // pred_check_branch
      %22 = sbr.rel (0) target = $region21
    $region20: #{tpu_custom_call.1} parent=1 // pred_region
      _
    $region21: #{tpu_custom_call.1} parent=1 // pred_fallthru
      _
    // Predicated region
    $region22: #{tpu_custom_call.1} parent=1 // pred_check
      _
    $region23: #{tpu_custom_call.1} parent=1 // pred_check_branch
      %24 = sbr.rel (0) target = $region25
    $region24: #{tpu_custom_call.1} parent=1 // pred_region
      _
    $region25: #{tpu_custom_call.1} parent=1 // pred_fallthru
      _
    // Predicated region
    $region26: #{tpu_custom_call.1} parent=1 // pred_check
      _
    $region27: #{tpu_custom_call.1} parent=1 // pred_check_branch
      %26 = sbr.rel (0) target = $region29
    $region28: #{tpu_custom_call.1} parent=1 // pred_region
      _
    $region29: #{tpu_custom_call.1} parent=1 // pred_fallthru
      _
    %v27 = vld [vmem:[%s0] sm:$0xff]
    %v28 = vld [vmem:[%s0 + $0x8] sm:$0xff]
    %v29 = vld [vmem:[%s0 + $0x10] sm:$0xff]
    %v30 = vld [vmem:[%s0 + $0x18] sm:$0xff]
    %v31 = vld [vmem:[%s0 + $0x20] sm:$0xff]
    %v32 = vld [vmem:[%s0 + $0x28] sm:$0xff]
    %v33 = vld [vmem:[%s0 + $0x30] sm:$0xff]
    %v34 = vld [vmem:[%s0 + $0x38] sm:$0xff]
    %35 = vxpose.xlu0.b32.start [1/16] %v27, 128
    %36 = vxpose.xlu0.b32.cont [2/16] %v29, 128
    %37 = vxpose.xlu0.b32.cont [3/16] 0.0, 128
    %38 = vxpose.xlu0.b32.cont [4/16] 0.0, 128
    %39 = vxpose.xlu0.b32.cont [5/16] 0.0, 128
    %40 = vxpose.xlu0.b32.cont [6/16] 0.0, 128
    %41 = vxpose.xlu0.b32.cont [7/16] 0.0, 128
    %42 = vxpose.xlu0.b32.cont [8/16] 0.0, 128
    %43 = vxpose.xlu0.b32.cont [9/16] 0.0, 128
    %44 = vxpose.xlu0.b32.cont [10/16] 0.0, 128
    %45 = vxpose.xlu0.b32.cont [11/16] 0.0, 128
    %46 = vxpose.xlu0.b32.cont [12/16] 0.0, 128
    %47 = vxpose.xlu0.b32.cont [13/16] 0.0, 128
    %48 = vxpose.xlu0.b32.cont [14/16] 0.0, 128
    %49 = vxpose.xlu0.b32.cont [15/16] 0.0, 128
    %50 = vxpose.xlu0.b32.end [16/16] 0.0, 128
    %v51 = vpop.trf.xlu0
    %v52 = vpop.trf.xlu0
    %v53 = vpop.trf.xlu0
    %v54 = vpop.trf.xlu0
    %v55 = vpop.trf.xlu0
    %v56 = vpop.trf.xlu0
    %v57 = vpop.trf.xlu0
    %v58 = vpop.trf.xlu0
    %v59 = vpop.trf.xlu0
    %v60 = vpop.trf.xlu0
    %v61 = vpop.trf.xlu0
    %v62 = vpop.trf.xlu0
    %v63 = vpop.trf.xlu0
    %v64 = vpop.trf.xlu0
    %v65 = vpop.trf.xlu0
    %v66 = vpop.trf.xlu0
    %67 = vxpose.xlu0.b32.start [1/16] %v28, 128
    %68 = vxpose.xlu0.b32.cont [2/16] %v30, 128
    %69 = vxpose.xlu0.b32.cont [3/16] 0.0, 128
    %70 = vxpose.xlu0.b32.cont [4/16] 0.0, 128
    %71 = vxpose.xlu0.b32.cont [5/16] 0.0, 128
    %72 = vxpose.xlu0.b32.cont [6/16] 0.0, 128
    %73 = vxpose.xlu0.b32.cont [7/16] 0.0, 128
    %74 = vxpose.xlu0.b32.cont [8/16] 0.0, 128
    %75 = vxpose.xlu0.b32.cont [9/16] 0.0, 128
    %76 = vxpose.xlu0.b32.cont [10/16] 0.0, 128
    %77 = vxpose.xlu0.b32.cont [11/16] 0.0, 128
    %78 = vxpose.xlu0.b32.cont [12/16] 0.0, 128
    %79 = vxpose.xlu0.b32.cont [13/16] 0.0, 128
    %80 = vxpose.xlu0.b32.cont [14/16] 0.0, 128
    %81 = vxpose.xlu0.b32.cont [15/16] 0.0, 128
    %82 = vxpose.xlu0.b32.end [16/16] 0.0, 128
    %v83 = vpop.trf.xlu0
    %v84 = vpop.trf.xlu0
    %v85 = vpop.trf.xlu0
    %v86 = vpop.trf.xlu0
    %v87 = vpop.trf.xlu0
    %v88 = vpop.trf.xlu0
    %v89 = vpop.trf.xlu0
    %v90 = vpop.trf.xlu0
    %v91 = vpop.trf.xlu0
    %v92 = vpop.trf.xlu0
    %v93 = vpop.trf.xlu0
    %v94 = vpop.trf.xlu0
    %v95 = vpop.trf.xlu0
    %v96 = vpop.trf.xlu0
    %v97 = vpop.trf.xlu0
    %v98 = vpop.trf.xlu0
    %99 = vxpose.xlu0.b32.start [1/16] %v31, 128
    %100 = vxpose.xlu0.b32.cont [2/16] %v33, 128
    %101 = vxpose.xlu0.b32.cont [3/16] 0.0, 128
    %102 = vxpose.xlu0.b32.cont [4/16] 0.0, 128
    %103 = vxpose.xlu0.b32.cont [5/16] 0.0, 128
    %104 = vxpose.xlu0.b32.cont [6/16] 0.0, 128
    %105 = vxpose.xlu0.b32.cont [7/16] 0.0, 128
    %106 = vxpose.xlu0.b32.cont [8/16] 0.0, 128
    %107 = vxpose.xlu0.b32.cont [9/16] 0.0, 128
    %108 = vxpose.xlu0.b32.cont [10/16] 0.0, 128
    %109 = vxpose.xlu0.b32.cont [11/16] 0.0, 128
    %110 = vxpose.xlu0.b32.cont [12/16] 0.0, 128
    %111 = vxpose.xlu0.b32.cont [13/16] 0.0, 128
    %112 = vxpose.xlu0.b32.cont [14/16] 0.0, 128
    %113 = vxpose.xlu0.b32.cont [15/16] 0.0, 128
    %114 = vxpose.xlu0.b32.end [16/16] 0.0, 128
    %v115 = vpop.trf.xlu0
    %v116 = vpop.trf.xlu0
    %v117 = vpop.trf.xlu0
    %v118 = vpop.trf.xlu0
    %v119 = vpop.trf.xlu0
    %v120 = vpop.trf.xlu0
    %v121 = vpop.trf.xlu0
    %v122 = vpop.trf.xlu0
    %v123 = vpop.trf.xlu0
    %v124 = vpop.trf.xlu0
    %v125 = vpop.trf.xlu0
    %v126 = vpop.trf.xlu0
    %v127 = vpop.trf.xlu0
    %v128 = vpop.trf.xlu0
    %v129 = vpop.trf.xlu0
    %v130 = vpop.trf.xlu0
    %131 = vxpose.xlu0.b32.start [1/16] %v32, 128
    %132 = vxpose.xlu0.b32.cont [2/16] %v34, 128
    %133 = vxpose.xlu0.b32.cont [3/16] 0.0, 128
    %134 = vxpose.xlu0.b32.cont [4/16] 0.0, 128
    %135 = vxpose.xlu0.b32.cont [5/16] 0.0, 128
    %136 = vxpose.xlu0.b32.cont [6/16] 0.0, 128
    %137 = vxpose.xlu0.b32.cont [7/16] 0.0, 128
    %138 = vxpose.xlu0.b32.cont [8/16] 0.0, 128
    %139 = vxpose.xlu0.b32.cont [9/16] 0.0, 128
    %140 = vxpose.xlu0.b32.cont [10/16] 0.0, 128
    %141 = vxpose.xlu0.b32.cont [11/16] 0.0, 128
    %142 = vxpose.xlu0.b32.cont [12/16] 0.0, 128
    %143 = vxpose.xlu0.b32.cont [13/16] 0.0, 128
    %144 = vxpose.xlu0.b32.cont [14/16] 0.0, 128
    %145 = vxpose.xlu0.b32.cont [15/16] 0.0, 128
    %146 = vxpose.xlu0.b32.end [16/16] 0.0, 128
    %v147 = vpop.trf.xlu0
    %v148 = vpop.trf.xlu0
    %v149 = vpop.trf.xlu0
    %v150 = vpop.trf.xlu0
    %v151 = vpop.trf.xlu0
    %v152 = vpop.trf.xlu0
    %v153 = vpop.trf.xlu0
    %v154 = vpop.trf.xlu0
    %v155 = vpop.trf.xlu0
    %v156 = vpop.trf.xlu0
    %v157 = vpop.trf.xlu0
    %v158 = vpop.trf.xlu0
    %v159 = vpop.trf.xlu0
    %v160 = vpop.trf.xlu0
    %v161 = vpop.trf.xlu0
    %v162 = vpop.trf.xlu0
    %v163 = vld [vmem:[%s1] sm:$0xff]
    %v164 = vld [vmem:[%s1 + $0x8] sm:$0xff]
    %v165 = vld [vmem:[%s2] sm:$0x1]
    %v167 = vlaneseq
    %v168 = vshrl.u32 %v167, 7
    %v169 = vsub.s32 0, %v168
    %v170 = vrot.slane %v165, %v169
    %vm172 = vcmask 130048
    %v174 = vsel %vm172, %v51, 0
    %v177 = vsel %vm172, %v52, 0
    %v180 = vsel %vm172, %v53, 0
    %v183 = vsel %vm172, %v54, 0
    %v186 = vsel %vm172, %v55, 0
    %v189 = vsel %vm172, %v56, 0
    %v192 = vsel %vm172, %v57, 0
    %v195 = vsel %vm172, %v58, 0
    %v198 = vsel %vm172, %v59, 0
    %v201 = vsel %vm172, %v60, 0
    %v204 = vsel %vm172, %v61, 0
    %v207 = vsel %vm172, %v62, 0
    %v210 = vsel %vm172, %v63, 0
    %v213 = vsel %vm172, %v64, 0
    %v216 = vsel %vm172, %v65, 0
    %v219 = vsel %vm172, %v66, 0
    %v222 = vsel %vm172, %v83, 0
    %v225 = vsel %vm172, %v84, 0
    %v228 = vsel %vm172, %v85, 0
    %v231 = vsel %vm172, %v86, 0
    %v234 = vsel %vm172, %v87, 0
    %v237 = vsel %vm172, %v88, 0
    %v240 = vsel %vm172, %v89, 0
    %v243 = vsel %vm172, %v90, 0
    %v246 = vsel %vm172, %v91, 0
    %v249 = vsel %vm172, %v92, 0
    %v252 = vsel %vm172, %v93, 0
    %v255 = vsel %vm172, %v94, 0
    %v258 = vsel %vm172, %v95, 0
    %v261 = vsel %vm172, %v96, 0
    %v264 = vsel %vm172, %v97, 0
    %v267 = vsel %vm172, %v98, 0
    %v270 = vsel %vm172, %v115, 0
    %v273 = vsel %vm172, %v116, 0
    %v276 = vsel %vm172, %v117, 0
    %v279 = vsel %vm172, %v118, 0
    %v282 = vsel %vm172, %v119, 0
    %v285 = vsel %vm172, %v120, 0
    %v288 = vsel %vm172, %v121, 0
    %v291 = vsel %vm172, %v122, 0
    %v294 = vsel %vm172, %v123, 0
    %v297 = vsel %vm172, %v124, 0
    %v300 = vsel %vm172, %v125, 0
    %v303 = vsel %vm172, %v126, 0
    %v306 = vsel %vm172, %v127, 0
    %v309 = vsel %vm172, %v128, 0
    %v312 = vsel %vm172, %v129, 0
    %v315 = vsel %vm172, %v130, 0
    %v318 = vsel %vm172, %v147, 0
    %v321 = vsel %vm172, %v148, 0
    %v324 = vsel %vm172, %v149, 0
    %v327 = vsel %vm172, %v150, 0
    %v330 = vsel %vm172, %v151, 0
    %v333 = vsel %vm172, %v152, 0
    %v336 = vsel %vm172, %v153, 0
    %v339 = vsel %vm172, %v154, 0
    %v342 = vsel %vm172, %v155, 0
    %v345 = vsel %vm172, %v156, 0
    %v348 = vsel %vm172, %v157, 0
    %v351 = vsel %vm172, %v158, 0
    %v354 = vsel %vm172, %v159, 0
    %v357 = vsel %vm172, %v160, 0
    %v360 = vsel %vm172, %v161, 0
    %v363 = vsel %vm172, %v162, 0
    %365 = vmatprep.subr.mxu0 0.0
    %366 = vmatpush1.msra.mxu0 0.0
    %367 = vmatprep.subr.mxu0 0.0
    %368 = vmatpush1.msra.mxu0 0.0
    %369 = vmatprep.subr.mxu0 0.0
    %370 = vmatpush1.msra.mxu0 0.0
    %371 = vmatprep.subr.mxu0 0.0
    %372 = vmatpush1.msra.mxu0 0.0
    %373 = vmatprep.subr.mxu0 0.0
    %374 = vmatpush1.msra.mxu0 0.0
    %375 = vmatprep.subr.mxu0 0.0
    %376 = vmatpush1.msra.mxu0 0.0
    %377 = vmatprep.subr.mxu0 0.0
    %378 = vmatpush1.msra.mxu0 0.0
    %379 = vmatprep.subr.mxu0 0.0
    %380 = vmatpush1.msra.mxu0 0.0
    %381 = vmatprep.subr.mxu0 0.0
    %382 = vmatpush1.msra.mxu0 0.0
    %383 = vmatprep.subr.mxu0 0.0
    %384 = vmatpush1.msra.mxu0 0.0
    %385 = vmatprep.subr.mxu0 0.0
    %386 = vmatpush1.msra.mxu0 0.0
    %387 = vmatprep.subr.mxu0 0.0
    %388 = vmatpush1.msra.mxu0 0.0
    %389 = vmatprep.subr.mxu0 0.0
    %390 = vmatpush1.msra.mxu0 0.0
    %391 = vmatprep.subr.mxu0 0.0
    %392 = vmatpush1.msra.mxu0 0.0
    %393 = vmatprep.subr.mxu0 0.0
    %394 = vmatpush1.msra.mxu0 %v164
    %395 = vmatprep.subr.mxu0 0.0
    %396 = vmatpush1.msra.mxu0 %v163
    %397 = vmatprep.subr.mxu0 0.0
    %398 = vmatpush2.msra.mxu0 0.0
    %399 = vmatprep.subr.mxu0 0.0
    %400 = vmatpush2.msra.mxu0 0.0
    %401 = vmatprep.subr.mxu0 0.0
    %402 = vmatpush2.msra.mxu0 0.0
    %403 = vmatprep.subr.mxu0 0.0
    %404 = vmatpush2.msra.mxu0 0.0
    %405 = vmatprep.subr.mxu0 0.0
    %406 = vmatpush2.msra.mxu0 0.0
    %407 = vmatprep.subr.mxu0 0.0
    %408 = vmatpush2.msra.mxu0 0.0
    %409 = vmatprep.subr.mxu0 0.0
    %410 = vmatpush2.msra.mxu0 0.0
    %411 = vmatprep.subr.mxu0 0.0
    %412 = vmatpush2.msra.mxu0 0.0
    %413 = vmatprep.subr.mxu0 0.0
    %414 = vmatpush2.msra.mxu0 0.0
    %415 = vmatprep.subr.mxu0 0.0
    %416 = vmatpush2.msra.mxu0 0.0
    %417 = vmatprep.subr.mxu0 0.0
    %418 = vmatpush2.msra.mxu0 0.0
    %419 = vmatprep.subr.mxu0 0.0
    %420 = vmatpush2.msra.mxu0 0.0
    %421 = vmatprep.subr.mxu0 0.0
    %422 = vmatpush2.msra.mxu0 0.0
    %423 = vmatprep.subr.mxu0 0.0
    %424 = vmatpush2.msra.mxu0 0.0
    %425 = vmatprep.subr.mxu0 0.0
    %426 = vmatpush2.msra.mxu0 0.0
    %427 = vmatprep.subr.mxu0 0.0
    %428 = vmatpush2.msra.mxu0 0.0
    %429 = vmatprep.mubr.f32.mxu0 0.0
    %430 = vmatmul.mubr.f32.gmra.mxu0 %v174
    %v431 = vpop.f32.mrf.mxu0
    %v432 = vadd.f32 %v170, %v431
    %v433 = vpop.f32.mrf.mxu0
    %434 = vmatprep.mubr.f32.mxu0 0.0
    %435 = vmatmul.mubr.f32.gmra.mxu0 %v177
    %v436 = vpop.f32.mrf.mxu0
    %v437 = vadd.f32 %v170, %v436
    %v438 = vpop.f32.mrf.mxu0
    %439 = vmatprep.mubr.f32.mxu0 0.0
    %440 = vmatmul.mubr.f32.gmra.mxu0 %v180
    %v441 = vpop.f32.mrf.mxu0
    %v442 = vadd.f32 %v170, %v441
    %v443 = vpop.f32.mrf.mxu0
    %444 = vmatprep.mubr.f32.mxu0 0.0
    %445 = vmatmul.mubr.f32.gmra.mxu0 %v183
    %v446 = vpop.f32.mrf.mxu0
    %v447 = vadd.f32 %v170, %v446
    %v448 = vpop.f32.mrf.mxu0
    %449 = vmatprep.mubr.f32.mxu0 0.0
    %450 = vmatmul.mubr.f32.gmra.mxu0 %v186
    %v451 = vpop.f32.mrf.mxu0
    %v452 = vadd.f32 %v170, %v451
    %v453 = vpop.f32.mrf.mxu0
    %454 = vmatprep.mubr.f32.mxu0 0.0
    %455 = vmatmul.mubr.f32.gmra.mxu0 %v189
    %v456 = vpop.f32.mrf.mxu0
    %v457 = vadd.f32 %v170, %v456
    %v458 = vpop.f32.mrf.mxu0
    %459 = vmatprep.mubr.f32.mxu0 0.0
    %460 = vmatmul.mubr.f32.gmra.mxu0 %v192
    %v461 = vpop.f32.mrf.mxu0
    %v462 = vadd.f32 %v170, %v461
    %v463 = vpop.f32.mrf.mxu0
    %464 = vmatprep.mubr.f32.mxu0 0.0
    %465 = vmatmul.mubr.f32.gmra.mxu0 %v195
    %v466 = vpop.f32.mrf.mxu0
    %v467 = vadd.f32 %v170, %v466
    %v468 = vpop.f32.mrf.mxu0
    %469 = vmatprep.mubr.f32.mxu0 0.0
    %470 = vmatmul.mubr.f32.gmra.mxu0 %v198
    %v471 = vpop.f32.mrf.mxu0
    %v472 = vadd.f32 %v170, %v471
    %v473 = vpop.f32.mrf.mxu0
    %474 = vmatprep.mubr.f32.mxu0 0.0
    %475 = vmatmul.mubr.f32.gmra.mxu0 %v201
    %v476 = vpop.f32.mrf.mxu0
    %v477 = vadd.f32 %v170, %v476
    %v478 = vpop.f32.mrf.mxu0
    %479 = vmatprep.mubr.f32.mxu0 0.0
    %480 = vmatmul.mubr.f32.gmra.mxu0 %v204
    %v481 = vpop.f32.mrf.mxu0
    %v482 = vadd.f32 %v170, %v481
    %v483 = vpop.f32.mrf.mxu0
    %484 = vmatprep.mubr.f32.mxu0 0.0
    %485 = vmatmul.mubr.f32.gmra.mxu0 %v207
    %v486 = vpop.f32.mrf.mxu0
    %v487 = vadd.f32 %v170, %v486
    %v488 = vpop.f32.mrf.mxu0
    %489 = vmatprep.mubr.f32.mxu0 0.0
    %490 = vmatmul.mubr.f32.gmra.mxu0 %v210
    %v491 = vpop.f32.mrf.mxu0
    %v492 = vadd.f32 %v170, %v491
    %v493 = vpop.f32.mrf.mxu0
    %494 = vmatprep.mubr.f32.mxu0 0.0
    %495 = vmatmul.mubr.f32.gmra.mxu0 %v213
    %v496 = vpop.f32.mrf.mxu0
    %v497 = vadd.f32 %v170, %v496
    %v498 = vpop.f32.mrf.mxu0
    %499 = vmatprep.mubr.f32.mxu0 0.0
    %500 = vmatmul.mubr.f32.gmra.mxu0 %v216
    %v501 = vpop.f32.mrf.mxu0
    %v502 = vadd.f32 %v170, %v501
    %v503 = vpop.f32.mrf.mxu0
    %504 = vmatprep.mubr.f32.mxu0 0.0
    %505 = vmatmul.mubr.f32.gmra.mxu0 %v219
    %v506 = vpop.f32.mrf.mxu0
    %v507 = vadd.f32 %v170, %v506
    %v508 = vpop.f32.mrf.mxu0
    %509 = vmatprep.mubr.f32.mxu0 0.0
    %510 = vmatmul.mubr.f32.gmra.mxu0 %v222
    %v511 = vpop.f32.mrf.mxu0
    %v512 = vadd.f32 %v170, %v511
    %v513 = vpop.f32.mrf.mxu0
    %514 = vmatprep.mubr.f32.mxu0 0.0
    %515 = vmatmul.mubr.f32.gmra.mxu0 %v225
    %v516 = vpop.f32.mrf.mxu0
    %v517 = vadd.f32 %v170, %v516
    %v518 = vpop.f32.mrf.mxu0
    %519 = vmatprep.mubr.f32.mxu0 0.0
    %520 = vmatmul.mubr.f32.gmra.mxu0 %v228
    %v521 = vpop.f32.mrf.mxu0
    %v522 = vadd.f32 %v170, %v521
    %v523 = vpop.f32.mrf.mxu0
    %524 = vmatprep.mubr.f32.mxu0 0.0
    %525 = vmatmul.mubr.f32.gmra.mxu0 %v231
    %v526 = vpop.f32.mrf.mxu0
    %v527 = vadd.f32 %v170, %v526
    %v528 = vpop.f32.mrf.mxu0
    %529 = vmatprep.mubr.f32.mxu0 0.0
    %530 = vmatmul.mubr.f32.gmra.mxu0 %v234
    %v531 = vpop.f32.mrf.mxu0
    %v532 = vadd.f32 %v170, %v531
    %v533 = vpop.f32.mrf.mxu0
    %534 = vmatprep.mubr.f32.mxu0 0.0
    %535 = vmatmul.mubr.f32.gmra.mxu0 %v237
    %v536 = vpop.f32.mrf.mxu0
    %v537 = vadd.f32 %v170, %v536
    %v538 = vpop.f32.mrf.mxu0
    %539 = vmatprep.mubr.f32.mxu0 0.0
    %540 = vmatmul.mubr.f32.gmra.mxu0 %v240
    %v541 = vpop.f32.mrf.mxu0
    %v542 = vadd.f32 %v170, %v541
    %v543 = vpop.f32.mrf.mxu0
    %544 = vmatprep.mubr.f32.mxu0 0.0
    %545 = vmatmul.mubr.f32.gmra.mxu0 %v243
    %v546 = vpop.f32.mrf.mxu0
    %v547 = vadd.f32 %v170, %v546
    %v548 = vpop.f32.mrf.mxu0
    %549 = vmatprep.mubr.f32.mxu0 0.0
    %550 = vmatmul.mubr.f32.gmra.mxu0 %v246
    %v551 = vpop.f32.mrf.mxu0
    %v552 = vadd.f32 %v170, %v551
    %v553 = vpop.f32.mrf.mxu0
    %554 = vmatprep.mubr.f32.mxu0 0.0
    %555 = vmatmul.mubr.f32.gmra.mxu0 %v249
    %v556 = vpop.f32.mrf.mxu0
    %v557 = vadd.f32 %v170, %v556
    %v558 = vpop.f32.mrf.mxu0
    %559 = vmatprep.mubr.f32.mxu0 0.0
    %560 = vmatmul.mubr.f32.gmra.mxu0 %v252
    %v561 = vpop.f32.mrf.mxu0
    %v562 = vadd.f32 %v170, %v561
    %v563 = vpop.f32.mrf.mxu0
    %564 = vmatprep.mubr.f32.mxu0 0.0
    %565 = vmatmul.mubr.f32.gmra.mxu0 %v255
    %v566 = vpop.f32.mrf.mxu0
    %v567 = vadd.f32 %v170, %v566
    %v568 = vpop.f32.mrf.mxu0
    %569 = vmatprep.mubr.f32.mxu0 0.0
    %570 = vmatmul.mubr.f32.gmra.mxu0 %v258
    %v571 = vpop.f32.mrf.mxu0
    %v572 = vadd.f32 %v170, %v571
    %v573 = vpop.f32.mrf.mxu0
    %574 = vmatprep.mubr.f32.mxu0 0.0
    %575 = vmatmul.mubr.f32.gmra.mxu0 %v261
    %v576 = vpop.f32.mrf.mxu0
    %v577 = vadd.f32 %v170, %v576
    %v578 = vpop.f32.mrf.mxu0
    %579 = vmatprep.mubr.f32.mxu0 0.0
    %580 = vmatmul.mubr.f32.gmra.mxu0 %v264
    %v581 = vpop.f32.mrf.mxu0
    %v582 = vadd.f32 %v170, %v581
    %v583 = vpop.f32.mrf.mxu0
    %584 = vmatprep.mubr.f32.mxu0 0.0
    %585 = vmatmul.mubr.f32.gmra.mxu0 %v267
    %v586 = vpop.f32.mrf.mxu0
    %v587 = vadd.f32 %v170, %v586
    %v588 = vpop.f32.mrf.mxu0
    %589 = vmatprep.mubr.f32.mxu0 0.0
    %590 = vmatmul.mubr.f32.gmra.mxu0 %v270
    %v591 = vpop.f32.mrf.mxu0
    %v592 = vadd.f32 %v170, %v591
    %v593 = vpop.f32.mrf.mxu0
    %594 = vmatprep.mubr.f32.mxu0 0.0
    %595 = vmatmul.mubr.f32.gmra.mxu0 %v273
    %v596 = vpop.f32.mrf.mxu0
    %v597 = vadd.f32 %v170, %v596
    %v598 = vpop.f32.mrf.mxu0
    %599 = vmatprep.mubr.f32.mxu0 0.0
    %600 = vmatmul.mubr.f32.gmra.mxu0 %v276
    %v601 = vpop.f32.mrf.mxu0
    %v602 = vadd.f32 %v170, %v601
    %v603 = vpop.f32.mrf.mxu0
    %604 = vmatprep.mubr.f32.mxu0 0.0
    %605 = vmatmul.mubr.f32.gmra.mxu0 %v279
    %v606 = vpop.f32.mrf.mxu0
    %v607 = vadd.f32 %v170, %v606
    %v608 = vpop.f32.mrf.mxu0
    %609 = vmatprep.mubr.f32.mxu0 0.0
    %610 = vmatmul.mubr.f32.gmra.mxu0 %v282
    %v611 = vpop.f32.mrf.mxu0
    %v612 = vadd.f32 %v170, %v611
    %v613 = vpop.f32.mrf.mxu0
    %614 = vmatprep.mubr.f32.mxu0 0.0
    %615 = vmatmul.mubr.f32.gmra.mxu0 %v285
    %v616 = vpop.f32.mrf.mxu0
    %v617 = vadd.f32 %v170, %v616
    %v618 = vpop.f32.mrf.mxu0
    %619 = vmatprep.mubr.f32.mxu0 0.0
    %620 = vmatmul.mubr.f32.gmra.mxu0 %v288
    %v621 = vpop.f32.mrf.mxu0
    %v622 = vadd.f32 %v170, %v621
    %v623 = vpop.f32.mrf.mxu0
    %624 = vmatprep.mubr.f32.mxu0 0.0
    %625 = vmatmul.mubr.f32.gmra.mxu0 %v291
    %v626 = vpop.f32.mrf.mxu0
    %v627 = vadd.f32 %v170, %v626
    %v628 = vpop.f32.mrf.mxu0
    %629 = vmatprep.mubr.f32.mxu0 0.0
    %630 = vmatmul.mubr.f32.gmra.mxu0 %v294
    %v631 = vpop.f32.mrf.mxu0
    %v632 = vadd.f32 %v170, %v631
    %v633 = vpop.f32.mrf.mxu0
    %634 = vmatprep.mubr.f32.mxu0 0.0
    %635 = vmatmul.mubr.f32.gmra.mxu0 %v297
    %v636 = vpop.f32.mrf.mxu0
    %v637 = vadd.f32 %v170, %v636
    %v638 = vpop.f32.mrf.mxu0
    %639 = vmatprep.mubr.f32.mxu0 0.0
    %640 = vmatmul.mubr.f32.gmra.mxu0 %v300
    %v641 = vpop.f32.mrf.mxu0
    %v642 = vadd.f32 %v170, %v641
    %v643 = vpop.f32.mrf.mxu0
    %644 = vmatprep.mubr.f32.mxu0 0.0
    %645 = vmatmul.mubr.f32.gmra.mxu0 %v303
    %v646 = vpop.f32.mrf.mxu0
    %v647 = vadd.f32 %v170, %v646
    %v648 = vpop.f32.mrf.mxu0
    %649 = vmatprep.mubr.f32.mxu0 0.0
    %650 = vmatmul.mubr.f32.gmra.mxu0 %v306
    %v651 = vpop.f32.mrf.mxu0
    %v652 = vadd.f32 %v170, %v651
    %v653 = vpop.f32.mrf.mxu0
    %654 = vmatprep.mubr.f32.mxu0 0.0
    %655 = vmatmul.mubr.f32.gmra.mxu0 %v309
    %v656 = vpop.f32.mrf.mxu0
    %v657 = vadd.f32 %v170, %v656
    %v658 = vpop.f32.mrf.mxu0
    %659 = vmatprep.mubr.f32.mxu0 0.0
    %660 = vmatmul.mubr.f32.gmra.mxu0 %v312
    %v661 = vpop.f32.mrf.mxu0
    %v662 = vadd.f32 %v170, %v661
    %v663 = vpop.f32.mrf.mxu0
    %664 = vmatprep.mubr.f32.mxu0 0.0
    %665 = vmatmul.mubr.f32.gmra.mxu0 %v315
    %v666 = vpop.f32.mrf.mxu0
    %v667 = vadd.f32 %v170, %v666
    %v668 = vpop.f32.mrf.mxu0
    %669 = vmatprep.mubr.f32.mxu0 0.0
    %670 = vmatmul.mubr.f32.gmra.mxu0 %v318
    %v671 = vpop.f32.mrf.mxu0
    %v672 = vadd.f32 %v170, %v671
    %v673 = vpop.f32.mrf.mxu0
    %674 = vmatprep.mubr.f32.mxu0 0.0
    %675 = vmatmul.mubr.f32.gmra.mxu0 %v321
    %v676 = vpop.f32.mrf.mxu0
    %v677 = vadd.f32 %v170, %v676
    %v678 = vpop.f32.mrf.mxu0
    %679 = vmatprep.mubr.f32.mxu0 0.0
    %680 = vmatmul.mubr.f32.gmra.mxu0 %v324
    %v681 = vpop.f32.mrf.mxu0
    %v682 = vadd.f32 %v170, %v681
    %v683 = vpop.f32.mrf.mxu0
    %684 = vmatprep.mubr.f32.mxu0 0.0
    %685 = vmatmul.mubr.f32.gmra.mxu0 %v327
    %v686 = vpop.f32.mrf.mxu0
    %v687 = vadd.f32 %v170, %v686
    %v688 = vpop.f32.mrf.mxu0
    %689 = vmatprep.mubr.f32.mxu0 0.0
    %690 = vmatmul.mubr.f32.gmra.mxu0 %v330
    %v691 = vpop.f32.mrf.mxu0
    %v692 = vadd.f32 %v170, %v691
    %v693 = vpop.f32.mrf.mxu0
    %694 = vmatprep.mubr.f32.mxu0 0.0
    %695 = vmatmul.mubr.f32.gmra.mxu0 %v333
    %v696 = vpop.f32.mrf.mxu0
    %v697 = vadd.f32 %v170, %v696
    %v698 = vpop.f32.mrf.mxu0
    %699 = vmatprep.mubr.f32.mxu0 0.0
    %700 = vmatmul.mubr.f32.gmra.mxu0 %v336
    %v701 = vpop.f32.mrf.mxu0
    %v702 = vadd.f32 %v170, %v701
    %v703 = vpop.f32.mrf.mxu0
    %704 = vmatprep.mubr.f32.mxu0 0.0
    %705 = vmatmul.mubr.f32.gmra.mxu0 %v339
    %v706 = vpop.f32.mrf.mxu0
    %v707 = vadd.f32 %v170, %v706
    %v708 = vpop.f32.mrf.mxu0
    %709 = vmatprep.mubr.f32.mxu0 0.0
    %710 = vmatmul.mubr.f32.gmra.mxu0 %v342
    %v711 = vpop.f32.mrf.mxu0
    %v712 = vadd.f32 %v170, %v711
    %v713 = vpop.f32.mrf.mxu0
    %714 = vmatprep.mubr.f32.mxu0 0.0
    %715 = vmatmul.mubr.f32.gmra.mxu0 %v345
    %v716 = vpop.f32.mrf.mxu0
    %v717 = vadd.f32 %v170, %v716
    %v718 = vpop.f32.mrf.mxu0
    %719 = vmatprep.mubr.f32.mxu0 0.0
    %720 = vmatmul.mubr.f32.gmra.mxu0 %v348
    %v721 = vpop.f32.mrf.mxu0
    %v722 = vadd.f32 %v170, %v721
    %v723 = vpop.f32.mrf.mxu0
    %724 = vmatprep.mubr.f32.mxu0 0.0
    %725 = vmatmul.mubr.f32.gmra.mxu0 %v351
    %v726 = vpop.f32.mrf.mxu0
    %v727 = vadd.f32 %v170, %v726
    %v728 = vpop.f32.mrf.mxu0
    %729 = vmatprep.mubr.f32.mxu0 0.0
    %730 = vmatmul.mubr.f32.gmra.mxu0 %v354
    %v731 = vpop.f32.mrf.mxu0
    %v732 = vadd.f32 %v170, %v731
    %v733 = vpop.f32.mrf.mxu0
    %734 = vmatprep.mubr.f32.mxu0 0.0
    %735 = vmatmul.mubr.f32.gmra.mxu0 %v357
    %v736 = vpop.f32.mrf.mxu0
    %v737 = vadd.f32 %v170, %v736
    %v738 = vpop.f32.mrf.mxu0
    %739 = vmatprep.mubr.f32.mxu0 0.0
    %740 = vmatmul.mubr.f32.gmra.mxu0 %v360
    %v741 = vpop.f32.mrf.mxu0
    %v742 = vadd.f32 %v170, %v741
    %v743 = vpop.f32.mrf.mxu0
    %744 = vmatprep.mubr.f32.mxu0 0.0
    %745 = vmatmul.mubr.f32.gmra.mxu0 %v363
    %v746 = vpop.f32.mrf.mxu0
    %v747 = vadd.f32 %v170, %v746
    %v748 = vpop.f32.mrf.mxu0
    %749 = vdwg.mxu0
    %v750 = vmax.f32 %v432, 0.0
    %v751 = vmax.f32 %v437, 0.0
    %v752 = vmax.f32 %v442, 0.0
    %v753 = vmax.f32 %v447, 0.0
    %v754 = vmax.f32 %v452, 0.0
    %v755 = vmax.f32 %v457, 0.0
    %v756 = vmax.f32 %v462, 0.0
    %v757 = vmax.f32 %v467, 0.0
    %v758 = vmax.f32 %v472, 0.0
    %v759 = vmax.f32 %v477, 0.0
    %v760 = vmax.f32 %v482, 0.0
    %v761 = vmax.f32 %v487, 0.0
    %v762 = vmax.f32 %v492, 0.0
    %v763 = vmax.f32 %v497, 0.0
    %v764 = vmax.f32 %v502, 0.0
    %v765 = vmax.f32 %v507, 0.0
    %v766 = vmax.f32 %v512, 0.0
    %v767 = vmax.f32 %v517, 0.0
    %v768 = vmax.f32 %v522, 0.0
    %v769 = vmax.f32 %v527, 0.0
    %v770 = vmax.f32 %v532, 0.0
    %v771 = vmax.f32 %v537, 0.0
    %v772 = vmax.f32 %v542, 0.0
    %v773 = vmax.f32 %v547, 0.0
    %v774 = vmax.f32 %v552, 0.0
    %v775 = vmax.f32 %v557, 0.0
    %v776 = vmax.f32 %v562, 0.0
    %v777 = vmax.f32 %v567, 0.0
    %v778 = vmax.f32 %v572, 0.0
    %v779 = vmax.f32 %v577, 0.0
    %v780 = vmax.f32 %v582, 0.0
    %v781 = vmax.f32 %v587, 0.0
    %v782 = vmax.f32 %v592, 0.0
    %v783 = vmax.f32 %v597, 0.0
    %v784 = vmax.f32 %v602, 0.0
    %v785 = vmax.f32 %v607, 0.0
    %v786 = vmax.f32 %v612, 0.0
    %v787 = vmax.f32 %v617, 0.0
    %v788 = vmax.f32 %v622, 0.0
    %v789 = vmax.f32 %v627, 0.0
    %v790 = vmax.f32 %v632, 0.0
    %v791 = vmax.f32 %v637, 0.0
    %v792 = vmax.f32 %v642, 0.0
    %v793 = vmax.f32 %v647, 0.0
    %v794 = vmax.f32 %v652, 0.0
    %v795 = vmax.f32 %v657, 0.0
    %v796 = vmax.f32 %v662, 0.0
    %v797 = vmax.f32 %v667, 0.0
    %v798 = vmax.f32 %v672, 0.0
    %v799 = vmax.f32 %v677, 0.0
    %v800 = vmax.f32 %v682, 0.0
    %v801 = vmax.f32 %v687, 0.0
    %v802 = vmax.f32 %v692, 0.0
    %v803 = vmax.f32 %v697, 0.0
    %v804 = vmax.f32 %v702, 0.0
    %v805 = vmax.f32 %v707, 0.0
    %v806 = vmax.f32 %v712, 0.0
    %v807 = vmax.f32 %v717, 0.0
    %v808 = vmax.f32 %v722, 0.0
    %v809 = vmax.f32 %v727, 0.0
    %v810 = vmax.f32 %v732, 0.0
    %v811 = vmax.f32 %v737, 0.0
    %v812 = vmax.f32 %v742, 0.0
    %v813 = vmax.f32 %v747, 0.0
    %v878 = vcombine.high %v750, %v750
    %v880 = vunpack.c.l.s4 1983009808
    %v881 = vunpack.c.0.s8 %v880
    %v882 = vlaneseq
    %v883 = vshrl.u32 %v882, 7
    %v884 = vsub.s32 %v881, %v883
    %v885 = vrot.slane %v750, %v884
    %v887 = vunpack.c.l.s4 1983009808
    %v888 = vunpack.c.0.s8 %v887
    %v889 = vlaneseq
    %v890 = vshrl.u32 %v889, 7
    %v891 = vsub.s32 %v888, %v890
    %v892 = vrot.slane %v878, %v891
    %v893 = vcombine.high %v885, %v885
    %v894 = vcombine.high %v892, %v892
    %v895 = vcombine.high %v751, %v751
    %v897 = vunpack.c.l.s4 1983009808
    %v898 = vunpack.c.0.s8 %v897
    %v899 = vlaneseq
    %v900 = vshrl.u32 %v899, 7
    %v901 = vsub.s32 %v898, %v900
    %v902 = vrot.slane %v751, %v901
    %v904 = vunpack.c.l.s4 1983009808
    %v905 = vunpack.c.0.s8 %v904
    %v906 = vlaneseq
    %v907 = vshrl.u32 %v906, 7
    %v908 = vsub.s32 %v905, %v907
    %v909 = vrot.slane %v895, %v908
    %v910 = vcombine.high %v902, %v902
    %v911 = vcombine.high %v909, %v909
    %v912 = vcombine.high %v752, %v752
    %v914 = vunpack.c.l.s4 1983009808
    %v915 = vunpack.c.0.s8 %v914
    %v916 = vlaneseq
    %v917 = vshrl.u32 %v916, 7
    %v918 = vsub.s32 %v915, %v917
    %v919 = vrot.slane %v752, %v918
    %v921 = vunpack.c.l.s4 1983009808
    %v922 = vunpack.c.0.s8 %v921
    %v923 = vlaneseq
    %v924 = vshrl.u32 %v923, 7
    %v925 = vsub.s32 %v922, %v924
    %v926 = vrot.slane %v912, %v925
    %v927 = vcombine.high %v919, %v919
    %v928 = vcombine.high %v926, %v926
    %v929 = vcombine.high %v753, %v753
    %v931 = vunpack.c.l.s4 1983009808
    %v932 = vunpack.c.0.s8 %v931
    %v933 = vlaneseq
    %v934 = vshrl.u32 %v933, 7
    %v935 = vsub.s32 %v932, %v934
    %v936 = vrot.slane %v753, %v935
    %v938 = vunpack.c.l.s4 1983009808
    %v939 = vunpack.c.0.s8 %v938
    %v940 = vlaneseq
    %v941 = vshrl.u32 %v940, 7
    %v942 = vsub.s32 %v939, %v941
    %v943 = vrot.slane %v929, %v942
    %v944 = vcombine.high %v936, %v936
    %v945 = vcombine.high %v943, %v943
    %v946 = vcombine.high %v754, %v754
    %v948 = vunpack.c.l.s4 1983009808
    %v949 = vunpack.c.0.s8 %v948
    %v950 = vlaneseq
    %v951 = vshrl.u32 %v950, 7
    %v952 = vsub.s32 %v949, %v951
    %v953 = vrot.slane %v754, %v952
    %v955 = vunpack.c.l.s4 1983009808
    %v956 = vunpack.c.0.s8 %v955
    %v957 = vlaneseq
    %v958 = vshrl.u32 %v957, 7
    %v959 = vsub.s32 %v956, %v958
    %v960 = vrot.slane %v946, %v959
    %v961 = vcombine.high %v953, %v953
    %v962 = vcombine.high %v960, %v960
    %v963 = vcombine.high %v755, %v755
    %v965 = vunpack.c.l.s4 1983009808
    %v966 = vunpack.c.0.s8 %v965
    %v967 = vlaneseq
    %v968 = vshrl.u32 %v967, 7
    %v969 = vsub.s32 %v966, %v968
    %v970 = vrot.slane %v755, %v969
    %v972 = vunpack.c.l.s4 1983009808
    %v973 = vunpack.c.0.s8 %v972
    %v974 = vlaneseq
    %v975 = vshrl.u32 %v974, 7
    %v976 = vsub.s32 %v973, %v975
    %v977 = vrot.slane %v963, %v976
    %v978 = vcombine.high %v970, %v970
    %v979 = vcombine.high %v977, %v977
    %v980 = vcombine.high %v756, %v756
    %v982 = vunpack.c.l.s4 1983009808
    %v983 = vunpack.c.0.s8 %v982
    %v984 = vlaneseq
    %v985 = vshrl.u32 %v984, 7
    %v986 = vsub.s32 %v983, %v985
    %v987 = vrot.slane %v756, %v986
    %v989 = vunpack.c.l.s4 1983009808
    %v990 = vunpack.c.0.s8 %v989
    %v991 = vlaneseq
    %v992 = vshrl.u32 %v991, 7
    %v993 = vsub.s32 %v990, %v992
    %v994 = vrot.slane %v980, %v993
    %v995 = vcombine.high %v987, %v987
    %v996 = vcombine.high %v994, %v994
    %v997 = vcombine.high %v757, %v757
    %v999 = vunpack.c.l.s4 1983009808
    %v1000 = vunpack.c.0.s8 %v999
    %v1001 = vlaneseq
    %v1002 = vshrl.u32 %v1001, 7
    %v1003 = vsub.s32 %v1000, %v1002
    %v1004 = vrot.slane %v757, %v1003
    %v1006 = vunpack.c.l.s4 1983009808
    %v1007 = vunpack.c.0.s8 %v1006
    %v1008 = vlaneseq
    %v1009 = vshrl.u32 %v1008, 7
    %v1010 = vsub.s32 %v1007, %v1009
    %v1011 = vrot.slane %v997, %v1010
    %v1012 = vcombine.high %v1004, %v1004
    %v1013 = vcombine.high %v1011, %v1011
    %v1014 = vcombine.high %v758, %v758
    %v1016 = vunpack.c.l.s4 1983009808
    %v1017 = vunpack.c.0.s8 %v1016
    %v1018 = vlaneseq
    %v1019 = vshrl.u32 %v1018, 7
    %v1020 = vsub.s32 %v1017, %v1019
    %v1021 = vrot.slane %v758, %v1020
    %v1023 = vunpack.c.l.s4 1983009808
    %v1024 = vunpack.c.0.s8 %v1023
    %v1025 = vlaneseq
    %v1026 = vshrl.u32 %v1025, 7
    %v1027 = vsub.s32 %v1024, %v1026
    %v1028 = vrot.slane %v1014, %v1027
    %v1029 = vcombine.high %v1021, %v1021
    %v1030 = vcombine.high %v1028, %v1028
    %v1031 = vcombine.high %v759, %v759
    %v1033 = vunpack.c.l.s4 1983009808
    %v1034 = vunpack.c.0.s8 %v1033
    %v1035 = vlaneseq
    %v1036 = vshrl.u32 %v1035, 7
    %v1037 = vsub.s32 %v1034, %v1036
    %v1038 = vrot.slane %v759, %v1037
    %v1040 = vunpack.c.l.s4 1983009808
    %v1041 = vunpack.c.0.s8 %v1040
    %v1042 = vlaneseq
    %v1043 = vshrl.u32 %v1042, 7
    %v1044 = vsub.s32 %v1041, %v1043
    %v1045 = vrot.slane %v1031, %v1044
    %v1046 = vcombine.high %v1038, %v1038
    %v1047 = vcombine.high %v1045, %v1045
    %v1048 = vcombine.high %v760, %v760
    %v1050 = vunpack.c.l.s4 1983009808
    %v1051 = vunpack.c.0.s8 %v1050
    %v1052 = vlaneseq
    %v1053 = vshrl.u32 %v1052, 7
    %v1054 = vsub.s32 %v1051, %v1053
    %v1055 = vrot.slane %v760, %v1054
    %v1057 = vunpack.c.l.s4 1983009808
    %v1058 = vunpack.c.0.s8 %v1057
    %v1059 = vlaneseq
    %v1060 = vshrl.u32 %v1059, 7
    %v1061 = vsub.s32 %v1058, %v1060
    %v1062 = vrot.slane %v1048, %v1061
    %v1063 = vcombine.high %v1055, %v1055
    %v1064 = vcombine.high %v1062, %v1062
    %v1065 = vcombine.high %v761, %v761
    %v1067 = vunpack.c.l.s4 1983009808
    %v1068 = vunpack.c.0.s8 %v1067
    %v1069 = vlaneseq
    %v1070 = vshrl.u32 %v1069, 7
    %v1071 = vsub.s32 %v1068, %v1070
    %v1072 = vrot.slane %v761, %v1071
    %v1074 = vunpack.c.l.s4 1983009808
    %v1075 = vunpack.c.0.s8 %v1074
    %v1076 = vlaneseq
    %v1077 = vshrl.u32 %v1076, 7
    %v1078 = vsub.s32 %v1075, %v1077
    %v1079 = vrot.slane %v1065, %v1078
    %v1080 = vcombine.high %v1072, %v1072
    %v1081 = vcombine.high %v1079, %v1079
    %v1082 = vcombine.high %v762, %v762
    %v1084 = vunpack.c.l.s4 1983009808
    %v1085 = vunpack.c.0.s8 %v1084
    %v1086 = vlaneseq
    %v1087 = vshrl.u32 %v1086, 7
    %v1088 = vsub.s32 %v1085, %v1087
    %v1089 = vrot.slane %v762, %v1088
    %v1091 = vunpack.c.l.s4 1983009808
    %v1092 = vunpack.c.0.s8 %v1091
    %v1093 = vlaneseq
    %v1094 = vshrl.u32 %v1093, 7
    %v1095 = vsub.s32 %v1092, %v1094
    %v1096 = vrot.slane %v1082, %v1095
    %v1097 = vcombine.high %v1089, %v1089
    %v1098 = vcombine.high %v1096, %v1096
    %v1099 = vcombine.high %v763, %v763
    %v1101 = vunpack.c.l.s4 1983009808
    %v1102 = vunpack.c.0.s8 %v1101
    %v1103 = vlaneseq
    %v1104 = vshrl.u32 %v1103, 7
    %v1105 = vsub.s32 %v1102, %v1104
    %v1106 = vrot.slane %v763, %v1105
    %v1108 = vunpack.c.l.s4 1983009808
    %v1109 = vunpack.c.0.s8 %v1108
    %v1110 = vlaneseq
    %v1111 = vshrl.u32 %v1110, 7
    %v1112 = vsub.s32 %v1109, %v1111
    %v1113 = vrot.slane %v1099, %v1112
    %v1114 = vcombine.high %v1106, %v1106
    %v1115 = vcombine.high %v1113, %v1113
    %v1116 = vcombine.high %v764, %v764
    %v1118 = vunpack.c.l.s4 1983009808
    %v1119 = vunpack.c.0.s8 %v1118
    %v1120 = vlaneseq
    %v1121 = vshrl.u32 %v1120, 7
    %v1122 = vsub.s32 %v1119, %v1121
    %v1123 = vrot.slane %v764, %v1122
    %v1125 = vunpack.c.l.s4 1983009808
    %v1126 = vunpack.c.0.s8 %v1125
    %v1127 = vlaneseq
    %v1128 = vshrl.u32 %v1127, 7
    %v1129 = vsub.s32 %v1126, %v1128
    %v1130 = vrot.slane %v1116, %v1129
    %v1131 = vcombine.high %v1123, %v1123
    %v1132 = vcombine.high %v1130, %v1130
    %v1133 = vcombine.high %v765, %v765
    %v1135 = vunpack.c.l.s4 1983009808
    %v1136 = vunpack.c.0.s8 %v1135
    %v1137 = vlaneseq
    %v1138 = vshrl.u32 %v1137, 7
    %v1139 = vsub.s32 %v1136, %v1138
    %v1140 = vrot.slane %v765, %v1139
    %v1142 = vunpack.c.l.s4 1983009808
    %v1143 = vunpack.c.0.s8 %v1142
    %v1144 = vlaneseq
    %v1145 = vshrl.u32 %v1144, 7
    %v1146 = vsub.s32 %v1143, %v1145
    %v1147 = vrot.slane %v1133, %v1146
    %v1148 = vcombine.high %v1140, %v1140
    %v1149 = vcombine.high %v1147, %v1147
    %v1150 = vcombine.high %v766, %v766
    %v1152 = vunpack.c.l.s4 1983009808
    %v1153 = vunpack.c.0.s8 %v1152
    %v1154 = vlaneseq
    %v1155 = vshrl.u32 %v1154, 7
    %v1156 = vsub.s32 %v1153, %v1155
    %v1157 = vrot.slane %v766, %v1156
    %v1159 = vunpack.c.l.s4 1983009808
    %v1160 = vunpack.c.0.s8 %v1159
    %v1161 = vlaneseq
    %v1162 = vshrl.u32 %v1161, 7
    %v1163 = vsub.s32 %v1160, %v1162
    %v1164 = vrot.slane %v1150, %v1163
    %v1165 = vcombine.high %v1157, %v1157
    %v1166 = vcombine.high %v1164, %v1164
    %v1167 = vcombine.high %v767, %v767
    %v1169 = vunpack.c.l.s4 1983009808
    %v1170 = vunpack.c.0.s8 %v1169
    %v1171 = vlaneseq
    %v1172 = vshrl.u32 %v1171, 7
    %v1173 = vsub.s32 %v1170, %v1172
    %v1174 = vrot.slane %v767, %v1173
    %v1176 = vunpack.c.l.s4 1983009808
    %v1177 = vunpack.c.0.s8 %v1176
    %v1178 = vlaneseq
    %v1179 = vshrl.u32 %v1178, 7
    %v1180 = vsub.s32 %v1177, %v1179
    %v1181 = vrot.slane %v1167, %v1180
    %v1182 = vcombine.high %v1174, %v1174
    %v1183 = vcombine.high %v1181, %v1181
    %v1184 = vcombine.high %v768, %v768
    %v1186 = vunpack.c.l.s4 1983009808
    %v1187 = vunpack.c.0.s8 %v1186
    %v1188 = vlaneseq
    %v1189 = vshrl.u32 %v1188, 7
    %v1190 = vsub.s32 %v1187, %v1189
    %v1191 = vrot.slane %v768, %v1190
    %v1193 = vunpack.c.l.s4 1983009808
    %v1194 = vunpack.c.0.s8 %v1193
    %v1195 = vlaneseq
    %v1196 = vshrl.u32 %v1195, 7
    %v1197 = vsub.s32 %v1194, %v1196
    %v1198 = vrot.slane %v1184, %v1197
    %v1199 = vcombine.high %v1191, %v1191
    %v1200 = vcombine.high %v1198, %v1198
    %v1201 = vcombine.high %v769, %v769
    %v1203 = vunpack.c.l.s4 1983009808
    %v1204 = vunpack.c.0.s8 %v1203
    %v1205 = vlaneseq
    %v1206 = vshrl.u32 %v1205, 7
    %v1207 = vsub.s32 %v1204, %v1206
    %v1208 = vrot.slane %v769, %v1207
    %v1210 = vunpack.c.l.s4 1983009808
    %v1211 = vunpack.c.0.s8 %v1210
    %v1212 = vlaneseq
    %v1213 = vshrl.u32 %v1212, 7
    %v1214 = vsub.s32 %v1211, %v1213
    %v1215 = vrot.slane %v1201, %v1214
    %v1216 = vcombine.high %v1208, %v1208
    %v1217 = vcombine.high %v1215, %v1215
    %v1218 = vcombine.high %v770, %v770
    %v1220 = vunpack.c.l.s4 1983009808
    %v1221 = vunpack.c.0.s8 %v1220
    %v1222 = vlaneseq
    %v1223 = vshrl.u32 %v1222, 7
    %v1224 = vsub.s32 %v1221, %v1223
    %v1225 = vrot.slane %v770, %v1224
    %v1227 = vunpack.c.l.s4 1983009808
    %v1228 = vunpack.c.0.s8 %v1227
    %v1229 = vlaneseq
    %v1230 = vshrl.u32 %v1229, 7
    %v1231 = vsub.s32 %v1228, %v1230
    %v1232 = vrot.slane %v1218, %v1231
    %v1233 = vcombine.high %v1225, %v1225
    %v1234 = vcombine.high %v1232, %v1232
    %v1235 = vcombine.high %v771, %v771
    %v1237 = vunpack.c.l.s4 1983009808
    %v1238 = vunpack.c.0.s8 %v1237
    %v1239 = vlaneseq
    %v1240 = vshrl.u32 %v1239, 7
    %v1241 = vsub.s32 %v1238, %v1240
    %v1242 = vrot.slane %v771, %v1241
    %v1244 = vunpack.c.l.s4 1983009808
    %v1245 = vunpack.c.0.s8 %v1244
    %v1246 = vlaneseq
    %v1247 = vshrl.u32 %v1246, 7
    %v1248 = vsub.s32 %v1245, %v1247
    %v1249 = vrot.slane %v1235, %v1248
    %v1250 = vcombine.high %v1242, %v1242
    %v1251 = vcombine.high %v1249, %v1249
    %v1252 = vcombine.high %v772, %v772
    %v1254 = vunpack.c.l.s4 1983009808
    %v1255 = vunpack.c.0.s8 %v1254
    %v1256 = vlaneseq
    %v1257 = vshrl.u32 %v1256, 7
    %v1258 = vsub.s32 %v1255, %v1257
    %v1259 = vrot.slane %v772, %v1258
    %v1261 = vunpack.c.l.s4 1983009808
    %v1262 = vunpack.c.0.s8 %v1261
    %v1263 = vlaneseq
    %v1264 = vshrl.u32 %v1263, 7
    %v1265 = vsub.s32 %v1262, %v1264
    %v1266 = vrot.slane %v1252, %v1265
    %v1267 = vcombine.high %v1259, %v1259
    %v1268 = vcombine.high %v1266, %v1266
    %v1269 = vcombine.high %v773, %v773
    %v1271 = vunpack.c.l.s4 1983009808
    %v1272 = vunpack.c.0.s8 %v1271
    %v1273 = vlaneseq
    %v1274 = vshrl.u32 %v1273, 7
    %v1275 = vsub.s32 %v1272, %v1274
    %v1276 = vrot.slane %v773, %v1275
    %v1278 = vunpack.c.l.s4 1983009808
    %v1279 = vunpack.c.0.s8 %v1278
    %v1280 = vlaneseq
    %v1281 = vshrl.u32 %v1280, 7
    %v1282 = vsub.s32 %v1279, %v1281
    %v1283 = vrot.slane %v1269, %v1282
    %v1284 = vcombine.high %v1276, %v1276
    %v1285 = vcombine.high %v1283, %v1283
    %v1286 = vcombine.high %v774, %v774
    %v1288 = vunpack.c.l.s4 1983009808
    %v1289 = vunpack.c.0.s8 %v1288
    %v1290 = vlaneseq
    %v1291 = vshrl.u32 %v1290, 7
    %v1292 = vsub.s32 %v1289, %v1291
    %v1293 = vrot.slane %v774, %v1292
    %v1295 = vunpack.c.l.s4 1983009808
    %v1296 = vunpack.c.0.s8 %v1295
    %v1297 = vlaneseq
    %v1298 = vshrl.u32 %v1297, 7
    %v1299 = vsub.s32 %v1296, %v1298
    %v1300 = vrot.slane %v1286, %v1299
    %v1301 = vcombine.high %v1293, %v1293
    %v1302 = vcombine.high %v1300, %v1300
    %v1303 = vcombine.high %v775, %v775
    %v1305 = vunpack.c.l.s4 1983009808
    %v1306 = vunpack.c.0.s8 %v1305
    %v1307 = vlaneseq
    %v1308 = vshrl.u32 %v1307, 7
    %v1309 = vsub.s32 %v1306, %v1308
    %v1310 = vrot.slane %v775, %v1309
    %v1312 = vunpack.c.l.s4 1983009808
    %v1313 = vunpack.c.0.s8 %v1312
    %v1314 = vlaneseq
    %v1315 = vshrl.u32 %v1314, 7
    %v1316 = vsub.s32 %v1313, %v1315
    %v1317 = vrot.slane %v1303, %v1316
    %v1318 = vcombine.high %v1310, %v1310
    %v1319 = vcombine.high %v1317, %v1317
    %v1320 = vcombine.high %v776, %v776
    %v1322 = vunpack.c.l.s4 1983009808
    %v1323 = vunpack.c.0.s8 %v1322
    %v1324 = vlaneseq
    %v1325 = vshrl.u32 %v1324, 7
    %v1326 = vsub.s32 %v1323, %v1325
    %v1327 = vrot.slane %v776, %v1326
    %v1329 = vunpack.c.l.s4 1983009808
    %v1330 = vunpack.c.0.s8 %v1329
    %v1331 = vlaneseq
    %v1332 = vshrl.u32 %v1331, 7
    %v1333 = vsub.s32 %v1330, %v1332
    %v1334 = vrot.slane %v1320, %v1333
    %v1335 = vcombine.high %v1327, %v1327
    %v1336 = vcombine.high %v1334, %v1334
    %v1337 = vcombine.high %v777, %v777
    %v1339 = vunpack.c.l.s4 1983009808
    %v1340 = vunpack.c.0.s8 %v1339
    %v1341 = vlaneseq
    %v1342 = vshrl.u32 %v1341, 7
    %v1343 = vsub.s32 %v1340, %v1342
    %v1344 = vrot.slane %v777, %v1343
    %v1346 = vunpack.c.l.s4 1983009808
    %v1347 = vunpack.c.0.s8 %v1346
    %v1348 = vlaneseq
    %v1349 = vshrl.u32 %v1348, 7
    %v1350 = vsub.s32 %v1347, %v1349
    %v1351 = vrot.slane %v1337, %v1350
    %v1352 = vcombine.high %v1344, %v1344
    %v1353 = vcombine.high %v1351, %v1351
    %v1354 = vcombine.high %v778, %v778
    %v1356 = vunpack.c.l.s4 1983009808
    %v1357 = vunpack.c.0.s8 %v1356
    %v1358 = vlaneseq
    %v1359 = vshrl.u32 %v1358, 7
    %v1360 = vsub.s32 %v1357, %v1359
    %v1361 = vrot.slane %v778, %v1360
    %v1363 = vunpack.c.l.s4 1983009808
    %v1364 = vunpack.c.0.s8 %v1363
    %v1365 = vlaneseq
    %v1366 = vshrl.u32 %v1365, 7
    %v1367 = vsub.s32 %v1364, %v1366
    %v1368 = vrot.slane %v1354, %v1367
    %v1369 = vcombine.high %v1361, %v1361
    %v1370 = vcombine.high %v1368, %v1368
    %v1371 = vcombine.high %v779, %v779
    %v1373 = vunpack.c.l.s4 1983009808
    %v1374 = vunpack.c.0.s8 %v1373
    %v1375 = vlaneseq
    %v1376 = vshrl.u32 %v1375, 7
    %v1377 = vsub.s32 %v1374, %v1376
    %v1378 = vrot.slane %v779, %v1377
    %v1380 = vunpack.c.l.s4 1983009808
    %v1381 = vunpack.c.0.s8 %v1380
    %v1382 = vlaneseq
    %v1383 = vshrl.u32 %v1382, 7
    %v1384 = vsub.s32 %v1381, %v1383
    %v1385 = vrot.slane %v1371, %v1384
    %v1386 = vcombine.high %v1378, %v1378
    %v1387 = vcombine.high %v1385, %v1385
    %v1388 = vcombine.high %v780, %v780
    %v1390 = vunpack.c.l.s4 1983009808
    %v1391 = vunpack.c.0.s8 %v1390
    %v1392 = vlaneseq
    %v1393 = vshrl.u32 %v1392, 7
    %v1394 = vsub.s32 %v1391, %v1393
    %v1395 = vrot.slane %v780, %v1394
    %v1397 = vunpack.c.l.s4 1983009808
    %v1398 = vunpack.c.0.s8 %v1397
    %v1399 = vlaneseq
    %v1400 = vshrl.u32 %v1399, 7
    %v1401 = vsub.s32 %v1398, %v1400
    %v1402 = vrot.slane %v1388, %v1401
    %v1403 = vcombine.high %v1395, %v1395
    %v1404 = vcombine.high %v1402, %v1402
    %v1405 = vcombine.high %v781, %v781
    %v1407 = vunpack.c.l.s4 1983009808
    %v1408 = vunpack.c.0.s8 %v1407
    %v1409 = vlaneseq
    %v1410 = vshrl.u32 %v1409, 7
    %v1411 = vsub.s32 %v1408, %v1410
    %v1412 = vrot.slane %v781, %v1411
    %v1414 = vunpack.c.l.s4 1983009808
    %v1415 = vunpack.c.0.s8 %v1414
    %v1416 = vlaneseq
    %v1417 = vshrl.u32 %v1416, 7
    %v1418 = vsub.s32 %v1415, %v1417
    %v1419 = vrot.slane %v1405, %v1418
    %v1420 = vcombine.high %v1412, %v1412
    %v1421 = vcombine.high %v1419, %v1419
    %v1422 = vcombine.high %v782, %v782
    %v1424 = vunpack.c.l.s4 1983009808
    %v1425 = vunpack.c.0.s8 %v1424
    %v1426 = vlaneseq
    %v1427 = vshrl.u32 %v1426, 7
    %v1428 = vsub.s32 %v1425, %v1427
    %v1429 = vrot.slane %v782, %v1428
    %v1431 = vunpack.c.l.s4 1983009808
    %v1432 = vunpack.c.0.s8 %v1431
    %v1433 = vlaneseq
    %v1434 = vshrl.u32 %v1433, 7
    %v1435 = vsub.s32 %v1432, %v1434
    %v1436 = vrot.slane %v1422, %v1435
    %v1437 = vcombine.high %v1429, %v1429
    %v1438 = vcombine.high %v1436, %v1436
    %v1439 = vcombine.high %v783, %v783
    %v1441 = vunpack.c.l.s4 1983009808
    %v1442 = vunpack.c.0.s8 %v1441
    %v1443 = vlaneseq
    %v1444 = vshrl.u32 %v1443, 7
    %v1445 = vsub.s32 %v1442, %v1444
    %v1446 = vrot.slane %v783, %v1445
    %v1448 = vunpack.c.l.s4 1983009808
    %v1449 = vunpack.c.0.s8 %v1448
    %v1450 = vlaneseq
    %v1451 = vshrl.u32 %v1450, 7
    %v1452 = vsub.s32 %v1449, %v1451
    %v1453 = vrot.slane %v1439, %v1452
    %v1454 = vcombine.high %v1446, %v1446
    %v1455 = vcombine.high %v1453, %v1453
    %v1456 = vcombine.high %v784, %v784
    %v1458 = vunpack.c.l.s4 1983009808
    %v1459 = vunpack.c.0.s8 %v1458
    %v1460 = vlaneseq
    %v1461 = vshrl.u32 %v1460, 7
    %v1462 = vsub.s32 %v1459, %v1461
    %v1463 = vrot.slane %v784, %v1462
    %v1465 = vunpack.c.l.s4 1983009808
    %v1466 = vunpack.c.0.s8 %v1465
    %v1467 = vlaneseq
    %v1468 = vshrl.u32 %v1467, 7
    %v1469 = vsub.s32 %v1466, %v1468
    %v1470 = vrot.slane %v1456, %v1469
    %v1471 = vcombine.high %v1463, %v1463
    %v1472 = vcombine.high %v1470, %v1470
    %v1473 = vcombine.high %v785, %v785
    %v1475 = vunpack.c.l.s4 1983009808
    %v1476 = vunpack.c.0.s8 %v1475
    %v1477 = vlaneseq
    %v1478 = vshrl.u32 %v1477, 7
    %v1479 = vsub.s32 %v1476, %v1478
    %v1480 = vrot.slane %v785, %v1479
    %v1482 = vunpack.c.l.s4 1983009808
    %v1483 = vunpack.c.0.s8 %v1482
    %v1484 = vlaneseq
    %v1485 = vshrl.u32 %v1484, 7
    %v1486 = vsub.s32 %v1483, %v1485
    %v1487 = vrot.slane %v1473, %v1486
    %v1488 = vcombine.high %v1480, %v1480
    %v1489 = vcombine.high %v1487, %v1487
    %v1490 = vcombine.high %v786, %v786
    %v1492 = vunpack.c.l.s4 1983009808
    %v1493 = vunpack.c.0.s8 %v1492
    %v1494 = vlaneseq
    %v1495 = vshrl.u32 %v1494, 7
    %v1496 = vsub.s32 %v1493, %v1495
    %v1497 = vrot.slane %v786, %v1496
    %v1499 = vunpack.c.l.s4 1983009808
    %v1500 = vunpack.c.0.s8 %v1499
    %v1501 = vlaneseq
    %v1502 = vshrl.u32 %v1501, 7
    %v1503 = vsub.s32 %v1500, %v1502
    %v1504 = vrot.slane %v1490, %v1503
    %v1505 = vcombine.high %v1497, %v1497
    %v1506 = vcombine.high %v1504, %v1504
    %v1507 = vcombine.high %v787, %v787
    %v1509 = vunpack.c.l.s4 1983009808
    %v1510 = vunpack.c.0.s8 %v1509
    %v1511 = vlaneseq
    %v1512 = vshrl.u32 %v1511, 7
    %v1513 = vsub.s32 %v1510, %v1512
    %v1514 = vrot.slane %v787, %v1513
    %v1516 = vunpack.c.l.s4 1983009808
    %v1517 = vunpack.c.0.s8 %v1516
    %v1518 = vlaneseq
    %v1519 = vshrl.u32 %v1518, 7
    %v1520 = vsub.s32 %v1517, %v1519
    %v1521 = vrot.slane %v1507, %v1520
    %v1522 = vcombine.high %v1514, %v1514
    %v1523 = vcombine.high %v1521, %v1521
    %v1524 = vcombine.high %v788, %v788
    %v1526 = vunpack.c.l.s4 1983009808
    %v1527 = vunpack.c.0.s8 %v1526
    %v1528 = vlaneseq
    %v1529 = vshrl.u32 %v1528, 7
    %v1530 = vsub.s32 %v1527, %v1529
    %v1531 = vrot.slane %v788, %v1530
    %v1533 = vunpack.c.l.s4 1983009808
    %v1534 = vunpack.c.0.s8 %v1533
    %v1535 = vlaneseq
    %v1536 = vshrl.u32 %v1535, 7
    %v1537 = vsub.s32 %v1534, %v1536
    %v1538 = vrot.slane %v1524, %v1537
    %v1539 = vcombine.high %v1531, %v1531
    %v1540 = vcombine.high %v1538, %v1538
    %v1541 = vcombine.high %v789, %v789
    %v1543 = vunpack.c.l.s4 1983009808
    %v1544 = vunpack.c.0.s8 %v1543
    %v1545 = vlaneseq
    %v1546 = vshrl.u32 %v1545, 7
    %v1547 = vsub.s32 %v1544, %v1546
    %v1548 = vrot.slane %v789, %v1547
    %v1550 = vunpack.c.l.s4 1983009808
    %v1551 = vunpack.c.0.s8 %v1550
    %v1552 = vlaneseq
    %v1553 = vshrl.u32 %v1552, 7
    %v1554 = vsub.s32 %v1551, %v1553
    %v1555 = vrot.slane %v1541, %v1554
    %v1556 = vcombine.high %v1548, %v1548
    %v1557 = vcombine.high %v1555, %v1555
    %v1558 = vcombine.high %v790, %v790
    %v1560 = vunpack.c.l.s4 1983009808
    %v1561 = vunpack.c.0.s8 %v1560
    %v1562 = vlaneseq
    %v1563 = vshrl.u32 %v1562, 7
    %v1564 = vsub.s32 %v1561, %v1563
    %v1565 = vrot.slane %v790, %v1564
    %v1567 = vunpack.c.l.s4 1983009808
    %v1568 = vunpack.c.0.s8 %v1567
    %v1569 = vlaneseq
    %v1570 = vshrl.u32 %v1569, 7
    %v1571 = vsub.s32 %v1568, %v1570
    %v1572 = vrot.slane %v1558, %v1571
    %v1573 = vcombine.high %v1565, %v1565
    %v1574 = vcombine.high %v1572, %v1572
    %v1575 = vcombine.high %v791, %v791
    %v1577 = vunpack.c.l.s4 1983009808
    %v1578 = vunpack.c.0.s8 %v1577
    %v1579 = vlaneseq
    %v1580 = vshrl.u32 %v1579, 7
    %v1581 = vsub.s32 %v1578, %v1580
    %v1582 = vrot.slane %v791, %v1581
    %v1584 = vunpack.c.l.s4 1983009808
    %v1585 = vunpack.c.0.s8 %v1584
    %v1586 = vlaneseq
    %v1587 = vshrl.u32 %v1586, 7
    %v1588 = vsub.s32 %v1585, %v1587
    %v1589 = vrot.slane %v1575, %v1588
    %v1590 = vcombine.high %v1582, %v1582
    %v1591 = vcombine.high %v1589, %v1589
    %v1592 = vcombine.high %v792, %v792
    %v1594 = vunpack.c.l.s4 1983009808
    %v1595 = vunpack.c.0.s8 %v1594
    %v1596 = vlaneseq
    %v1597 = vshrl.u32 %v1596, 7
    %v1598 = vsub.s32 %v1595, %v1597
    %v1599 = vrot.slane %v792, %v1598
    %v1601 = vunpack.c.l.s4 1983009808
    %v1602 = vunpack.c.0.s8 %v1601
    %v1603 = vlaneseq
    %v1604 = vshrl.u32 %v1603, 7
    %v1605 = vsub.s32 %v1602, %v1604
    %v1606 = vrot.slane %v1592, %v1605
    %v1607 = vcombine.high %v1599, %v1599
    %v1608 = vcombine.high %v1606, %v1606
    %v1609 = vcombine.high %v793, %v793
    %v1611 = vunpack.c.l.s4 1983009808
    %v1612 = vunpack.c.0.s8 %v1611
    %v1613 = vlaneseq
    %v1614 = vshrl.u32 %v1613, 7
    %v1615 = vsub.s32 %v1612, %v1614
    %v1616 = vrot.slane %v793, %v1615
    %v1618 = vunpack.c.l.s4 1983009808
    %v1619 = vunpack.c.0.s8 %v1618
    %v1620 = vlaneseq
    %v1621 = vshrl.u32 %v1620, 7
    %v1622 = vsub.s32 %v1619, %v1621
    %v1623 = vrot.slane %v1609, %v1622
    %v1624 = vcombine.high %v1616, %v1616
    %v1625 = vcombine.high %v1623, %v1623
    %v1626 = vcombine.high %v794, %v794
    %v1628 = vunpack.c.l.s4 1983009808
    %v1629 = vunpack.c.0.s8 %v1628
    %v1630 = vlaneseq
    %v1631 = vshrl.u32 %v1630, 7
    %v1632 = vsub.s32 %v1629, %v1631
    %v1633 = vrot.slane %v794, %v1632
    %v1635 = vunpack.c.l.s4 1983009808
    %v1636 = vunpack.c.0.s8 %v1635
    %v1637 = vlaneseq
    %v1638 = vshrl.u32 %v1637, 7
    %v1639 = vsub.s32 %v1636, %v1638
    %v1640 = vrot.slane %v1626, %v1639
    %v1641 = vcombine.high %v1633, %v1633
    %v1642 = vcombine.high %v1640, %v1640
    %v1643 = vcombine.high %v795, %v795
    %v1645 = vunpack.c.l.s4 1983009808
    %v1646 = vunpack.c.0.s8 %v1645
    %v1647 = vlaneseq
    %v1648 = vshrl.u32 %v1647, 7
    %v1649 = vsub.s32 %v1646, %v1648
    %v1650 = vrot.slane %v795, %v1649
    %v1652 = vunpack.c.l.s4 1983009808
    %v1653 = vunpack.c.0.s8 %v1652
    %v1654 = vlaneseq
    %v1655 = vshrl.u32 %v1654, 7
    %v1656 = vsub.s32 %v1653, %v1655
    %v1657 = vrot.slane %v1643, %v1656
    %v1658 = vcombine.high %v1650, %v1650
    %v1659 = vcombine.high %v1657, %v1657
    %v1660 = vcombine.high %v796, %v796
    %v1662 = vunpack.c.l.s4 1983009808
    %v1663 = vunpack.c.0.s8 %v1662
    %v1664 = vlaneseq
    %v1665 = vshrl.u32 %v1664, 7
    %v1666 = vsub.s32 %v1663, %v1665
    %v1667 = vrot.slane %v796, %v1666
    %v1669 = vunpack.c.l.s4 1983009808
    %v1670 = vunpack.c.0.s8 %v1669
    %v1671 = vlaneseq
    %v1672 = vshrl.u32 %v1671, 7
    %v1673 = vsub.s32 %v1670, %v1672
    %v1674 = vrot.slane %v1660, %v1673
    %v1675 = vcombine.high %v1667, %v1667
    %v1676 = vcombine.high %v1674, %v1674
    %v1677 = vcombine.high %v797, %v797
    %v1679 = vunpack.c.l.s4 1983009808
    %v1680 = vunpack.c.0.s8 %v1679
    %v1681 = vlaneseq
    %v1682 = vshrl.u32 %v1681, 7
    %v1683 = vsub.s32 %v1680, %v1682
    %v1684 = vrot.slane %v797, %v1683
    %v1686 = vunpack.c.l.s4 1983009808
    %v1687 = vunpack.c.0.s8 %v1686
    %v1688 = vlaneseq
    %v1689 = vshrl.u32 %v1688, 7
    %v1690 = vsub.s32 %v1687, %v1689
    %v1691 = vrot.slane %v1677, %v1690
    %v1692 = vcombine.high %v1684, %v1684
    %v1693 = vcombine.high %v1691, %v1691
    %v1694 = vcombine.high %v798, %v798
    %v1696 = vunpack.c.l.s4 1983009808
    %v1697 = vunpack.c.0.s8 %v1696
    %v1698 = vlaneseq
    %v1699 = vshrl.u32 %v1698, 7
    %v1700 = vsub.s32 %v1697, %v1699
    %v1701 = vrot.slane %v798, %v1700
    %v1703 = vunpack.c.l.s4 1983009808
    %v1704 = vunpack.c.0.s8 %v1703
    %v1705 = vlaneseq
    %v1706 = vshrl.u32 %v1705, 7
    %v1707 = vsub.s32 %v1704, %v1706
    %v1708 = vrot.slane %v1694, %v1707
    %v1709 = vcombine.high %v1701, %v1701
    %v1710 = vcombine.high %v1708, %v1708
    %v1711 = vcombine.high %v799, %v799
    %v1713 = vunpack.c.l.s4 1983009808
    %v1714 = vunpack.c.0.s8 %v1713
    %v1715 = vlaneseq
    %v1716 = vshrl.u32 %v1715, 7
    %v1717 = vsub.s32 %v1714, %v1716
    %v1718 = vrot.slane %v799, %v1717
    %v1720 = vunpack.c.l.s4 1983009808
    %v1721 = vunpack.c.0.s8 %v1720
    %v1722 = vlaneseq
    %v1723 = vshrl.u32 %v1722, 7
    %v1724 = vsub.s32 %v1721, %v1723
    %v1725 = vrot.slane %v1711, %v1724
    %v1726 = vcombine.high %v1718, %v1718
    %v1727 = vcombine.high %v1725, %v1725
    %v1728 = vcombine.high %v800, %v800
    %v1730 = vunpack.c.l.s4 1983009808
    %v1731 = vunpack.c.0.s8 %v1730
    %v1732 = vlaneseq
    %v1733 = vshrl.u32 %v1732, 7
    %v1734 = vsub.s32 %v1731, %v1733
    %v1735 = vrot.slane %v800, %v1734
    %v1737 = vunpack.c.l.s4 1983009808
    %v1738 = vunpack.c.0.s8 %v1737
    %v1739 = vlaneseq
    %v1740 = vshrl.u32 %v1739, 7
    %v1741 = vsub.s32 %v1738, %v1740
    %v1742 = vrot.slane %v1728, %v1741
    %v1743 = vcombine.high %v1735, %v1735
    %v1744 = vcombine.high %v1742, %v1742
    %v1745 = vcombine.high %v801, %v801
    %v1747 = vunpack.c.l.s4 1983009808
    %v1748 = vunpack.c.0.s8 %v1747
    %v1749 = vlaneseq
    %v1750 = vshrl.u32 %v1749, 7
    %v1751 = vsub.s32 %v1748, %v1750
    %v1752 = vrot.slane %v801, %v1751
    %v1754 = vunpack.c.l.s4 1983009808
    %v1755 = vunpack.c.0.s8 %v1754
    %v1756 = vlaneseq
    %v1757 = vshrl.u32 %v1756, 7
    %v1758 = vsub.s32 %v1755, %v1757
    %v1759 = vrot.slane %v1745, %v1758
    %v1760 = vcombine.high %v1752, %v1752
    %v1761 = vcombine.high %v1759, %v1759
    %v1762 = vcombine.high %v802, %v802
    %v1764 = vunpack.c.l.s4 1983009808
    %v1765 = vunpack.c.0.s8 %v1764
    %v1766 = vlaneseq
    %v1767 = vshrl.u32 %v1766, 7
    %v1768 = vsub.s32 %v1765, %v1767
    %v1769 = vrot.slane %v802, %v1768
    %v1771 = vunpack.c.l.s4 1983009808
    %v1772 = vunpack.c.0.s8 %v1771
    %v1773 = vlaneseq
    %v1774 = vshrl.u32 %v1773, 7
    %v1775 = vsub.s32 %v1772, %v1774
    %v1776 = vrot.slane %v1762, %v1775
    %v1777 = vcombine.high %v1769, %v1769
    %v1778 = vcombine.high %v1776, %v1776
    %v1779 = vcombine.high %v803, %v803
    %v1781 = vunpack.c.l.s4 1983009808
    %v1782 = vunpack.c.0.s8 %v1781
    %v1783 = vlaneseq
    %v1784 = vshrl.u32 %v1783, 7
    %v1785 = vsub.s32 %v1782, %v1784
    %v1786 = vrot.slane %v803, %v1785
    %v1788 = vunpack.c.l.s4 1983009808
    %v1789 = vunpack.c.0.s8 %v1788
    %v1790 = vlaneseq
    %v1791 = vshrl.u32 %v1790, 7
    %v1792 = vsub.s32 %v1789, %v1791
    %v1793 = vrot.slane %v1779, %v1792
    %v1794 = vcombine.high %v1786, %v1786
    %v1795 = vcombine.high %v1793, %v1793
    %v1796 = vcombine.high %v804, %v804
    %v1798 = vunpack.c.l.s4 1983009808
    %v1799 = vunpack.c.0.s8 %v1798
    %v1800 = vlaneseq
    %v1801 = vshrl.u32 %v1800, 7
    %v1802 = vsub.s32 %v1799, %v1801
    %v1803 = vrot.slane %v804, %v1802
    %v1805 = vunpack.c.l.s4 1983009808
    %v1806 = vunpack.c.0.s8 %v1805
    %v1807 = vlaneseq
    %v1808 = vshrl.u32 %v1807, 7
    %v1809 = vsub.s32 %v1806, %v1808
    %v1810 = vrot.slane %v1796, %v1809
    %v1811 = vcombine.high %v1803, %v1803
    %v1812 = vcombine.high %v1810, %v1810
    %v1813 = vcombine.high %v805, %v805
    %v1815 = vunpack.c.l.s4 1983009808
    %v1816 = vunpack.c.0.s8 %v1815
    %v1817 = vlaneseq
    %v1818 = vshrl.u32 %v1817, 7
    %v1819 = vsub.s32 %v1816, %v1818
    %v1820 = vrot.slane %v805, %v1819
    %v1822 = vunpack.c.l.s4 1983009808
    %v1823 = vunpack.c.0.s8 %v1822
    %v1824 = vlaneseq
    %v1825 = vshrl.u32 %v1824, 7
    %v1826 = vsub.s32 %v1823, %v1825
    %v1827 = vrot.slane %v1813, %v1826
    %v1828 = vcombine.high %v1820, %v1820
    %v1829 = vcombine.high %v1827, %v1827
    %v1830 = vcombine.high %v806, %v806
    %v1832 = vunpack.c.l.s4 1983009808
    %v1833 = vunpack.c.0.s8 %v1832
    %v1834 = vlaneseq
    %v1835 = vshrl.u32 %v1834, 7
    %v1836 = vsub.s32 %v1833, %v1835
    %v1837 = vrot.slane %v806, %v1836
    %v1839 = vunpack.c.l.s4 1983009808
    %v1840 = vunpack.c.0.s8 %v1839
    %v1841 = vlaneseq
    %v1842 = vshrl.u32 %v1841, 7
    %v1843 = vsub.s32 %v1840, %v1842
    %v1844 = vrot.slane %v1830, %v1843
    %v1845 = vcombine.high %v1837, %v1837
    %v1846 = vcombine.high %v1844, %v1844
    %v1847 = vcombine.high %v807, %v807
    %v1849 = vunpack.c.l.s4 1983009808
    %v1850 = vunpack.c.0.s8 %v1849
    %v1851 = vlaneseq
    %v1852 = vshrl.u32 %v1851, 7
    %v1853 = vsub.s32 %v1850, %v1852
    %v1854 = vrot.slane %v807, %v1853
    %v1856 = vunpack.c.l.s4 1983009808
    %v1857 = vunpack.c.0.s8 %v1856
    %v1858 = vlaneseq
    %v1859 = vshrl.u32 %v1858, 7
    %v1860 = vsub.s32 %v1857, %v1859
    %v1861 = vrot.slane %v1847, %v1860
    %v1862 = vcombine.high %v1854, %v1854
    %v1863 = vcombine.high %v1861, %v1861
    %v1864 = vcombine.high %v808, %v808
    %v1866 = vunpack.c.l.s4 1983009808
    %v1867 = vunpack.c.0.s8 %v1866
    %v1868 = vlaneseq
    %v1869 = vshrl.u32 %v1868, 7
    %v1870 = vsub.s32 %v1867, %v1869
    %v1871 = vrot.slane %v808, %v1870
    %v1873 = vunpack.c.l.s4 1983009808
    %v1874 = vunpack.c.0.s8 %v1873
    %v1875 = vlaneseq
    %v1876 = vshrl.u32 %v1875, 7
    %v1877 = vsub.s32 %v1874, %v1876
    %v1878 = vrot.slane %v1864, %v1877
    %v1879 = vcombine.high %v1871, %v1871
    %v1880 = vcombine.high %v1878, %v1878
    %v1881 = vcombine.high %v809, %v809
    %v1883 = vunpack.c.l.s4 1983009808
    %v1884 = vunpack.c.0.s8 %v1883
    %v1885 = vlaneseq
    %v1886 = vshrl.u32 %v1885, 7
    %v1887 = vsub.s32 %v1884, %v1886
    %v1888 = vrot.slane %v809, %v1887
    %v1890 = vunpack.c.l.s4 1983009808
    %v1891 = vunpack.c.0.s8 %v1890
    %v1892 = vlaneseq
    %v1893 = vshrl.u32 %v1892, 7
    %v1894 = vsub.s32 %v1891, %v1893
    %v1895 = vrot.slane %v1881, %v1894
    %v1896 = vcombine.high %v1888, %v1888
    %v1897 = vcombine.high %v1895, %v1895
    %v1898 = vcombine.high %v810, %v810
    %v1900 = vunpack.c.l.s4 1983009808
    %v1901 = vunpack.c.0.s8 %v1900
    %v1902 = vlaneseq
    %v1903 = vshrl.u32 %v1902, 7
    %v1904 = vsub.s32 %v1901, %v1903
    %v1905 = vrot.slane %v810, %v1904
    %v1907 = vunpack.c.l.s4 1983009808
    %v1908 = vunpack.c.0.s8 %v1907
    %v1909 = vlaneseq
    %v1910 = vshrl.u32 %v1909, 7
    %v1911 = vsub.s32 %v1908, %v1910
    %v1912 = vrot.slane %v1898, %v1911
    %v1913 = vcombine.high %v1905, %v1905
    %v1914 = vcombine.high %v1912, %v1912
    %v1915 = vcombine.high %v811, %v811
    %v1917 = vunpack.c.l.s4 1983009808
    %v1918 = vunpack.c.0.s8 %v1917
    %v1919 = vlaneseq
    %v1920 = vshrl.u32 %v1919, 7
    %v1921 = vsub.s32 %v1918, %v1920
    %v1922 = vrot.slane %v811, %v1921
    %v1924 = vunpack.c.l.s4 1983009808
    %v1925 = vunpack.c.0.s8 %v1924
    %v1926 = vlaneseq
    %v1927 = vshrl.u32 %v1926, 7
    %v1928 = vsub.s32 %v1925, %v1927
    %v1929 = vrot.slane %v1915, %v1928
    %v1930 = vcombine.high %v1922, %v1922
    %v1931 = vcombine.high %v1929, %v1929
    %v1932 = vcombine.high %v812, %v812
    %v1934 = vunpack.c.l.s4 1983009808
    %v1935 = vunpack.c.0.s8 %v1934
    %v1936 = vlaneseq
    %v1937 = vshrl.u32 %v1936, 7
    %v1938 = vsub.s32 %v1935, %v1937
    %v1939 = vrot.slane %v812, %v1938
    %v1941 = vunpack.c.l.s4 1983009808
    %v1942 = vunpack.c.0.s8 %v1941
    %v1943 = vlaneseq
    %v1944 = vshrl.u32 %v1943, 7
    %v1945 = vsub.s32 %v1942, %v1944
    %v1946 = vrot.slane %v1932, %v1945
    %v1947 = vcombine.high %v1939, %v1939
    %v1948 = vcombine.high %v1946, %v1946
    %v1949 = vcombine.high %v813, %v813
    %v1951 = vunpack.c.l.s4 1983009808
    %v1952 = vunpack.c.0.s8 %v1951
    %v1953 = vlaneseq
    %v1954 = vshrl.u32 %v1953, 7
    %v1955 = vsub.s32 %v1952, %v1954
    %v1956 = vrot.slane %v813, %v1955
    %v1958 = vunpack.c.l.s4 1983009808
    %v1959 = vunpack.c.0.s8 %v1958
    %v1960 = vlaneseq
    %v1961 = vshrl.u32 %v1960, 7
    %v1962 = vsub.s32 %v1959, %v1961
    %v1963 = vrot.slane %v1949, %v1962
    %v1964 = vcombine.high %v1956, %v1956
    %v1965 = vcombine.high %v1963, %v1963
    %vm2222 = vcmask 254976
    %v2223 = vsel %vm2222, %v885, -inf
    %v2224 = vrot.slane %v2223, 4
    %v2225 = vmax.f32 %v2223, %v2224
    %v2226 = vrot.slane %v2225, 2
    %v2227 = vmax.f32 %v2225, %v2226
    %v2228 = vrot.slane %v2227, 1
    %v2229 = vmax.f32 %v2227, %v2228
    %v2230 = vsel %vm2222, %v893, -inf
    %v2231 = vrot.slane %v2230, 4
    %v2232 = vmax.f32 %v2230, %v2231
    %v2233 = vrot.slane %v2232, 2
    %v2234 = vmax.f32 %v2232, %v2233
    %v2235 = vrot.slane %v2234, 1
    %v2236 = vmax.f32 %v2234, %v2235
    %v2237 = vsel %vm2222, %v892, -inf
    %v2238 = vrot.slane %v2237, 4
    %v2239 = vmax.f32 %v2237, %v2238
    %v2240 = vrot.slane %v2239, 2
    %v2241 = vmax.f32 %v2239, %v2240
    %v2242 = vrot.slane %v2241, 1
    %v2243 = vmax.f32 %v2241, %v2242
    %v2244 = vsel %vm2222, %v894, -inf
    %v2245 = vrot.slane %v2244, 4
    %v2246 = vmax.f32 %v2244, %v2245
    %v2247 = vrot.slane %v2246, 2
    %v2248 = vmax.f32 %v2246, %v2247
    %v2249 = vrot.slane %v2248, 1
    %v2250 = vmax.f32 %v2248, %v2249
    %v2251 = vsel %vm2222, %v902, -inf
    %v2252 = vrot.slane %v2251, 4
    %v2253 = vmax.f32 %v2251, %v2252
    %v2254 = vrot.slane %v2253, 2
    %v2255 = vmax.f32 %v2253, %v2254
    %v2256 = vrot.slane %v2255, 1
    %v2257 = vmax.f32 %v2255, %v2256
    %v2258 = vsel %vm2222, %v910, -inf
    %v2259 = vrot.slane %v2258, 4
    %v2260 = vmax.f32 %v2258, %v2259
    %v2261 = vrot.slane %v2260, 2
    %v2262 = vmax.f32 %v2260, %v2261
    %v2263 = vrot.slane %v2262, 1
    %v2264 = vmax.f32 %v2262, %v2263
    %v2265 = vsel %vm2222, %v909, -inf
    %v2266 = vrot.slane %v2265, 4
    %v2267 = vmax.f32 %v2265, %v2266
    %v2268 = vrot.slane %v2267, 2
    %v2269 = vmax.f32 %v2267, %v2268
    %v2270 = vrot.slane %v2269, 1
    %v2271 = vmax.f32 %v2269, %v2270
    %v2272 = vsel %vm2222, %v911, -inf
    %v2273 = vrot.slane %v2272, 4
    %v2274 = vmax.f32 %v2272, %v2273
    %v2275 = vrot.slane %v2274, 2
    %v2276 = vmax.f32 %v2274, %v2275
    %v2277 = vrot.slane %v2276, 1
    %v2278 = vmax.f32 %v2276, %v2277
    %v2279 = vsel %vm2222, %v919, -inf
    %v2280 = vrot.slane %v2279, 4
    %v2281 = vmax.f32 %v2279, %v2280
    %v2282 = vrot.slane %v2281, 2
    %v2283 = vmax.f32 %v2281, %v2282
    %v2284 = vrot.slane %v2283, 1
    %v2285 = vmax.f32 %v2283, %v2284
    %v2286 = vsel %vm2222, %v927, -inf
    %v2287 = vrot.slane %v2286, 4
    %v2288 = vmax.f32 %v2286, %v2287
    %v2289 = vrot.slane %v2288, 2
    %v2290 = vmax.f32 %v2288, %v2289
    %v2291 = vrot.slane %v2290, 1
    %v2292 = vmax.f32 %v2290, %v2291
    %v2293 = vsel %vm2222, %v926, -inf
    %v2294 = vrot.slane %v2293, 4
    %v2295 = vmax.f32 %v2293, %v2294
    %v2296 = vrot.slane %v2295, 2
    %v2297 = vmax.f32 %v2295, %v2296
    %v2298 = vrot.slane %v2297, 1
    %v2299 = vmax.f32 %v2297, %v2298
    %v2300 = vsel %vm2222, %v928, -inf
    %v2301 = vrot.slane %v2300, 4
    %v2302 = vmax.f32 %v2300, %v2301
    %v2303 = vrot.slane %v2302, 2
    %v2304 = vmax.f32 %v2302, %v2303
    %v2305 = vrot.slane %v2304, 1
    %v2306 = vmax.f32 %v2304, %v2305
    %v2307 = vsel %vm2222, %v936, -inf
    %v2308 = vrot.slane %v2307, 4
    %v2309 = vmax.f32 %v2307, %v2308
    %v2310 = vrot.slane %v2309, 2
    %v2311 = vmax.f32 %v2309, %v2310
    %v2312 = vrot.slane %v2311, 1
    %v2313 = vmax.f32 %v2311, %v2312
    %v2314 = vsel %vm2222, %v944, -inf
    %v2315 = vrot.slane %v2314, 4
    %v2316 = vmax.f32 %v2314, %v2315
    %v2317 = vrot.slane %v2316, 2
    %v2318 = vmax.f32 %v2316, %v2317
    %v2319 = vrot.slane %v2318, 1
    %v2320 = vmax.f32 %v2318, %v2319
    %v2321 = vsel %vm2222, %v943, -inf
    %v2322 = vrot.slane %v2321, 4
    %v2323 = vmax.f32 %v2321, %v2322
    %v2324 = vrot.slane %v2323, 2
    %v2325 = vmax.f32 %v2323, %v2324
    %v2326 = vrot.slane %v2325, 1
    %v2327 = vmax.f32 %v2325, %v2326
    %v2328 = vsel %vm2222, %v945, -inf
    %v2329 = vrot.slane %v2328, 4
    %v2330 = vmax.f32 %v2328, %v2329
    %v2331 = vrot.slane %v2330, 2
    %v2332 = vmax.f32 %v2330, %v2331
    %v2333 = vrot.slane %v2332, 1
    %v2334 = vmax.f32 %v2332, %v2333
    %v2335 = vsel %vm2222, %v953, -inf
    %v2336 = vrot.slane %v2335, 4
    %v2337 = vmax.f32 %v2335, %v2336
    %v2338 = vrot.slane %v2337, 2
    %v2339 = vmax.f32 %v2337, %v2338
    %v2340 = vrot.slane %v2339, 1
    %v2341 = vmax.f32 %v2339, %v2340
    %v2342 = vsel %vm2222, %v961, -inf
    %v2343 = vrot.slane %v2342, 4
    %v2344 = vmax.f32 %v2342, %v2343
    %v2345 = vrot.slane %v2344, 2
    %v2346 = vmax.f32 %v2344, %v2345
    %v2347 = vrot.slane %v2346, 1
    %v2348 = vmax.f32 %v2346, %v2347
    %v2349 = vsel %vm2222, %v960, -inf
    %v2350 = vrot.slane %v2349, 4
    %v2351 = vmax.f32 %v2349, %v2350
    %v2352 = vrot.slane %v2351, 2
    %v2353 = vmax.f32 %v2351, %v2352
    %v2354 = vrot.slane %v2353, 1
    %v2355 = vmax.f32 %v2353, %v2354
    %v2356 = vsel %vm2222, %v962, -inf
    %v2357 = vrot.slane %v2356, 4
    %v2358 = vmax.f32 %v2356, %v2357
    %v2359 = vrot.slane %v2358, 2
    %v2360 = vmax.f32 %v2358, %v2359
    %v2361 = vrot.slane %v2360, 1
    %v2362 = vmax.f32 %v2360, %v2361
    %v2363 = vsel %vm2222, %v970, -inf
    %v2364 = vrot.slane %v2363, 4
    %v2365 = vmax.f32 %v2363, %v2364
    %v2366 = vrot.slane %v2365, 2
    %v2367 = vmax.f32 %v2365, %v2366
    %v2368 = vrot.slane %v2367, 1
    %v2369 = vmax.f32 %v2367, %v2368
    %v2370 = vsel %vm2222, %v978, -inf
    %v2371 = vrot.slane %v2370, 4
    %v2372 = vmax.f32 %v2370, %v2371
    %v2373 = vrot.slane %v2372, 2
    %v2374 = vmax.f32 %v2372, %v2373
    %v2375 = vrot.slane %v2374, 1
    %v2376 = vmax.f32 %v2374, %v2375
    %v2377 = vsel %vm2222, %v977, -inf
    %v2378 = vrot.slane %v2377, 4
    %v2379 = vmax.f32 %v2377, %v2378
    %v2380 = vrot.slane %v2379, 2
    %v2381 = vmax.f32 %v2379, %v2380
    %v2382 = vrot.slane %v2381, 1
    %v2383 = vmax.f32 %v2381, %v2382
    %v2384 = vsel %vm2222, %v979, -inf
    %v2385 = vrot.slane %v2384, 4
    %v2386 = vmax.f32 %v2384, %v2385
    %v2387 = vrot.slane %v2386, 2
    %v2388 = vmax.f32 %v2386, %v2387
    %v2389 = vrot.slane %v2388, 1
    %v2390 = vmax.f32 %v2388, %v2389
    %v2391 = vsel %vm2222, %v987, -inf
    %v2392 = vrot.slane %v2391, 4
    %v2393 = vmax.f32 %v2391, %v2392
    %v2394 = vrot.slane %v2393, 2
    %v2395 = vmax.f32 %v2393, %v2394
    %v2396 = vrot.slane %v2395, 1
    %v2397 = vmax.f32 %v2395, %v2396
    %v2398 = vsel %vm2222, %v995, -inf
    %v2399 = vrot.slane %v2398, 4
    %v2400 = vmax.f32 %v2398, %v2399
    %v2401 = vrot.slane %v2400, 2
    %v2402 = vmax.f32 %v2400, %v2401
    %v2403 = vrot.slane %v2402, 1
    %v2404 = vmax.f32 %v2402, %v2403
    %v2405 = vsel %vm2222, %v994, -inf
    %v2406 = vrot.slane %v2405, 4
    %v2407 = vmax.f32 %v2405, %v2406
    %v2408 = vrot.slane %v2407, 2
    %v2409 = vmax.f32 %v2407, %v2408
    %v2410 = vrot.slane %v2409, 1
    %v2411 = vmax.f32 %v2409, %v2410
    %v2412 = vsel %vm2222, %v996, -inf
    %v2413 = vrot.slane %v2412, 4
    %v2414 = vmax.f32 %v2412, %v2413
    %v2415 = vrot.slane %v2414, 2
    %v2416 = vmax.f32 %v2414, %v2415
    %v2417 = vrot.slane %v2416, 1
    %v2418 = vmax.f32 %v2416, %v2417
    %v2419 = vsel %vm2222, %v1004, -inf
    %v2420 = vrot.slane %v2419, 4
    %v2421 = vmax.f32 %v2419, %v2420
    %v2422 = vrot.slane %v2421, 2
    %v2423 = vmax.f32 %v2421, %v2422
    %v2424 = vrot.slane %v2423, 1
    %v2425 = vmax.f32 %v2423, %v2424
    %v2426 = vsel %vm2222, %v1012, -inf
    %v2427 = vrot.slane %v2426, 4
    %v2428 = vmax.f32 %v2426, %v2427
    %v2429 = vrot.slane %v2428, 2
    %v2430 = vmax.f32 %v2428, %v2429
    %v2431 = vrot.slane %v2430, 1
    %v2432 = vmax.f32 %v2430, %v2431
    %v2433 = vsel %vm2222, %v1011, -inf
    %v2434 = vrot.slane %v2433, 4
    %v2435 = vmax.f32 %v2433, %v2434
    %v2436 = vrot.slane %v2435, 2
    %v2437 = vmax.f32 %v2435, %v2436
    %v2438 = vrot.slane %v2437, 1
    %v2439 = vmax.f32 %v2437, %v2438
    %v2440 = vsel %vm2222, %v1013, -inf
    %v2441 = vrot.slane %v2440, 4
    %v2442 = vmax.f32 %v2440, %v2441
    %v2443 = vrot.slane %v2442, 2
    %v2444 = vmax.f32 %v2442, %v2443
    %v2445 = vrot.slane %v2444, 1
    %v2446 = vmax.f32 %v2444, %v2445
    %v2447 = vsel %vm2222, %v1021, -inf
    %v2448 = vrot.slane %v2447, 4
    %v2449 = vmax.f32 %v2447, %v2448
    %v2450 = vrot.slane %v2449, 2
    %v2451 = vmax.f32 %v2449, %v2450
    %v2452 = vrot.slane %v2451, 1
    %v2453 = vmax.f32 %v2451, %v2452
    %v2454 = vsel %vm2222, %v1029, -inf
    %v2455 = vrot.slane %v2454, 4
    %v2456 = vmax.f32 %v2454, %v2455
    %v2457 = vrot.slane %v2456, 2
    %v2458 = vmax.f32 %v2456, %v2457
    %v2459 = vrot.slane %v2458, 1
    %v2460 = vmax.f32 %v2458, %v2459
    %v2461 = vsel %vm2222, %v1028, -inf
    %v2462 = vrot.slane %v2461, 4
    %v2463 = vmax.f32 %v2461, %v2462
    %v2464 = vrot.slane %v2463, 2
    %v2465 = vmax.f32 %v2463, %v2464
    %v2466 = vrot.slane %v2465, 1
    %v2467 = vmax.f32 %v2465, %v2466
    %v2468 = vsel %vm2222, %v1030, -inf
    %v2469 = vrot.slane %v2468, 4
    %v2470 = vmax.f32 %v2468, %v2469
    %v2471 = vrot.slane %v2470, 2
    %v2472 = vmax.f32 %v2470, %v2471
    %v2473 = vrot.slane %v2472, 1
    %v2474 = vmax.f32 %v2472, %v2473
    %v2475 = vsel %vm2222, %v1038, -inf
    %v2476 = vrot.slane %v2475, 4
    %v2477 = vmax.f32 %v2475, %v2476
    %v2478 = vrot.slane %v2477, 2
    %v2479 = vmax.f32 %v2477, %v2478
    %v2480 = vrot.slane %v2479, 1
    %v2481 = vmax.f32 %v2479, %v2480
    %v2482 = vsel %vm2222, %v1046, -inf
    %v2483 = vrot.slane %v2482, 4
    %v2484 = vmax.f32 %v2482, %v2483
    %v2485 = vrot.slane %v2484, 2
    %v2486 = vmax.f32 %v2484, %v2485
    %v2487 = vrot.slane %v2486, 1
    %v2488 = vmax.f32 %v2486, %v2487
    %v2489 = vsel %vm2222, %v1045, -inf
    %v2490 = vrot.slane %v2489, 4
    %v2491 = vmax.f32 %v2489, %v2490
    %v2492 = vrot.slane %v2491, 2
    %v2493 = vmax.f32 %v2491, %v2492
    %v2494 = vrot.slane %v2493, 1
    %v2495 = vmax.f32 %v2493, %v2494
    %v2496 = vsel %vm2222, %v1047, -inf
    %v2497 = vrot.slane %v2496, 4
    %v2498 = vmax.f32 %v2496, %v2497
    %v2499 = vrot.slane %v2498, 2
    %v2500 = vmax.f32 %v2498, %v2499
    %v2501 = vrot.slane %v2500, 1
    %v2502 = vmax.f32 %v2500, %v2501
    %v2503 = vsel %vm2222, %v1055, -inf
    %v2504 = vrot.slane %v2503, 4
    %v2505 = vmax.f32 %v2503, %v2504
    %v2506 = vrot.slane %v2505, 2
    %v2507 = vmax.f32 %v2505, %v2506
    %v2508 = vrot.slane %v2507, 1
    %v2509 = vmax.f32 %v2507, %v2508
    %v2510 = vsel %vm2222, %v1063, -inf
    %v2511 = vrot.slane %v2510, 4
    %v2512 = vmax.f32 %v2510, %v2511
    %v2513 = vrot.slane %v2512, 2
    %v2514 = vmax.f32 %v2512, %v2513
    %v2515 = vrot.slane %v2514, 1
    %v2516 = vmax.f32 %v2514, %v2515
    %v2517 = vsel %vm2222, %v1062, -inf
    %v2518 = vrot.slane %v2517, 4
    %v2519 = vmax.f32 %v2517, %v2518
    %v2520 = vrot.slane %v2519, 2
    %v2521 = vmax.f32 %v2519, %v2520
    %v2522 = vrot.slane %v2521, 1
    %v2523 = vmax.f32 %v2521, %v2522
    %v2524 = vsel %vm2222, %v1064, -inf
    %v2525 = vrot.slane %v2524, 4
    %v2526 = vmax.f32 %v2524, %v2525
    %v2527 = vrot.slane %v2526, 2
    %v2528 = vmax.f32 %v2526, %v2527
    %v2529 = vrot.slane %v2528, 1
    %v2530 = vmax.f32 %v2528, %v2529
    %v2531 = vsel %vm2222, %v1072, -inf
    %v2532 = vrot.slane %v2531, 4
    %v2533 = vmax.f32 %v2531, %v2532
    %v2534 = vrot.slane %v2533, 2
    %v2535 = vmax.f32 %v2533, %v2534
    %v2536 = vrot.slane %v2535, 1
    %v2537 = vmax.f32 %v2535, %v2536
    %v2538 = vsel %vm2222, %v1080, -inf
    %v2539 = vrot.slane %v2538, 4
    %v2540 = vmax.f32 %v2538, %v2539
    %v2541 = vrot.slane %v2540, 2
    %v2542 = vmax.f32 %v2540, %v2541
    %v2543 = vrot.slane %v2542, 1
    %v2544 = vmax.f32 %v2542, %v2543
    %v2545 = vsel %vm2222, %v1079, -inf
    %v2546 = vrot.slane %v2545, 4
    %v2547 = vmax.f32 %v2545, %v2546
    %v2548 = vrot.slane %v2547, 2
    %v2549 = vmax.f32 %v2547, %v2548
    %v2550 = vrot.slane %v2549, 1
    %v2551 = vmax.f32 %v2549, %v2550
    %v2552 = vsel %vm2222, %v1081, -inf
    %v2553 = vrot.slane %v2552, 4
    %v2554 = vmax.f32 %v2552, %v2553
    %v2555 = vrot.slane %v2554, 2
    %v2556 = vmax.f32 %v2554, %v2555
    %v2557 = vrot.slane %v2556, 1
    %v2558 = vmax.f32 %v2556, %v2557
    %v2559 = vsel %vm2222, %v1089, -inf
    %v2560 = vrot.slane %v2559, 4
    %v2561 = vmax.f32 %v2559, %v2560
    %v2562 = vrot.slane %v2561, 2
    %v2563 = vmax.f32 %v2561, %v2562
    %v2564 = vrot.slane %v2563, 1
    %v2565 = vmax.f32 %v2563, %v2564
    %v2566 = vsel %vm2222, %v1097, -inf
    %v2567 = vrot.slane %v2566, 4
    %v2568 = vmax.f32 %v2566, %v2567
    %v2569 = vrot.slane %v2568, 2
    %v2570 = vmax.f32 %v2568, %v2569
    %v2571 = vrot.slane %v2570, 1
    %v2572 = vmax.f32 %v2570, %v2571
    %v2573 = vsel %vm2222, %v1096, -inf
    %v2574 = vrot.slane %v2573, 4
    %v2575 = vmax.f32 %v2573, %v2574
    %v2576 = vrot.slane %v2575, 2
    %v2577 = vmax.f32 %v2575, %v2576
    %v2578 = vrot.slane %v2577, 1
    %v2579 = vmax.f32 %v2577, %v2578
    %v2580 = vsel %vm2222, %v1098, -inf
    %v2581 = vrot.slane %v2580, 4
    %v2582 = vmax.f32 %v2580, %v2581
    %v2583 = vrot.slane %v2582, 2
    %v2584 = vmax.f32 %v2582, %v2583
    %v2585 = vrot.slane %v2584, 1
    %v2586 = vmax.f32 %v2584, %v2585
    %v2587 = vsel %vm2222, %v1106, -inf
    %v2588 = vrot.slane %v2587, 4
    %v2589 = vmax.f32 %v2587, %v2588
    %v2590 = vrot.slane %v2589, 2
    %v2591 = vmax.f32 %v2589, %v2590
    %v2592 = vrot.slane %v2591, 1
    %v2593 = vmax.f32 %v2591, %v2592
    %v2594 = vsel %vm2222, %v1114, -inf
    %v2595 = vrot.slane %v2594, 4
    %v2596 = vmax.f32 %v2594, %v2595
    %v2597 = vrot.slane %v2596, 2
    %v2598 = vmax.f32 %v2596, %v2597
    %v2599 = vrot.slane %v2598, 1
    %v2600 = vmax.f32 %v2598, %v2599
    %v2601 = vsel %vm2222, %v1113, -inf
    %v2602 = vrot.slane %v2601, 4
    %v2603 = vmax.f32 %v2601, %v2602
    %v2604 = vrot.slane %v2603, 2
    %v2605 = vmax.f32 %v2603, %v2604
    %v2606 = vrot.slane %v2605, 1
    %v2607 = vmax.f32 %v2605, %v2606
    %v2608 = vsel %vm2222, %v1115, -inf
    %v2609 = vrot.slane %v2608, 4
    %v2610 = vmax.f32 %v2608, %v2609
    %v2611 = vrot.slane %v2610, 2
    %v2612 = vmax.f32 %v2610, %v2611
    %v2613 = vrot.slane %v2612, 1
    %v2614 = vmax.f32 %v2612, %v2613
    %v2615 = vsel %vm2222, %v1123, -inf
    %v2616 = vrot.slane %v2615, 4
    %v2617 = vmax.f32 %v2615, %v2616
    %v2618 = vrot.slane %v2617, 2
    %v2619 = vmax.f32 %v2617, %v2618
    %v2620 = vrot.slane %v2619, 1
    %v2621 = vmax.f32 %v2619, %v2620
    %v2622 = vsel %vm2222, %v1131, -inf
    %v2623 = vrot.slane %v2622, 4
    %v2624 = vmax.f32 %v2622, %v2623
    %v2625 = vrot.slane %v2624, 2
    %v2626 = vmax.f32 %v2624, %v2625
    %v2627 = vrot.slane %v2626, 1
    %v2628 = vmax.f32 %v2626, %v2627
    %v2629 = vsel %vm2222, %v1130, -inf
    %v2630 = vrot.slane %v2629, 4
    %v2631 = vmax.f32 %v2629, %v2630
    %v2632 = vrot.slane %v2631, 2
    %v2633 = vmax.f32 %v2631, %v2632
    %v2634 = vrot.slane %v2633, 1
    %v2635 = vmax.f32 %v2633, %v2634
    %v2636 = vsel %vm2222, %v1132, -inf
    %v2637 = vrot.slane %v2636, 4
    %v2638 = vmax.f32 %v2636, %v2637
    %v2639 = vrot.slane %v2638, 2
    %v2640 = vmax.f32 %v2638, %v2639
    %v2641 = vrot.slane %v2640, 1
    %v2642 = vmax.f32 %v2640, %v2641
    %v2643 = vsel %vm2222, %v1140, -inf
    %v2644 = vrot.slane %v2643, 4
    %v2645 = vmax.f32 %v2643, %v2644
    %v2646 = vrot.slane %v2645, 2
    %v2647 = vmax.f32 %v2645, %v2646
    %v2648 = vrot.slane %v2647, 1
    %v2649 = vmax.f32 %v2647, %v2648
    %v2650 = vsel %vm2222, %v1148, -inf
    %v2651 = vrot.slane %v2650, 4
    %v2652 = vmax.f32 %v2650, %v2651
    %v2653 = vrot.slane %v2652, 2
    %v2654 = vmax.f32 %v2652, %v2653
    %v2655 = vrot.slane %v2654, 1
    %v2656 = vmax.f32 %v2654, %v2655
    %v2657 = vsel %vm2222, %v1147, -inf
    %v2658 = vrot.slane %v2657, 4
    %v2659 = vmax.f32 %v2657, %v2658
    %v2660 = vrot.slane %v2659, 2
    %v2661 = vmax.f32 %v2659, %v2660
    %v2662 = vrot.slane %v2661, 1
    %v2663 = vmax.f32 %v2661, %v2662
    %v2664 = vsel %vm2222, %v1149, -inf
    %v2665 = vrot.slane %v2664, 4
    %v2666 = vmax.f32 %v2664, %v2665
    %v2667 = vrot.slane %v2666, 2
    %v2668 = vmax.f32 %v2666, %v2667
    %v2669 = vrot.slane %v2668, 1
    %v2670 = vmax.f32 %v2668, %v2669
    %v2671 = vsel %vm2222, %v1157, -inf
    %v2672 = vrot.slane %v2671, 4
    %v2673 = vmax.f32 %v2671, %v2672
    %v2674 = vrot.slane %v2673, 2
    %v2675 = vmax.f32 %v2673, %v2674
    %v2676 = vrot.slane %v2675, 1
    %v2677 = vmax.f32 %v2675, %v2676
    %v2678 = vsel %vm2222, %v1165, -inf
    %v2679 = vrot.slane %v2678, 4
    %v2680 = vmax.f32 %v2678, %v2679
    %v2681 = vrot.slane %v2680, 2
    %v2682 = vmax.f32 %v2680, %v2681
    %v2683 = vrot.slane %v2682, 1
    %v2684 = vmax.f32 %v2682, %v2683
    %v2685 = vsel %vm2222, %v1164, -inf
    %v2686 = vrot.slane %v2685, 4
    %v2687 = vmax.f32 %v2685, %v2686
    %v2688 = vrot.slane %v2687, 2
    %v2689 = vmax.f32 %v2687, %v2688
    %v2690 = vrot.slane %v2689, 1
    %v2691 = vmax.f32 %v2689, %v2690
    %v2692 = vsel %vm2222, %v1166, -inf
    %v2693 = vrot.slane %v2692, 4
    %v2694 = vmax.f32 %v2692, %v2693
    %v2695 = vrot.slane %v2694, 2
    %v2696 = vmax.f32 %v2694, %v2695
    %v2697 = vrot.slane %v2696, 1
    %v2698 = vmax.f32 %v2696, %v2697
    %v2699 = vsel %vm2222, %v1174, -inf
    %v2700 = vrot.slane %v2699, 4
    %v2701 = vmax.f32 %v2699, %v2700
    %v2702 = vrot.slane %v2701, 2
    %v2703 = vmax.f32 %v2701, %v2702
    %v2704 = vrot.slane %v2703, 1
    %v2705 = vmax.f32 %v2703, %v2704
    %v2706 = vsel %vm2222, %v1182, -inf
    %v2707 = vrot.slane %v2706, 4
    %v2708 = vmax.f32 %v2706, %v2707
    %v2709 = vrot.slane %v2708, 2
    %v2710 = vmax.f32 %v2708, %v2709
    %v2711 = vrot.slane %v2710, 1
    %v2712 = vmax.f32 %v2710, %v2711
    %v2713 = vsel %vm2222, %v1181, -inf
    %v2714 = vrot.slane %v2713, 4
    %v2715 = vmax.f32 %v2713, %v2714
    %v2716 = vrot.slane %v2715, 2
    %v2717 = vmax.f32 %v2715, %v2716
    %v2718 = vrot.slane %v2717, 1
    %v2719 = vmax.f32 %v2717, %v2718
    %v2720 = vsel %vm2222, %v1183, -inf
    %v2721 = vrot.slane %v2720, 4
    %v2722 = vmax.f32 %v2720, %v2721
    %v2723 = vrot.slane %v2722, 2
    %v2724 = vmax.f32 %v2722, %v2723
    %v2725 = vrot.slane %v2724, 1
    %v2726 = vmax.f32 %v2724, %v2725
    %v2727 = vsel %vm2222, %v1191, -inf
    %v2728 = vrot.slane %v2727, 4
    %v2729 = vmax.f32 %v2727, %v2728
    %v2730 = vrot.slane %v2729, 2
    %v2731 = vmax.f32 %v2729, %v2730
    %v2732 = vrot.slane %v2731, 1
    %v2733 = vmax.f32 %v2731, %v2732
    %v2734 = vsel %vm2222, %v1199, -inf
    %v2735 = vrot.slane %v2734, 4
    %v2736 = vmax.f32 %v2734, %v2735
    %v2737 = vrot.slane %v2736, 2
    %v2738 = vmax.f32 %v2736, %v2737
    %v2739 = vrot.slane %v2738, 1
    %v2740 = vmax.f32 %v2738, %v2739
    %v2741 = vsel %vm2222, %v1198, -inf
    %v2742 = vrot.slane %v2741, 4
    %v2743 = vmax.f32 %v2741, %v2742
    %v2744 = vrot.slane %v2743, 2
    %v2745 = vmax.f32 %v2743, %v2744
    %v2746 = vrot.slane %v2745, 1
    %v2747 = vmax.f32 %v2745, %v2746
    %v2748 = vsel %vm2222, %v1200, -inf
    %v2749 = vrot.slane %v2748, 4
    %v2750 = vmax.f32 %v2748, %v2749
    %v2751 = vrot.slane %v2750, 2
    %v2752 = vmax.f32 %v2750, %v2751
    %v2753 = vrot.slane %v2752, 1
    %v2754 = vmax.f32 %v2752, %v2753
    %v2755 = vsel %vm2222, %v1208, -inf
    %v2756 = vrot.slane %v2755, 4
    %v2757 = vmax.f32 %v2755, %v2756
    %v2758 = vrot.slane %v2757, 2
    %v2759 = vmax.f32 %v2757, %v2758
    %v2760 = vrot.slane %v2759, 1
    %v2761 = vmax.f32 %v2759, %v2760
    %v2762 = vsel %vm2222, %v1216, -inf
    %v2763 = vrot.slane %v2762, 4
    %v2764 = vmax.f32 %v2762, %v2763
    %v2765 = vrot.slane %v2764, 2
    %v2766 = vmax.f32 %v2764, %v2765
    %v2767 = vrot.slane %v2766, 1
    %v2768 = vmax.f32 %v2766, %v2767
    %v2769 = vsel %vm2222, %v1215, -inf
    %v2770 = vrot.slane %v2769, 4
    %v2771 = vmax.f32 %v2769, %v2770
    %v2772 = vrot.slane %v2771, 2
    %v2773 = vmax.f32 %v2771, %v2772
    %v2774 = vrot.slane %v2773, 1
    %v2775 = vmax.f32 %v2773, %v2774
    %v2776 = vsel %vm2222, %v1217, -inf
    %v2777 = vrot.slane %v2776, 4
    %v2778 = vmax.f32 %v2776, %v2777
    %v2779 = vrot.slane %v2778, 2
    %v2780 = vmax.f32 %v2778, %v2779
    %v2781 = vrot.slane %v2780, 1
    %v2782 = vmax.f32 %v2780, %v2781
    %v2783 = vsel %vm2222, %v1225, -inf
    %v2784 = vrot.slane %v2783, 4
    %v2785 = vmax.f32 %v2783, %v2784
    %v2786 = vrot.slane %v2785, 2
    %v2787 = vmax.f32 %v2785, %v2786
    %v2788 = vrot.slane %v2787, 1
    %v2789 = vmax.f32 %v2787, %v2788
    %v2790 = vsel %vm2222, %v1233, -inf
    %v2791 = vrot.slane %v2790, 4
    %v2792 = vmax.f32 %v2790, %v2791
    %v2793 = vrot.slane %v2792, 2
    %v2794 = vmax.f32 %v2792, %v2793
    %v2795 = vrot.slane %v2794, 1
    %v2796 = vmax.f32 %v2794, %v2795
    %v2797 = vsel %vm2222, %v1232, -inf
    %v2798 = vrot.slane %v2797, 4
    %v2799 = vmax.f32 %v2797, %v2798
    %v2800 = vrot.slane %v2799, 2
    %v2801 = vmax.f32 %v2799, %v2800
    %v2802 = vrot.slane %v2801, 1
    %v2803 = vmax.f32 %v2801, %v2802
    %v2804 = vsel %vm2222, %v1234, -inf
    %v2805 = vrot.slane %v2804, 4
    %v2806 = vmax.f32 %v2804, %v2805
    %v2807 = vrot.slane %v2806, 2
    %v2808 = vmax.f32 %v2806, %v2807
    %v2809 = vrot.slane %v2808, 1
    %v2810 = vmax.f32 %v2808, %v2809
    %v2811 = vsel %vm2222, %v1242, -inf
    %v2812 = vrot.slane %v2811, 4
    %v2813 = vmax.f32 %v2811, %v2812
    %v2814 = vrot.slane %v2813, 2
    %v2815 = vmax.f32 %v2813, %v2814
    %v2816 = vrot.slane %v2815, 1
    %v2817 = vmax.f32 %v2815, %v2816
    %v2818 = vsel %vm2222, %v1250, -inf
    %v2819 = vrot.slane %v2818, 4
    %v2820 = vmax.f32 %v2818, %v2819
    %v2821 = vrot.slane %v2820, 2
    %v2822 = vmax.f32 %v2820, %v2821
    %v2823 = vrot.slane %v2822, 1
    %v2824 = vmax.f32 %v2822, %v2823
    %v2825 = vsel %vm2222, %v1249, -inf
    %v2826 = vrot.slane %v2825, 4
    %v2827 = vmax.f32 %v2825, %v2826
    %v2828 = vrot.slane %v2827, 2
    %v2829 = vmax.f32 %v2827, %v2828
    %v2830 = vrot.slane %v2829, 1
    %v2831 = vmax.f32 %v2829, %v2830
    %v2832 = vsel %vm2222, %v1251, -inf
    %v2833 = vrot.slane %v2832, 4
    %v2834 = vmax.f32 %v2832, %v2833
    %v2835 = vrot.slane %v2834, 2
    %v2836 = vmax.f32 %v2834, %v2835
    %v2837 = vrot.slane %v2836, 1
    %v2838 = vmax.f32 %v2836, %v2837
    %v2839 = vsel %vm2222, %v1259, -inf
    %v2840 = vrot.slane %v2839, 4
    %v2841 = vmax.f32 %v2839, %v2840
    %v2842 = vrot.slane %v2841, 2
    %v2843 = vmax.f32 %v2841, %v2842
    %v2844 = vrot.slane %v2843, 1
    %v2845 = vmax.f32 %v2843, %v2844
    %v2846 = vsel %vm2222, %v1267, -inf
    %v2847 = vrot.slane %v2846, 4
    %v2848 = vmax.f32 %v2846, %v2847
    %v2849 = vrot.slane %v2848, 2
    %v2850 = vmax.f32 %v2848, %v2849
    %v2851 = vrot.slane %v2850, 1
    %v2852 = vmax.f32 %v2850, %v2851
    %v2853 = vsel %vm2222, %v1266, -inf
    %v2854 = vrot.slane %v2853, 4
    %v2855 = vmax.f32 %v2853, %v2854
    %v2856 = vrot.slane %v2855, 2
    %v2857 = vmax.f32 %v2855, %v2856
    %v2858 = vrot.slane %v2857, 1
    %v2859 = vmax.f32 %v2857, %v2858
    %v2860 = vsel %vm2222, %v1268, -inf
    %v2861 = vrot.slane %v2860, 4
    %v2862 = vmax.f32 %v2860, %v2861
    %v2863 = vrot.slane %v2862, 2
    %v2864 = vmax.f32 %v2862, %v2863
    %v2865 = vrot.slane %v2864, 1
    %v2866 = vmax.f32 %v2864, %v2865
    %v2867 = vsel %vm2222, %v1276, -inf
    %v2868 = vrot.slane %v2867, 4
    %v2869 = vmax.f32 %v2867, %v2868
    %v2870 = vrot.slane %v2869, 2
    %v2871 = vmax.f32 %v2869, %v2870
    %v2872 = vrot.slane %v2871, 1
    %v2873 = vmax.f32 %v2871, %v2872
    %v2874 = vsel %vm2222, %v1284, -inf
    %v2875 = vrot.slane %v2874, 4
    %v2876 = vmax.f32 %v2874, %v2875
    %v2877 = vrot.slane %v2876, 2
    %v2878 = vmax.f32 %v2876, %v2877
    %v2879 = vrot.slane %v2878, 1
    %v2880 = vmax.f32 %v2878, %v2879
    %v2881 = vsel %vm2222, %v1283, -inf
    %v2882 = vrot.slane %v2881, 4
    %v2883 = vmax.f32 %v2881, %v2882
    %v2884 = vrot.slane %v2883, 2
    %v2885 = vmax.f32 %v2883, %v2884
    %v2886 = vrot.slane %v2885, 1
    %v2887 = vmax.f32 %v2885, %v2886
    %v2888 = vsel %vm2222, %v1285, -inf
    %v2889 = vrot.slane %v2888, 4
    %v2890 = vmax.f32 %v2888, %v2889
    %v2891 = vrot.slane %v2890, 2
    %v2892 = vmax.f32 %v2890, %v2891
    %v2893 = vrot.slane %v2892, 1
    %v2894 = vmax.f32 %v2892, %v2893
    %v2895 = vsel %vm2222, %v1293, -inf
    %v2896 = vrot.slane %v2895, 4
    %v2897 = vmax.f32 %v2895, %v2896
    %v2898 = vrot.slane %v2897, 2
    %v2899 = vmax.f32 %v2897, %v2898
    %v2900 = vrot.slane %v2899, 1
    %v2901 = vmax.f32 %v2899, %v2900
    %v2902 = vsel %vm2222, %v1301, -inf
    %v2903 = vrot.slane %v2902, 4
    %v2904 = vmax.f32 %v2902, %v2903
    %v2905 = vrot.slane %v2904, 2
    %v2906 = vmax.f32 %v2904, %v2905
    %v2907 = vrot.slane %v2906, 1
    %v2908 = vmax.f32 %v2906, %v2907
    %v2909 = vsel %vm2222, %v1300, -inf
    %v2910 = vrot.slane %v2909, 4
    %v2911 = vmax.f32 %v2909, %v2910
    %v2912 = vrot.slane %v2911, 2
    %v2913 = vmax.f32 %v2911, %v2912
    %v2914 = vrot.slane %v2913, 1
    %v2915 = vmax.f32 %v2913, %v2914
    %v2916 = vsel %vm2222, %v1302, -inf
    %v2917 = vrot.slane %v2916, 4
    %v2918 = vmax.f32 %v2916, %v2917
    %v2919 = vrot.slane %v2918, 2
    %v2920 = vmax.f32 %v2918, %v2919
    %v2921 = vrot.slane %v2920, 1
    %v2922 = vmax.f32 %v2920, %v2921
    %v2923 = vsel %vm2222, %v1310, -inf
    %v2924 = vrot.slane %v2923, 4
    %v2925 = vmax.f32 %v2923, %v2924
    %v2926 = vrot.slane %v2925, 2
    %v2927 = vmax.f32 %v2925, %v2926
    %v2928 = vrot.slane %v2927, 1
    %v2929 = vmax.f32 %v2927, %v2928
    %v2930 = vsel %vm2222, %v1318, -inf
    %v2931 = vrot.slane %v2930, 4
    %v2932 = vmax.f32 %v2930, %v2931
    %v2933 = vrot.slane %v2932, 2
    %v2934 = vmax.f32 %v2932, %v2933
    %v2935 = vrot.slane %v2934, 1
    %v2936 = vmax.f32 %v2934, %v2935
    %v2937 = vsel %vm2222, %v1317, -inf
    %v2938 = vrot.slane %v2937, 4
    %v2939 = vmax.f32 %v2937, %v2938
    %v2940 = vrot.slane %v2939, 2
    %v2941 = vmax.f32 %v2939, %v2940
    %v2942 = vrot.slane %v2941, 1
    %v2943 = vmax.f32 %v2941, %v2942
    %v2944 = vsel %vm2222, %v1319, -inf
    %v2945 = vrot.slane %v2944, 4
    %v2946 = vmax.f32 %v2944, %v2945
    %v2947 = vrot.slane %v2946, 2
    %v2948 = vmax.f32 %v2946, %v2947
    %v2949 = vrot.slane %v2948, 1
    %v2950 = vmax.f32 %v2948, %v2949
    %v2951 = vsel %vm2222, %v1327, -inf
    %v2952 = vrot.slane %v2951, 4
    %v2953 = vmax.f32 %v2951, %v2952
    %v2954 = vrot.slane %v2953, 2
    %v2955 = vmax.f32 %v2953, %v2954
    %v2956 = vrot.slane %v2955, 1
    %v2957 = vmax.f32 %v2955, %v2956
    %v2958 = vsel %vm2222, %v1335, -inf
    %v2959 = vrot.slane %v2958, 4
    %v2960 = vmax.f32 %v2958, %v2959
    %v2961 = vrot.slane %v2960, 2
    %v2962 = vmax.f32 %v2960, %v2961
    %v2963 = vrot.slane %v2962, 1
    %v2964 = vmax.f32 %v2962, %v2963
    %v2965 = vsel %vm2222, %v1334, -inf
    %v2966 = vrot.slane %v2965, 4
    %v2967 = vmax.f32 %v2965, %v2966
    %v2968 = vrot.slane %v2967, 2
    %v2969 = vmax.f32 %v2967, %v2968
    %v2970 = vrot.slane %v2969, 1
    %v2971 = vmax.f32 %v2969, %v2970
    %v2972 = vsel %vm2222, %v1336, -inf
    %v2973 = vrot.slane %v2972, 4
    %v2974 = vmax.f32 %v2972, %v2973
    %v2975 = vrot.slane %v2974, 2
    %v2976 = vmax.f32 %v2974, %v2975
    %v2977 = vrot.slane %v2976, 1
    %v2978 = vmax.f32 %v2976, %v2977
    %v2979 = vsel %vm2222, %v1344, -inf
    %v2980 = vrot.slane %v2979, 4
    %v2981 = vmax.f32 %v2979, %v2980
    %v2982 = vrot.slane %v2981, 2
    %v2983 = vmax.f32 %v2981, %v2982
    %v2984 = vrot.slane %v2983, 1
    %v2985 = vmax.f32 %v2983, %v2984
    %v2986 = vsel %vm2222, %v1352, -inf
    %v2987 = vrot.slane %v2986, 4
    %v2988 = vmax.f32 %v2986, %v2987
    %v2989 = vrot.slane %v2988, 2
    %v2990 = vmax.f32 %v2988, %v2989
    %v2991 = vrot.slane %v2990, 1
    %v2992 = vmax.f32 %v2990, %v2991
    %v2993 = vsel %vm2222, %v1351, -inf
    %v2994 = vrot.slane %v2993, 4
    %v2995 = vmax.f32 %v2993, %v2994
    %v2996 = vrot.slane %v2995, 2
    %v2997 = vmax.f32 %v2995, %v2996
    %v2998 = vrot.slane %v2997, 1
    %v2999 = vmax.f32 %v2997, %v2998
    %v3000 = vsel %vm2222, %v1353, -inf
    %v3001 = vrot.slane %v3000, 4
    %v3002 = vmax.f32 %v3000, %v3001
    %v3003 = vrot.slane %v3002, 2
    %v3004 = vmax.f32 %v3002, %v3003
    %v3005 = vrot.slane %v3004, 1
    %v3006 = vmax.f32 %v3004, %v3005
    %v3007 = vsel %vm2222, %v1361, -inf
    %v3008 = vrot.slane %v3007, 4
    %v3009 = vmax.f32 %v3007, %v3008
    %v3010 = vrot.slane %v3009, 2
    %v3011 = vmax.f32 %v3009, %v3010
    %v3012 = vrot.slane %v3011, 1
    %v3013 = vmax.f32 %v3011, %v3012
    %v3014 = vsel %vm2222, %v1369, -inf
    %v3015 = vrot.slane %v3014, 4
    %v3016 = vmax.f32 %v3014, %v3015
    %v3017 = vrot.slane %v3016, 2
    %v3018 = vmax.f32 %v3016, %v3017
    %v3019 = vrot.slane %v3018, 1
    %v3020 = vmax.f32 %v3018, %v3019
    %v3021 = vsel %vm2222, %v1368, -inf
    %v3022 = vrot.slane %v3021, 4
    %v3023 = vmax.f32 %v3021, %v3022
    %v3024 = vrot.slane %v3023, 2
    %v3025 = vmax.f32 %v3023, %v3024
    %v3026 = vrot.slane %v3025, 1
    %v3027 = vmax.f32 %v3025, %v3026
    %v3028 = vsel %vm2222, %v1370, -inf
    %v3029 = vrot.slane %v3028, 4
    %v3030 = vmax.f32 %v3028, %v3029
    %v3031 = vrot.slane %v3030, 2
    %v3032 = vmax.f32 %v3030, %v3031
    %v3033 = vrot.slane %v3032, 1
    %v3034 = vmax.f32 %v3032, %v3033
    %v3035 = vsel %vm2222, %v1378, -inf
    %v3036 = vrot.slane %v3035, 4
    %v3037 = vmax.f32 %v3035, %v3036
    %v3038 = vrot.slane %v3037, 2
    %v3039 = vmax.f32 %v3037, %v3038
    %v3040 = vrot.slane %v3039, 1
    %v3041 = vmax.f32 %v3039, %v3040
    %v3042 = vsel %vm2222, %v1386, -inf
    %v3043 = vrot.slane %v3042, 4
    %v3044 = vmax.f32 %v3042, %v3043
    %v3045 = vrot.slane %v3044, 2
    %v3046 = vmax.f32 %v3044, %v3045
    %v3047 = vrot.slane %v3046, 1
    %v3048 = vmax.f32 %v3046, %v3047
    %v3049 = vsel %vm2222, %v1385, -inf
    %v3050 = vrot.slane %v3049, 4
    %v3051 = vmax.f32 %v3049, %v3050
    %v3052 = vrot.slane %v3051, 2
    %v3053 = vmax.f32 %v3051, %v3052
    %v3054 = vrot.slane %v3053, 1
    %v3055 = vmax.f32 %v3053, %v3054
    %v3056 = vsel %vm2222, %v1387, -inf
    %v3057 = vrot.slane %v3056, 4
    %v3058 = vmax.f32 %v3056, %v3057
    %v3059 = vrot.slane %v3058, 2
    %v3060 = vmax.f32 %v3058, %v3059
    %v3061 = vrot.slane %v3060, 1
    %v3062 = vmax.f32 %v3060, %v3061
    %v3063 = vsel %vm2222, %v1395, -inf
    %v3064 = vrot.slane %v3063, 4
    %v3065 = vmax.f32 %v3063, %v3064
    %v3066 = vrot.slane %v3065, 2
    %v3067 = vmax.f32 %v3065, %v3066
    %v3068 = vrot.slane %v3067, 1
    %v3069 = vmax.f32 %v3067, %v3068
    %v3070 = vsel %vm2222, %v1403, -inf
    %v3071 = vrot.slane %v3070, 4
    %v3072 = vmax.f32 %v3070, %v3071
    %v3073 = vrot.slane %v3072, 2
    %v3074 = vmax.f32 %v3072, %v3073
    %v3075 = vrot.slane %v3074, 1
    %v3076 = vmax.f32 %v3074, %v3075
    %v3077 = vsel %vm2222, %v1402, -inf
    %v3078 = vrot.slane %v3077, 4
    %v3079 = vmax.f32 %v3077, %v3078
    %v3080 = vrot.slane %v3079, 2
    %v3081 = vmax.f32 %v3079, %v3080
    %v3082 = vrot.slane %v3081, 1
    %v3083 = vmax.f32 %v3081, %v3082
    %v3084 = vsel %vm2222, %v1404, -inf
    %v3085 = vrot.slane %v3084, 4
    %v3086 = vmax.f32 %v3084, %v3085
    %v3087 = vrot.slane %v3086, 2
    %v3088 = vmax.f32 %v3086, %v3087
    %v3089 = vrot.slane %v3088, 1
    %v3090 = vmax.f32 %v3088, %v3089
    %v3091 = vsel %vm2222, %v1412, -inf
    %v3092 = vrot.slane %v3091, 4
    %v3093 = vmax.f32 %v3091, %v3092
    %v3094 = vrot.slane %v3093, 2
    %v3095 = vmax.f32 %v3093, %v3094
    %v3096 = vrot.slane %v3095, 1
    %v3097 = vmax.f32 %v3095, %v3096
    %v3098 = vsel %vm2222, %v1420, -inf
    %v3099 = vrot.slane %v3098, 4
    %v3100 = vmax.f32 %v3098, %v3099
    %v3101 = vrot.slane %v3100, 2
    %v3102 = vmax.f32 %v3100, %v3101
    %v3103 = vrot.slane %v3102, 1
    %v3104 = vmax.f32 %v3102, %v3103
    %v3105 = vsel %vm2222, %v1419, -inf
    %v3106 = vrot.slane %v3105, 4
    %v3107 = vmax.f32 %v3105, %v3106
    %v3108 = vrot.slane %v3107, 2
    %v3109 = vmax.f32 %v3107, %v3108
    %v3110 = vrot.slane %v3109, 1
    %v3111 = vmax.f32 %v3109, %v3110
    %v3112 = vsel %vm2222, %v1421, -inf
    %v3113 = vrot.slane %v3112, 4
    %v3114 = vmax.f32 %v3112, %v3113
    %v3115 = vrot.slane %v3114, 2
    %v3116 = vmax.f32 %v3114, %v3115
    %v3117 = vrot.slane %v3116, 1
    %v3118 = vmax.f32 %v3116, %v3117
    %v3119 = vsel %vm2222, %v1429, -inf
    %v3120 = vrot.slane %v3119, 4
    %v3121 = vmax.f32 %v3119, %v3120
    %v3122 = vrot.slane %v3121, 2
    %v3123 = vmax.f32 %v3121, %v3122
    %v3124 = vrot.slane %v3123, 1
    %v3125 = vmax.f32 %v3123, %v3124
    %v3126 = vsel %vm2222, %v1437, -inf
    %v3127 = vrot.slane %v3126, 4
    %v3128 = vmax.f32 %v3126, %v3127
    %v3129 = vrot.slane %v3128, 2
    %v3130 = vmax.f32 %v3128, %v3129
    %v3131 = vrot.slane %v3130, 1
    %v3132 = vmax.f32 %v3130, %v3131
    %v3133 = vsel %vm2222, %v1436, -inf
    %v3134 = vrot.slane %v3133, 4
    %v3135 = vmax.f32 %v3133, %v3134
    %v3136 = vrot.slane %v3135, 2
    %v3137 = vmax.f32 %v3135, %v3136
    %v3138 = vrot.slane %v3137, 1
    %v3139 = vmax.f32 %v3137, %v3138
    %v3140 = vsel %vm2222, %v1438, -inf
    %v3141 = vrot.slane %v3140, 4
    %v3142 = vmax.f32 %v3140, %v3141
    %v3143 = vrot.slane %v3142, 2
    %v3144 = vmax.f32 %v3142, %v3143
    %v3145 = vrot.slane %v3144, 1
    %v3146 = vmax.f32 %v3144, %v3145
    %v3147 = vsel %vm2222, %v1446, -inf
    %v3148 = vrot.slane %v3147, 4
    %v3149 = vmax.f32 %v3147, %v3148
    %v3150 = vrot.slane %v3149, 2
    %v3151 = vmax.f32 %v3149, %v3150
    %v3152 = vrot.slane %v3151, 1
    %v3153 = vmax.f32 %v3151, %v3152
    %v3154 = vsel %vm2222, %v1454, -inf
    %v3155 = vrot.slane %v3154, 4
    %v3156 = vmax.f32 %v3154, %v3155
    %v3157 = vrot.slane %v3156, 2
    %v3158 = vmax.f32 %v3156, %v3157
    %v3159 = vrot.slane %v3158, 1
    %v3160 = vmax.f32 %v3158, %v3159
    %v3161 = vsel %vm2222, %v1453, -inf
    %v3162 = vrot.slane %v3161, 4
    %v3163 = vmax.f32 %v3161, %v3162
    %v3164 = vrot.slane %v3163, 2
    %v3165 = vmax.f32 %v3163, %v3164
    %v3166 = vrot.slane %v3165, 1
    %v3167 = vmax.f32 %v3165, %v3166
    %v3168 = vsel %vm2222, %v1455, -inf
    %v3169 = vrot.slane %v3168, 4
    %v3170 = vmax.f32 %v3168, %v3169
    %v3171 = vrot.slane %v3170, 2
    %v3172 = vmax.f32 %v3170, %v3171
    %v3173 = vrot.slane %v3172, 1
    %v3174 = vmax.f32 %v3172, %v3173
    %v3175 = vsel %vm2222, %v1463, -inf
    %v3176 = vrot.slane %v3175, 4
    %v3177 = vmax.f32 %v3175, %v3176
    %v3178 = vrot.slane %v3177, 2
    %v3179 = vmax.f32 %v3177, %v3178
    %v3180 = vrot.slane %v3179, 1
    %v3181 = vmax.f32 %v3179, %v3180
    %v3182 = vsel %vm2222, %v1471, -inf
    %v3183 = vrot.slane %v3182, 4
    %v3184 = vmax.f32 %v3182, %v3183
    %v3185 = vrot.slane %v3184, 2
    %v3186 = vmax.f32 %v3184, %v3185
    %v3187 = vrot.slane %v3186, 1
    %v3188 = vmax.f32 %v3186, %v3187
    %v3189 = vsel %vm2222, %v1470, -inf
    %v3190 = vrot.slane %v3189, 4
    %v3191 = vmax.f32 %v3189, %v3190
    %v3192 = vrot.slane %v3191, 2
    %v3193 = vmax.f32 %v3191, %v3192
    %v3194 = vrot.slane %v3193, 1
    %v3195 = vmax.f32 %v3193, %v3194
    %v3196 = vsel %vm2222, %v1472, -inf
    %v3197 = vrot.slane %v3196, 4
    %v3198 = vmax.f32 %v3196, %v3197
    %v3199 = vrot.slane %v3198, 2
    %v3200 = vmax.f32 %v3198, %v3199
    %v3201 = vrot.slane %v3200, 1
    %v3202 = vmax.f32 %v3200, %v3201
    %v3203 = vsel %vm2222, %v1480, -inf
    %v3204 = vrot.slane %v3203, 4
    %v3205 = vmax.f32 %v3203, %v3204
    %v3206 = vrot.slane %v3205, 2
    %v3207 = vmax.f32 %v3205, %v3206
    %v3208 = vrot.slane %v3207, 1
    %v3209 = vmax.f32 %v3207, %v3208
    %v3210 = vsel %vm2222, %v1488, -inf
    %v3211 = vrot.slane %v3210, 4
    %v3212 = vmax.f32 %v3210, %v3211
    %v3213 = vrot.slane %v3212, 2
    %v3214 = vmax.f32 %v3212, %v3213
    %v3215 = vrot.slane %v3214, 1
    %v3216 = vmax.f32 %v3214, %v3215
    %v3217 = vsel %vm2222, %v1487, -inf
    %v3218 = vrot.slane %v3217, 4
    %v3219 = vmax.f32 %v3217, %v3218
    %v3220 = vrot.slane %v3219, 2
    %v3221 = vmax.f32 %v3219, %v3220
    %v3222 = vrot.slane %v3221, 1
    %v3223 = vmax.f32 %v3221, %v3222
    %v3224 = vsel %vm2222, %v1489, -inf
    %v3225 = vrot.slane %v3224, 4
    %v3226 = vmax.f32 %v3224, %v3225
    %v3227 = vrot.slane %v3226, 2
    %v3228 = vmax.f32 %v3226, %v3227
    %v3229 = vrot.slane %v3228, 1
    %v3230 = vmax.f32 %v3228, %v3229
    %v3231 = vsel %vm2222, %v1497, -inf
    %v3232 = vrot.slane %v3231, 4
    %v3233 = vmax.f32 %v3231, %v3232
    %v3234 = vrot.slane %v3233, 2
    %v3235 = vmax.f32 %v3233, %v3234
    %v3236 = vrot.slane %v3235, 1
    %v3237 = vmax.f32 %v3235, %v3236
    %v3238 = vsel %vm2222, %v1505, -inf
    %v3239 = vrot.slane %v3238, 4
    %v3240 = vmax.f32 %v3238, %v3239
    %v3241 = vrot.slane %v3240, 2
    %v3242 = vmax.f32 %v3240, %v3241
    %v3243 = vrot.slane %v3242, 1
    %v3244 = vmax.f32 %v3242, %v3243
    %v3245 = vsel %vm2222, %v1504, -inf
    %v3246 = vrot.slane %v3245, 4
    %v3247 = vmax.f32 %v3245, %v3246
    %v3248 = vrot.slane %v3247, 2
    %v3249 = vmax.f32 %v3247, %v3248
    %v3250 = vrot.slane %v3249, 1
    %v3251 = vmax.f32 %v3249, %v3250
    %v3252 = vsel %vm2222, %v1506, -inf
    %v3253 = vrot.slane %v3252, 4
    %v3254 = vmax.f32 %v3252, %v3253
    %v3255 = vrot.slane %v3254, 2
    %v3256 = vmax.f32 %v3254, %v3255
    %v3257 = vrot.slane %v3256, 1
    %v3258 = vmax.f32 %v3256, %v3257
    %v3259 = vsel %vm2222, %v1514, -inf
    %v3260 = vrot.slane %v3259, 4
    %v3261 = vmax.f32 %v3259, %v3260
    %v3262 = vrot.slane %v3261, 2
    %v3263 = vmax.f32 %v3261, %v3262
    %v3264 = vrot.slane %v3263, 1
    %v3265 = vmax.f32 %v3263, %v3264
    %v3266 = vsel %vm2222, %v1522, -inf
    %v3267 = vrot.slane %v3266, 4
    %v3268 = vmax.f32 %v3266, %v3267
    %v3269 = vrot.slane %v3268, 2
    %v3270 = vmax.f32 %v3268, %v3269
    %v3271 = vrot.slane %v3270, 1
    %v3272 = vmax.f32 %v3270, %v3271
    %v3273 = vsel %vm2222, %v1521, -inf
    %v3274 = vrot.slane %v3273, 4
    %v3275 = vmax.f32 %v3273, %v3274
    %v3276 = vrot.slane %v3275, 2
    %v3277 = vmax.f32 %v3275, %v3276
    %v3278 = vrot.slane %v3277, 1
    %v3279 = vmax.f32 %v3277, %v3278
    %v3280 = vsel %vm2222, %v1523, -inf
    %v3281 = vrot.slane %v3280, 4
    %v3282 = vmax.f32 %v3280, %v3281
    %v3283 = vrot.slane %v3282, 2
    %v3284 = vmax.f32 %v3282, %v3283
    %v3285 = vrot.slane %v3284, 1
    %v3286 = vmax.f32 %v3284, %v3285
    %v3287 = vsel %vm2222, %v1531, -inf
    %v3288 = vrot.slane %v3287, 4
    %v3289 = vmax.f32 %v3287, %v3288
    %v3290 = vrot.slane %v3289, 2
    %v3291 = vmax.f32 %v3289, %v3290
    %v3292 = vrot.slane %v3291, 1
    %v3293 = vmax.f32 %v3291, %v3292
    %v3294 = vsel %vm2222, %v1539, -inf
    %v3295 = vrot.slane %v3294, 4
    %v3296 = vmax.f32 %v3294, %v3295
    %v3297 = vrot.slane %v3296, 2
    %v3298 = vmax.f32 %v3296, %v3297
    %v3299 = vrot.slane %v3298, 1
    %v3300 = vmax.f32 %v3298, %v3299
    %v3301 = vsel %vm2222, %v1538, -inf
    %v3302 = vrot.slane %v3301, 4
    %v3303 = vmax.f32 %v3301, %v3302
    %v3304 = vrot.slane %v3303, 2
    %v3305 = vmax.f32 %v3303, %v3304
    %v3306 = vrot.slane %v3305, 1
    %v3307 = vmax.f32 %v3305, %v3306
    %v3308 = vsel %vm2222, %v1540, -inf
    %v3309 = vrot.slane %v3308, 4
    %v3310 = vmax.f32 %v3308, %v3309
    %v3311 = vrot.slane %v3310, 2
    %v3312 = vmax.f32 %v3310, %v3311
    %v3313 = vrot.slane %v3312, 1
    %v3314 = vmax.f32 %v3312, %v3313
    %v3315 = vsel %vm2222, %v1548, -inf
    %v3316 = vrot.slane %v3315, 4
    %v3317 = vmax.f32 %v3315, %v3316
    %v3318 = vrot.slane %v3317, 2
    %v3319 = vmax.f32 %v3317, %v3318
    %v3320 = vrot.slane %v3319, 1
    %v3321 = vmax.f32 %v3319, %v3320
    %v3322 = vsel %vm2222, %v1556, -inf
    %v3323 = vrot.slane %v3322, 4
    %v3324 = vmax.f32 %v3322, %v3323
    %v3325 = vrot.slane %v3324, 2
    %v3326 = vmax.f32 %v3324, %v3325
    %v3327 = vrot.slane %v3326, 1
    %v3328 = vmax.f32 %v3326, %v3327
    %v3329 = vsel %vm2222, %v1555, -inf
    %v3330 = vrot.slane %v3329, 4
    %v3331 = vmax.f32 %v3329, %v3330
    %v3332 = vrot.slane %v3331, 2
    %v3333 = vmax.f32 %v3331, %v3332
    %v3334 = vrot.slane %v3333, 1
    %v3335 = vmax.f32 %v3333, %v3334
    %v3336 = vsel %vm2222, %v1557, -inf
    %v3337 = vrot.slane %v3336, 4
    %v3338 = vmax.f32 %v3336, %v3337
    %v3339 = vrot.slane %v3338, 2
    %v3340 = vmax.f32 %v3338, %v3339
    %v3341 = vrot.slane %v3340, 1
    %v3342 = vmax.f32 %v3340, %v3341
    %v3343 = vsel %vm2222, %v1565, -inf
    %v3344 = vrot.slane %v3343, 4
    %v3345 = vmax.f32 %v3343, %v3344
    %v3346 = vrot.slane %v3345, 2
    %v3347 = vmax.f32 %v3345, %v3346
    %v3348 = vrot.slane %v3347, 1
    %v3349 = vmax.f32 %v3347, %v3348
    %v3350 = vsel %vm2222, %v1573, -inf
    %v3351 = vrot.slane %v3350, 4
    %v3352 = vmax.f32 %v3350, %v3351
    %v3353 = vrot.slane %v3352, 2
    %v3354 = vmax.f32 %v3352, %v3353
    %v3355 = vrot.slane %v3354, 1
    %v3356 = vmax.f32 %v3354, %v3355
    %v3357 = vsel %vm2222, %v1572, -inf
    %v3358 = vrot.slane %v3357, 4
    %v3359 = vmax.f32 %v3357, %v3358
    %v3360 = vrot.slane %v3359, 2
    %v3361 = vmax.f32 %v3359, %v3360
    %v3362 = vrot.slane %v3361, 1
    %v3363 = vmax.f32 %v3361, %v3362
    %v3364 = vsel %vm2222, %v1574, -inf
    %v3365 = vrot.slane %v3364, 4
    %v3366 = vmax.f32 %v3364, %v3365
    %v3367 = vrot.slane %v3366, 2
    %v3368 = vmax.f32 %v3366, %v3367
    %v3369 = vrot.slane %v3368, 1
    %v3370 = vmax.f32 %v3368, %v3369
    %v3371 = vsel %vm2222, %v1582, -inf
    %v3372 = vrot.slane %v3371, 4
    %v3373 = vmax.f32 %v3371, %v3372
    %v3374 = vrot.slane %v3373, 2
    %v3375 = vmax.f32 %v3373, %v3374
    %v3376 = vrot.slane %v3375, 1
    %v3377 = vmax.f32 %v3375, %v3376
    %v3378 = vsel %vm2222, %v1590, -inf
    %v3379 = vrot.slane %v3378, 4
    %v3380 = vmax.f32 %v3378, %v3379
    %v3381 = vrot.slane %v3380, 2
    %v3382 = vmax.f32 %v3380, %v3381
    %v3383 = vrot.slane %v3382, 1
    %v3384 = vmax.f32 %v3382, %v3383
    %v3385 = vsel %vm2222, %v1589, -inf
    %v3386 = vrot.slane %v3385, 4
    %v3387 = vmax.f32 %v3385, %v3386
    %v3388 = vrot.slane %v3387, 2
    %v3389 = vmax.f32 %v3387, %v3388
    %v3390 = vrot.slane %v3389, 1
    %v3391 = vmax.f32 %v3389, %v3390
    %v3392 = vsel %vm2222, %v1591, -inf
    %v3393 = vrot.slane %v3392, 4
    %v3394 = vmax.f32 %v3392, %v3393
    %v3395 = vrot.slane %v3394, 2
    %v3396 = vmax.f32 %v3394, %v3395
    %v3397 = vrot.slane %v3396, 1
    %v3398 = vmax.f32 %v3396, %v3397
    %v3399 = vsel %vm2222, %v1599, -inf
    %v3400 = vrot.slane %v3399, 4
    %v3401 = vmax.f32 %v3399, %v3400
    %v3402 = vrot.slane %v3401, 2
    %v3403 = vmax.f32 %v3401, %v3402
    %v3404 = vrot.slane %v3403, 1
    %v3405 = vmax.f32 %v3403, %v3404
    %v3406 = vsel %vm2222, %v1607, -inf
    %v3407 = vrot.slane %v3406, 4
    %v3408 = vmax.f32 %v3406, %v3407
    %v3409 = vrot.slane %v3408, 2
    %v3410 = vmax.f32 %v3408, %v3409
    %v3411 = vrot.slane %v3410, 1
    %v3412 = vmax.f32 %v3410, %v3411
    %v3413 = vsel %vm2222, %v1606, -inf
    %v3414 = vrot.slane %v3413, 4
    %v3415 = vmax.f32 %v3413, %v3414
    %v3416 = vrot.slane %v3415, 2
    %v3417 = vmax.f32 %v3415, %v3416
    %v3418 = vrot.slane %v3417, 1
    %v3419 = vmax.f32 %v3417, %v3418
    %v3420 = vsel %vm2222, %v1608, -inf
    %v3421 = vrot.slane %v3420, 4
    %v3422 = vmax.f32 %v3420, %v3421
    %v3423 = vrot.slane %v3422, 2
    %v3424 = vmax.f32 %v3422, %v3423
    %v3425 = vrot.slane %v3424, 1
    %v3426 = vmax.f32 %v3424, %v3425
    %v3427 = vsel %vm2222, %v1616, -inf
    %v3428 = vrot.slane %v3427, 4
    %v3429 = vmax.f32 %v3427, %v3428
    %v3430 = vrot.slane %v3429, 2
    %v3431 = vmax.f32 %v3429, %v3430
    %v3432 = vrot.slane %v3431, 1
    %v3433 = vmax.f32 %v3431, %v3432
    %v3434 = vsel %vm2222, %v1624, -inf
    %v3435 = vrot.slane %v3434, 4
    %v3436 = vmax.f32 %v3434, %v3435
    %v3437 = vrot.slane %v3436, 2
    %v3438 = vmax.f32 %v3436, %v3437
    %v3439 = vrot.slane %v3438, 1
    %v3440 = vmax.f32 %v3438, %v3439
    %v3441 = vsel %vm2222, %v1623, -inf
    %v3442 = vrot.slane %v3441, 4
    %v3443 = vmax.f32 %v3441, %v3442
    %v3444 = vrot.slane %v3443, 2
    %v3445 = vmax.f32 %v3443, %v3444
    %v3446 = vrot.slane %v3445, 1
    %v3447 = vmax.f32 %v3445, %v3446
    %v3448 = vsel %vm2222, %v1625, -inf
    %v3449 = vrot.slane %v3448, 4
    %v3450 = vmax.f32 %v3448, %v3449
    %v3451 = vrot.slane %v3450, 2
    %v3452 = vmax.f32 %v3450, %v3451
    %v3453 = vrot.slane %v3452, 1
    %v3454 = vmax.f32 %v3452, %v3453
    %v3455 = vsel %vm2222, %v1633, -inf
    %v3456 = vrot.slane %v3455, 4
    %v3457 = vmax.f32 %v3455, %v3456
    %v3458 = vrot.slane %v3457, 2
    %v3459 = vmax.f32 %v3457, %v3458
    %v3460 = vrot.slane %v3459, 1
    %v3461 = vmax.f32 %v3459, %v3460
    %v3462 = vsel %vm2222, %v1641, -inf
    %v3463 = vrot.slane %v3462, 4
    %v3464 = vmax.f32 %v3462, %v3463
    %v3465 = vrot.slane %v3464, 2
    %v3466 = vmax.f32 %v3464, %v3465
    %v3467 = vrot.slane %v3466, 1
    %v3468 = vmax.f32 %v3466, %v3467
    %v3469 = vsel %vm2222, %v1640, -inf
    %v3470 = vrot.slane %v3469, 4
    %v3471 = vmax.f32 %v3469, %v3470
    %v3472 = vrot.slane %v3471, 2
    %v3473 = vmax.f32 %v3471, %v3472
    %v3474 = vrot.slane %v3473, 1
    %v3475 = vmax.f32 %v3473, %v3474
    %v3476 = vsel %vm2222, %v1642, -inf
    %v3477 = vrot.slane %v3476, 4
    %v3478 = vmax.f32 %v3476, %v3477
    %v3479 = vrot.slane %v3478, 2
    %v3480 = vmax.f32 %v3478, %v3479
    %v3481 = vrot.slane %v3480, 1
    %v3482 = vmax.f32 %v3480, %v3481
    %v3483 = vsel %vm2222, %v1650, -inf
    %v3484 = vrot.slane %v3483, 4
    %v3485 = vmax.f32 %v3483, %v3484
    %v3486 = vrot.slane %v3485, 2
    %v3487 = vmax.f32 %v3485, %v3486
    %v3488 = vrot.slane %v3487, 1
    %v3489 = vmax.f32 %v3487, %v3488
    %v3490 = vsel %vm2222, %v1658, -inf
    %v3491 = vrot.slane %v3490, 4
    %v3492 = vmax.f32 %v3490, %v3491
    %v3493 = vrot.slane %v3492, 2
    %v3494 = vmax.f32 %v3492, %v3493
    %v3495 = vrot.slane %v3494, 1
    %v3496 = vmax.f32 %v3494, %v3495
    %v3497 = vsel %vm2222, %v1657, -inf
    %v3498 = vrot.slane %v3497, 4
    %v3499 = vmax.f32 %v3497, %v3498
    %v3500 = vrot.slane %v3499, 2
    %v3501 = vmax.f32 %v3499, %v3500
    %v3502 = vrot.slane %v3501, 1
    %v3503 = vmax.f32 %v3501, %v3502
    %v3504 = vsel %vm2222, %v1659, -inf
    %v3505 = vrot.slane %v3504, 4
    %v3506 = vmax.f32 %v3504, %v3505
    %v3507 = vrot.slane %v3506, 2
    %v3508 = vmax.f32 %v3506, %v3507
    %v3509 = vrot.slane %v3508, 1
    %v3510 = vmax.f32 %v3508, %v3509
    %v3511 = vsel %vm2222, %v1667, -inf
    %v3512 = vrot.slane %v3511, 4
    %v3513 = vmax.f32 %v3511, %v3512
    %v3514 = vrot.slane %v3513, 2
    %v3515 = vmax.f32 %v3513, %v3514
    %v3516 = vrot.slane %v3515, 1
    %v3517 = vmax.f32 %v3515, %v3516
    %v3518 = vsel %vm2222, %v1675, -inf
    %v3519 = vrot.slane %v3518, 4
    %v3520 = vmax.f32 %v3518, %v3519
    %v3521 = vrot.slane %v3520, 2
    %v3522 = vmax.f32 %v3520, %v3521
    %v3523 = vrot.slane %v3522, 1
    %v3524 = vmax.f32 %v3522, %v3523
    %v3525 = vsel %vm2222, %v1674, -inf
    %v3526 = vrot.slane %v3525, 4
    %v3527 = vmax.f32 %v3525, %v3526
    %v3528 = vrot.slane %v3527, 2
    %v3529 = vmax.f32 %v3527, %v3528
    %v3530 = vrot.slane %v3529, 1
    %v3531 = vmax.f32 %v3529, %v3530
    %v3532 = vsel %vm2222, %v1676, -inf
    %v3533 = vrot.slane %v3532, 4
    %v3534 = vmax.f32 %v3532, %v3533
    %v3535 = vrot.slane %v3534, 2
    %v3536 = vmax.f32 %v3534, %v3535
    %v3537 = vrot.slane %v3536, 1
    %v3538 = vmax.f32 %v3536, %v3537
    %v3539 = vsel %vm2222, %v1684, -inf
    %v3540 = vrot.slane %v3539, 4
    %v3541 = vmax.f32 %v3539, %v3540
    %v3542 = vrot.slane %v3541, 2
    %v3543 = vmax.f32 %v3541, %v3542
    %v3544 = vrot.slane %v3543, 1
    %v3545 = vmax.f32 %v3543, %v3544
    %v3546 = vsel %vm2222, %v1692, -inf
    %v3547 = vrot.slane %v3546, 4
    %v3548 = vmax.f32 %v3546, %v3547
    %v3549 = vrot.slane %v3548, 2
    %v3550 = vmax.f32 %v3548, %v3549
    %v3551 = vrot.slane %v3550, 1
    %v3552 = vmax.f32 %v3550, %v3551
    %v3553 = vsel %vm2222, %v1691, -inf
    %v3554 = vrot.slane %v3553, 4
    %v3555 = vmax.f32 %v3553, %v3554
    %v3556 = vrot.slane %v3555, 2
    %v3557 = vmax.f32 %v3555, %v3556
    %v3558 = vrot.slane %v3557, 1
    %v3559 = vmax.f32 %v3557, %v3558
    %v3560 = vsel %vm2222, %v1693, -inf
    %v3561 = vrot.slane %v3560, 4
    %v3562 = vmax.f32 %v3560, %v3561
    %v3563 = vrot.slane %v3562, 2
    %v3564 = vmax.f32 %v3562, %v3563
    %v3565 = vrot.slane %v3564, 1
    %v3566 = vmax.f32 %v3564, %v3565
    %v3567 = vsel %vm2222, %v1701, -inf
    %v3568 = vrot.slane %v3567, 4
    %v3569 = vmax.f32 %v3567, %v3568
    %v3570 = vrot.slane %v3569, 2
    %v3571 = vmax.f32 %v3569, %v3570
    %v3572 = vrot.slane %v3571, 1
    %v3573 = vmax.f32 %v3571, %v3572
    %v3574 = vsel %vm2222, %v1709, -inf
    %v3575 = vrot.slane %v3574, 4
    %v3576 = vmax.f32 %v3574, %v3575
    %v3577 = vrot.slane %v3576, 2
    %v3578 = vmax.f32 %v3576, %v3577
    %v3579 = vrot.slane %v3578, 1
    %v3580 = vmax.f32 %v3578, %v3579
    %v3581 = vsel %vm2222, %v1708, -inf
    %v3582 = vrot.slane %v3581, 4
    %v3583 = vmax.f32 %v3581, %v3582
    %v3584 = vrot.slane %v3583, 2
    %v3585 = vmax.f32 %v3583, %v3584
    %v3586 = vrot.slane %v3585, 1
    %v3587 = vmax.f32 %v3585, %v3586
    %v3588 = vsel %vm2222, %v1710, -inf
    %v3589 = vrot.slane %v3588, 4
    %v3590 = vmax.f32 %v3588, %v3589
    %v3591 = vrot.slane %v3590, 2
    %v3592 = vmax.f32 %v3590, %v3591
    %v3593 = vrot.slane %v3592, 1
    %v3594 = vmax.f32 %v3592, %v3593
    %v3595 = vsel %vm2222, %v1718, -inf
    %v3596 = vrot.slane %v3595, 4
    %v3597 = vmax.f32 %v3595, %v3596
    %v3598 = vrot.slane %v3597, 2
    %v3599 = vmax.f32 %v3597, %v3598
    %v3600 = vrot.slane %v3599, 1
    %v3601 = vmax.f32 %v3599, %v3600
    %v3602 = vsel %vm2222, %v1726, -inf
    %v3603 = vrot.slane %v3602, 4
    %v3604 = vmax.f32 %v3602, %v3603
    %v3605 = vrot.slane %v3604, 2
    %v3606 = vmax.f32 %v3604, %v3605
    %v3607 = vrot.slane %v3606, 1
    %v3608 = vmax.f32 %v3606, %v3607
    %v3609 = vsel %vm2222, %v1725, -inf
    %v3610 = vrot.slane %v3609, 4
    %v3611 = vmax.f32 %v3609, %v3610
    %v3612 = vrot.slane %v3611, 2
    %v3613 = vmax.f32 %v3611, %v3612
    %v3614 = vrot.slane %v3613, 1
    %v3615 = vmax.f32 %v3613, %v3614
    %v3616 = vsel %vm2222, %v1727, -inf
    %v3617 = vrot.slane %v3616, 4
    %v3618 = vmax.f32 %v3616, %v3617
    %v3619 = vrot.slane %v3618, 2
    %v3620 = vmax.f32 %v3618, %v3619
    %v3621 = vrot.slane %v3620, 1
    %v3622 = vmax.f32 %v3620, %v3621
    %v3623 = vsel %vm2222, %v1735, -inf
    %v3624 = vrot.slane %v3623, 4
    %v3625 = vmax.f32 %v3623, %v3624
    %v3626 = vrot.slane %v3625, 2
    %v3627 = vmax.f32 %v3625, %v3626
    %v3628 = vrot.slane %v3627, 1
    %v3629 = vmax.f32 %v3627, %v3628
    %v3630 = vsel %vm2222, %v1743, -inf
    %v3631 = vrot.slane %v3630, 4
    %v3632 = vmax.f32 %v3630, %v3631
    %v3633 = vrot.slane %v3632, 2
    %v3634 = vmax.f32 %v3632, %v3633
    %v3635 = vrot.slane %v3634, 1
    %v3636 = vmax.f32 %v3634, %v3635
    %v3637 = vsel %vm2222, %v1742, -inf
    %v3638 = vrot.slane %v3637, 4
    %v3639 = vmax.f32 %v3637, %v3638
    %v3640 = vrot.slane %v3639, 2
    %v3641 = vmax.f32 %v3639, %v3640
    %v3642 = vrot.slane %v3641, 1
    %v3643 = vmax.f32 %v3641, %v3642
    %v3644 = vsel %vm2222, %v1744, -inf
    %v3645 = vrot.slane %v3644, 4
    %v3646 = vmax.f32 %v3644, %v3645
    %v3647 = vrot.slane %v3646, 2
    %v3648 = vmax.f32 %v3646, %v3647
    %v3649 = vrot.slane %v3648, 1
    %v3650 = vmax.f32 %v3648, %v3649
    %v3651 = vsel %vm2222, %v1752, -inf
    %v3652 = vrot.slane %v3651, 4
    %v3653 = vmax.f32 %v3651, %v3652
    %v3654 = vrot.slane %v3653, 2
    %v3655 = vmax.f32 %v3653, %v3654
    %v3656 = vrot.slane %v3655, 1
    %v3657 = vmax.f32 %v3655, %v3656
    %v3658 = vsel %vm2222, %v1760, -inf
    %v3659 = vrot.slane %v3658, 4
    %v3660 = vmax.f32 %v3658, %v3659
    %v3661 = vrot.slane %v3660, 2
    %v3662 = vmax.f32 %v3660, %v3661
    %v3663 = vrot.slane %v3662, 1
    %v3664 = vmax.f32 %v3662, %v3663
    %v3665 = vsel %vm2222, %v1759, -inf
    %v3666 = vrot.slane %v3665, 4
    %v3667 = vmax.f32 %v3665, %v3666
    %v3668 = vrot.slane %v3667, 2
    %v3669 = vmax.f32 %v3667, %v3668
    %v3670 = vrot.slane %v3669, 1
    %v3671 = vmax.f32 %v3669, %v3670
    %v3672 = vsel %vm2222, %v1761, -inf
    %v3673 = vrot.slane %v3672, 4
    %v3674 = vmax.f32 %v3672, %v3673
    %v3675 = vrot.slane %v3674, 2
    %v3676 = vmax.f32 %v3674, %v3675
    %v3677 = vrot.slane %v3676, 1
    %v3678 = vmax.f32 %v3676, %v3677
    %v3679 = vsel %vm2222, %v1769, -inf
    %v3680 = vrot.slane %v3679, 4
    %v3681 = vmax.f32 %v3679, %v3680
    %v3682 = vrot.slane %v3681, 2
    %v3683 = vmax.f32 %v3681, %v3682
    %v3684 = vrot.slane %v3683, 1
    %v3685 = vmax.f32 %v3683, %v3684
    %v3686 = vsel %vm2222, %v1777, -inf
    %v3687 = vrot.slane %v3686, 4
    %v3688 = vmax.f32 %v3686, %v3687
    %v3689 = vrot.slane %v3688, 2
    %v3690 = vmax.f32 %v3688, %v3689
    %v3691 = vrot.slane %v3690, 1
    %v3692 = vmax.f32 %v3690, %v3691
    %v3693 = vsel %vm2222, %v1776, -inf
    %v3694 = vrot.slane %v3693, 4
    %v3695 = vmax.f32 %v3693, %v3694
    %v3696 = vrot.slane %v3695, 2
    %v3697 = vmax.f32 %v3695, %v3696
    %v3698 = vrot.slane %v3697, 1
    %v3699 = vmax.f32 %v3697, %v3698
    %v3700 = vsel %vm2222, %v1778, -inf
    %v3701 = vrot.slane %v3700, 4
    %v3702 = vmax.f32 %v3700, %v3701
    %v3703 = vrot.slane %v3702, 2
    %v3704 = vmax.f32 %v3702, %v3703
    %v3705 = vrot.slane %v3704, 1
    %v3706 = vmax.f32 %v3704, %v3705
    %v3707 = vsel %vm2222, %v1786, -inf
    %v3708 = vrot.slane %v3707, 4
    %v3709 = vmax.f32 %v3707, %v3708
    %v3710 = vrot.slane %v3709, 2
    %v3711 = vmax.f32 %v3709, %v3710
    %v3712 = vrot.slane %v3711, 1
    %v3713 = vmax.f32 %v3711, %v3712
    %v3714 = vsel %vm2222, %v1794, -inf
    %v3715 = vrot.slane %v3714, 4
    %v3716 = vmax.f32 %v3714, %v3715
    %v3717 = vrot.slane %v3716, 2
    %v3718 = vmax.f32 %v3716, %v3717
    %v3719 = vrot.slane %v3718, 1
    %v3720 = vmax.f32 %v3718, %v3719
    %v3721 = vsel %vm2222, %v1793, -inf
    %v3722 = vrot.slane %v3721, 4
    %v3723 = vmax.f32 %v3721, %v3722
    %v3724 = vrot.slane %v3723, 2
    %v3725 = vmax.f32 %v3723, %v3724
    %v3726 = vrot.slane %v3725, 1
    %v3727 = vmax.f32 %v3725, %v3726
    %v3728 = vsel %vm2222, %v1795, -inf
    %v3729 = vrot.slane %v3728, 4
    %v3730 = vmax.f32 %v3728, %v3729
    %v3731 = vrot.slane %v3730, 2
    %v3732 = vmax.f32 %v3730, %v3731
    %v3733 = vrot.slane %v3732, 1
    %v3734 = vmax.f32 %v3732, %v3733
    %v3735 = vsel %vm2222, %v1803, -inf
    %v3736 = vrot.slane %v3735, 4
    %v3737 = vmax.f32 %v3735, %v3736
    %v3738 = vrot.slane %v3737, 2
    %v3739 = vmax.f32 %v3737, %v3738
    %v3740 = vrot.slane %v3739, 1
    %v3741 = vmax.f32 %v3739, %v3740
    %v3742 = vsel %vm2222, %v1811, -inf
    %v3743 = vrot.slane %v3742, 4
    %v3744 = vmax.f32 %v3742, %v3743
    %v3745 = vrot.slane %v3744, 2
    %v3746 = vmax.f32 %v3744, %v3745
    %v3747 = vrot.slane %v3746, 1
    %v3748 = vmax.f32 %v3746, %v3747
    %v3749 = vsel %vm2222, %v1810, -inf
    %v3750 = vrot.slane %v3749, 4
    %v3751 = vmax.f32 %v3749, %v3750
    %v3752 = vrot.slane %v3751, 2
    %v3753 = vmax.f32 %v3751, %v3752
    %v3754 = vrot.slane %v3753, 1
    %v3755 = vmax.f32 %v3753, %v3754
    %v3756 = vsel %vm2222, %v1812, -inf
    %v3757 = vrot.slane %v3756, 4
    %v3758 = vmax.f32 %v3756, %v3757
    %v3759 = vrot.slane %v3758, 2
    %v3760 = vmax.f32 %v3758, %v3759
    %v3761 = vrot.slane %v3760, 1
    %v3762 = vmax.f32 %v3760, %v3761
    %v3763 = vsel %vm2222, %v1820, -inf
    %v3764 = vrot.slane %v3763, 4
    %v3765 = vmax.f32 %v3763, %v3764
    %v3766 = vrot.slane %v3765, 2
    %v3767 = vmax.f32 %v3765, %v3766
    %v3768 = vrot.slane %v3767, 1
    %v3769 = vmax.f32 %v3767, %v3768
    %v3770 = vsel %vm2222, %v1828, -inf
    %v3771 = vrot.slane %v3770, 4
    %v3772 = vmax.f32 %v3770, %v3771
    %v3773 = vrot.slane %v3772, 2
    %v3774 = vmax.f32 %v3772, %v3773
    %v3775 = vrot.slane %v3774, 1
    %v3776 = vmax.f32 %v3774, %v3775
    %v3777 = vsel %vm2222, %v1827, -inf
    %v3778 = vrot.slane %v3777, 4
    %v3779 = vmax.f32 %v3777, %v3778
    %v3780 = vrot.slane %v3779, 2
    %v3781 = vmax.f32 %v3779, %v3780
    %v3782 = vrot.slane %v3781, 1
    %v3783 = vmax.f32 %v3781, %v3782
    %v3784 = vsel %vm2222, %v1829, -inf
    %v3785 = vrot.slane %v3784, 4
    %v3786 = vmax.f32 %v3784, %v3785
    %v3787 = vrot.slane %v3786, 2
    %v3788 = vmax.f32 %v3786, %v3787
    %v3789 = vrot.slane %v3788, 1
    %v3790 = vmax.f32 %v3788, %v3789
    %v3791 = vsel %vm2222, %v1837, -inf
    %v3792 = vrot.slane %v3791, 4
    %v3793 = vmax.f32 %v3791, %v3792
    %v3794 = vrot.slane %v3793, 2
    %v3795 = vmax.f32 %v3793, %v3794
    %v3796 = vrot.slane %v3795, 1
    %v3797 = vmax.f32 %v3795, %v3796
    %v3798 = vsel %vm2222, %v1845, -inf
    %v3799 = vrot.slane %v3798, 4
    %v3800 = vmax.f32 %v3798, %v3799
    %v3801 = vrot.slane %v3800, 2
    %v3802 = vmax.f32 %v3800, %v3801
    %v3803 = vrot.slane %v3802, 1
    %v3804 = vmax.f32 %v3802, %v3803
    %v3805 = vsel %vm2222, %v1844, -inf
    %v3806 = vrot.slane %v3805, 4
    %v3807 = vmax.f32 %v3805, %v3806
    %v3808 = vrot.slane %v3807, 2
    %v3809 = vmax.f32 %v3807, %v3808
    %v3810 = vrot.slane %v3809, 1
    %v3811 = vmax.f32 %v3809, %v3810
    %v3812 = vsel %vm2222, %v1846, -inf
    %v3813 = vrot.slane %v3812, 4
    %v3814 = vmax.f32 %v3812, %v3813
    %v3815 = vrot.slane %v3814, 2
    %v3816 = vmax.f32 %v3814, %v3815
    %v3817 = vrot.slane %v3816, 1
    %v3818 = vmax.f32 %v3816, %v3817
    %v3819 = vsel %vm2222, %v1854, -inf
    %v3820 = vrot.slane %v3819, 4
    %v3821 = vmax.f32 %v3819, %v3820
    %v3822 = vrot.slane %v3821, 2
    %v3823 = vmax.f32 %v3821, %v3822
    %v3824 = vrot.slane %v3823, 1
    %v3825 = vmax.f32 %v3823, %v3824
    %v3826 = vsel %vm2222, %v1862, -inf
    %v3827 = vrot.slane %v3826, 4
    %v3828 = vmax.f32 %v3826, %v3827
    %v3829 = vrot.slane %v3828, 2
    %v3830 = vmax.f32 %v3828, %v3829
    %v3831 = vrot.slane %v3830, 1
    %v3832 = vmax.f32 %v3830, %v3831
    %v3833 = vsel %vm2222, %v1861, -inf
    %v3834 = vrot.slane %v3833, 4
    %v3835 = vmax.f32 %v3833, %v3834
    %v3836 = vrot.slane %v3835, 2
    %v3837 = vmax.f32 %v3835, %v3836
    %v3838 = vrot.slane %v3837, 1
    %v3839 = vmax.f32 %v3837, %v3838
    %v3840 = vsel %vm2222, %v1863, -inf
    %v3841 = vrot.slane %v3840, 4
    %v3842 = vmax.f32 %v3840, %v3841
    %v3843 = vrot.slane %v3842, 2
    %v3844 = vmax.f32 %v3842, %v3843
    %v3845 = vrot.slane %v3844, 1
    %v3846 = vmax.f32 %v3844, %v3845
    %v3847 = vsel %vm2222, %v1871, -inf
    %v3848 = vrot.slane %v3847, 4
    %v3849 = vmax.f32 %v3847, %v3848
    %v3850 = vrot.slane %v3849, 2
    %v3851 = vmax.f32 %v3849, %v3850
    %v3852 = vrot.slane %v3851, 1
    %v3853 = vmax.f32 %v3851, %v3852
    %v3854 = vsel %vm2222, %v1879, -inf
    %v3855 = vrot.slane %v3854, 4
    %v3856 = vmax.f32 %v3854, %v3855
    %v3857 = vrot.slane %v3856, 2
    %v3858 = vmax.f32 %v3856, %v3857
    %v3859 = vrot.slane %v3858, 1
    %v3860 = vmax.f32 %v3858, %v3859
    %v3861 = vsel %vm2222, %v1878, -inf
    %v3862 = vrot.slane %v3861, 4
    %v3863 = vmax.f32 %v3861, %v3862
    %v3864 = vrot.slane %v3863, 2
    %v3865 = vmax.f32 %v3863, %v3864
    %v3866 = vrot.slane %v3865, 1
    %v3867 = vmax.f32 %v3865, %v3866
    %v3868 = vsel %vm2222, %v1880, -inf
    %v3869 = vrot.slane %v3868, 4
    %v3870 = vmax.f32 %v3868, %v3869
    %v3871 = vrot.slane %v3870, 2
    %v3872 = vmax.f32 %v3870, %v3871
    %v3873 = vrot.slane %v3872, 1
    %v3874 = vmax.f32 %v3872, %v3873
    %v3875 = vsel %vm2222, %v1888, -inf
    %v3876 = vrot.slane %v3875, 4
    %v3877 = vmax.f32 %v3875, %v3876
    %v3878 = vrot.slane %v3877, 2
    %v3879 = vmax.f32 %v3877, %v3878
    %v3880 = vrot.slane %v3879, 1
    %v3881 = vmax.f32 %v3879, %v3880
    %v3882 = vsel %vm2222, %v1896, -inf
    %v3883 = vrot.slane %v3882, 4
    %v3884 = vmax.f32 %v3882, %v3883
    %v3885 = vrot.slane %v3884, 2
    %v3886 = vmax.f32 %v3884, %v3885
    %v3887 = vrot.slane %v3886, 1
    %v3888 = vmax.f32 %v3886, %v3887
    %v3889 = vsel %vm2222, %v1895, -inf
    %v3890 = vrot.slane %v3889, 4
    %v3891 = vmax.f32 %v3889, %v3890
    %v3892 = vrot.slane %v3891, 2
    %v3893 = vmax.f32 %v3891, %v3892
    %v3894 = vrot.slane %v3893, 1
    %v3895 = vmax.f32 %v3893, %v3894
    %v3896 = vsel %vm2222, %v1897, -inf
    %v3897 = vrot.slane %v3896, 4
    %v3898 = vmax.f32 %v3896, %v3897
    %v3899 = vrot.slane %v3898, 2
    %v3900 = vmax.f32 %v3898, %v3899
    %v3901 = vrot.slane %v3900, 1
    %v3902 = vmax.f32 %v3900, %v3901
    %v3903 = vsel %vm2222, %v1905, -inf
    %v3904 = vrot.slane %v3903, 4
    %v3905 = vmax.f32 %v3903, %v3904
    %v3906 = vrot.slane %v3905, 2
    %v3907 = vmax.f32 %v3905, %v3906
    %v3908 = vrot.slane %v3907, 1
    %v3909 = vmax.f32 %v3907, %v3908
    %v3910 = vsel %vm2222, %v1913, -inf
    %v3911 = vrot.slane %v3910, 4
    %v3912 = vmax.f32 %v3910, %v3911
    %v3913 = vrot.slane %v3912, 2
    %v3914 = vmax.f32 %v3912, %v3913
    %v3915 = vrot.slane %v3914, 1
    %v3916 = vmax.f32 %v3914, %v3915
    %v3917 = vsel %vm2222, %v1912, -inf
    %v3918 = vrot.slane %v3917, 4
    %v3919 = vmax.f32 %v3917, %v3918
    %v3920 = vrot.slane %v3919, 2
    %v3921 = vmax.f32 %v3919, %v3920
    %v3922 = vrot.slane %v3921, 1
    %v3923 = vmax.f32 %v3921, %v3922
    %v3924 = vsel %vm2222, %v1914, -inf
    %v3925 = vrot.slane %v3924, 4
    %v3926 = vmax.f32 %v3924, %v3925
    %v3927 = vrot.slane %v3926, 2
    %v3928 = vmax.f32 %v3926, %v3927
    %v3929 = vrot.slane %v3928, 1
    %v3930 = vmax.f32 %v3928, %v3929
    %v3931 = vsel %vm2222, %v1922, -inf
    %v3932 = vrot.slane %v3931, 4
    %v3933 = vmax.f32 %v3931, %v3932
    %v3934 = vrot.slane %v3933, 2
    %v3935 = vmax.f32 %v3933, %v3934
    %v3936 = vrot.slane %v3935, 1
    %v3937 = vmax.f32 %v3935, %v3936
    %v3938 = vsel %vm2222, %v1930, -inf
    %v3939 = vrot.slane %v3938, 4
    %v3940 = vmax.f32 %v3938, %v3939
    %v3941 = vrot.slane %v3940, 2
    %v3942 = vmax.f32 %v3940, %v3941
    %v3943 = vrot.slane %v3942, 1
    %v3944 = vmax.f32 %v3942, %v3943
    %v3945 = vsel %vm2222, %v1929, -inf
    %v3946 = vrot.slane %v3945, 4
    %v3947 = vmax.f32 %v3945, %v3946
    %v3948 = vrot.slane %v3947, 2
    %v3949 = vmax.f32 %v3947, %v3948
    %v3950 = vrot.slane %v3949, 1
    %v3951 = vmax.f32 %v3949, %v3950
    %v3952 = vsel %vm2222, %v1931, -inf
    %v3953 = vrot.slane %v3952, 4
    %v3954 = vmax.f32 %v3952, %v3953
    %v3955 = vrot.slane %v3954, 2
    %v3956 = vmax.f32 %v3954, %v3955
    %v3957 = vrot.slane %v3956, 1
    %v3958 = vmax.f32 %v3956, %v3957
    %v3959 = vsel %vm2222, %v1939, -inf
    %v3960 = vrot.slane %v3959, 4
    %v3961 = vmax.f32 %v3959, %v3960
    %v3962 = vrot.slane %v3961, 2
    %v3963 = vmax.f32 %v3961, %v3962
    %v3964 = vrot.slane %v3963, 1
    %v3965 = vmax.f32 %v3963, %v3964
    %v3966 = vsel %vm2222, %v1947, -inf
    %v3967 = vrot.slane %v3966, 4
    %v3968 = vmax.f32 %v3966, %v3967
    %v3969 = vrot.slane %v3968, 2
    %v3970 = vmax.f32 %v3968, %v3969
    %v3971 = vrot.slane %v3970, 1
    %v3972 = vmax.f32 %v3970, %v3971
    %v3973 = vsel %vm2222, %v1946, -inf
    %v3974 = vrot.slane %v3973, 4
    %v3975 = vmax.f32 %v3973, %v3974
    %v3976 = vrot.slane %v3975, 2
    %v3977 = vmax.f32 %v3975, %v3976
    %v3978 = vrot.slane %v3977, 1
    %v3979 = vmax.f32 %v3977, %v3978
    %v3980 = vsel %vm2222, %v1948, -inf
    %v3981 = vrot.slane %v3980, 4
    %v3982 = vmax.f32 %v3980, %v3981
    %v3983 = vrot.slane %v3982, 2
    %v3984 = vmax.f32 %v3982, %v3983
    %v3985 = vrot.slane %v3984, 1
    %v3986 = vmax.f32 %v3984, %v3985
    %v3987 = vsel %vm2222, %v1956, -inf
    %v3988 = vrot.slane %v3987, 4
    %v3989 = vmax.f32 %v3987, %v3988
    %v3990 = vrot.slane %v3989, 2
    %v3991 = vmax.f32 %v3989, %v3990
    %v3992 = vrot.slane %v3991, 1
    %v3993 = vmax.f32 %v3991, %v3992
    %v3994 = vsel %vm2222, %v1964, -inf
    %v3995 = vrot.slane %v3994, 4
    %v3996 = vmax.f32 %v3994, %v3995
    %v3997 = vrot.slane %v3996, 2
    %v3998 = vmax.f32 %v3996, %v3997
    %v3999 = vrot.slane %v3998, 1
    %v4000 = vmax.f32 %v3998, %v3999
    %v4001 = vsel %vm2222, %v1963, -inf
    %v4002 = vrot.slane %v4001, 4
    %v4003 = vmax.f32 %v4001, %v4002
    %v4004 = vrot.slane %v4003, 2
    %v4005 = vmax.f32 %v4003, %v4004
    %v4006 = vrot.slane %v4005, 1
    %v4007 = vmax.f32 %v4005, %v4006
    %v4008 = vsel %vm2222, %v1965, -inf
    %v4009 = vrot.slane %v4008, 4
    %v4010 = vmax.f32 %v4008, %v4009
    %v4011 = vrot.slane %v4010, 2
    %v4012 = vmax.f32 %v4010, %v4011
    %v4013 = vrot.slane %v4012, 1
    %v4014 = vmax.f32 %v4012, %v4013
    %vm4015 = vcmask 261120
    %v4016 = vsel %vm4015, %v2229, -inf
    %v4017 = vsel %vm4015, %v2285, -inf
    %v4018 = vmax.f32 %v4016, %v4017
    %v4019 = vsel %vm4015, %v2236, -inf
    %v4020 = vsel %vm4015, %v2292, -inf
    %v4021 = vmax.f32 %v4019, %v4020
    %v4022 = vsel %vm4015, %v2243, -inf
    %v4023 = vsel %vm4015, %v2299, -inf
    %v4024 = vmax.f32 %v4022, %v4023
    %v4025 = vsel %vm4015, %v2250, -inf
    %v4026 = vsel %vm4015, %v2306, -inf
    %v4027 = vmax.f32 %v4025, %v4026
    %v4028 = vsel %vm4015, %v2257, -inf
    %v4029 = vsel %vm4015, %v2313, -inf
    %v4030 = vmax.f32 %v4028, %v4029
    %v4031 = vsel %vm4015, %v2264, -inf
    %v4032 = vsel %vm4015, %v2320, -inf
    %v4033 = vmax.f32 %v4031, %v4032
    %v4034 = vsel %vm4015, %v2271, -inf
    %v4035 = vsel %vm4015, %v2327, -inf
    %v4036 = vmax.f32 %v4034, %v4035
    %v4037 = vsel %vm4015, %v2278, -inf
    %v4038 = vsel %vm4015, %v2334, -inf
    %v4039 = vmax.f32 %v4037, %v4038
    %v4040 = vsel %vm4015, %v2341, -inf
    %v4041 = vsel %vm4015, %v2397, -inf
    %v4042 = vmax.f32 %v4040, %v4041
    %v4043 = vsel %vm4015, %v2348, -inf
    %v4044 = vsel %vm4015, %v2404, -inf
    %v4045 = vmax.f32 %v4043, %v4044
    %v4046 = vsel %vm4015, %v2355, -inf
    %v4047 = vsel %vm4015, %v2411, -inf
    %v4048 = vmax.f32 %v4046, %v4047
    %v4049 = vsel %vm4015, %v2362, -inf
    %v4050 = vsel %vm4015, %v2418, -inf
    %v4051 = vmax.f32 %v4049, %v4050
    %v4052 = vsel %vm4015, %v2369, -inf
    %v4053 = vsel %vm4015, %v2425, -inf
    %v4054 = vmax.f32 %v4052, %v4053
    %v4055 = vsel %vm4015, %v2376, -inf
    %v4056 = vsel %vm4015, %v2432, -inf
    %v4057 = vmax.f32 %v4055, %v4056
    %v4058 = vsel %vm4015, %v2383, -inf
    %v4059 = vsel %vm4015, %v2439, -inf
    %v4060 = vmax.f32 %v4058, %v4059
    %v4061 = vsel %vm4015, %v2390, -inf
    %v4062 = vsel %vm4015, %v2446, -inf
    %v4063 = vmax.f32 %v4061, %v4062
    %v4064 = vsel %vm4015, %v2453, -inf
    %v4065 = vsel %vm4015, %v2509, -inf
    %v4066 = vmax.f32 %v4064, %v4065
    %v4067 = vsel %vm4015, %v2460, -inf
    %v4068 = vsel %vm4015, %v2516, -inf
    %v4069 = vmax.f32 %v4067, %v4068
    %v4070 = vsel %vm4015, %v2467, -inf
    %v4071 = vsel %vm4015, %v2523, -inf
    %v4072 = vmax.f32 %v4070, %v4071
    %v4073 = vsel %vm4015, %v2474, -inf
    %v4074 = vsel %vm4015, %v2530, -inf
    %v4075 = vmax.f32 %v4073, %v4074
    %v4076 = vsel %vm4015, %v2481, -inf
    %v4077 = vsel %vm4015, %v2537, -inf
    %v4078 = vmax.f32 %v4076, %v4077
    %v4079 = vsel %vm4015, %v2488, -inf
    %v4080 = vsel %vm4015, %v2544, -inf
    %v4081 = vmax.f32 %v4079, %v4080
    %v4082 = vsel %vm4015, %v2495, -inf
    %v4083 = vsel %vm4015, %v2551, -inf
    %v4084 = vmax.f32 %v4082, %v4083
    %v4085 = vsel %vm4015, %v2502, -inf
    %v4086 = vsel %vm4015, %v2558, -inf
    %v4087 = vmax.f32 %v4085, %v4086
    %v4088 = vsel %vm4015, %v2565, -inf
    %v4089 = vsel %vm4015, %v2621, -inf
    %v4090 = vmax.f32 %v4088, %v4089
    %v4091 = vsel %vm4015, %v2572, -inf
    %v4092 = vsel %vm4015, %v2628, -inf
    %v4093 = vmax.f32 %v4091, %v4092
    %v4094 = vsel %vm4015, %v2579, -inf
    %v4095 = vsel %vm4015, %v2635, -inf
    %v4096 = vmax.f32 %v4094, %v4095
    %v4097 = vsel %vm4015, %v2586, -inf
    %v4098 = vsel %vm4015, %v2642, -inf
    %v4099 = vmax.f32 %v4097, %v4098
    %v4100 = vsel %vm4015, %v2593, -inf
    %v4101 = vsel %vm4015, %v2649, -inf
    %v4102 = vmax.f32 %v4100, %v4101
    %v4103 = vsel %vm4015, %v2600, -inf
    %v4104 = vsel %vm4015, %v2656, -inf
    %v4105 = vmax.f32 %v4103, %v4104
    %v4106 = vsel %vm4015, %v2607, -inf
    %v4107 = vsel %vm4015, %v2663, -inf
    %v4108 = vmax.f32 %v4106, %v4107
    %v4109 = vsel %vm4015, %v2614, -inf
    %v4110 = vsel %vm4015, %v2670, -inf
    %v4111 = vmax.f32 %v4109, %v4110
    %v4112 = vsel %vm4015, %v2677, -inf
    %v4113 = vsel %vm4015, %v2733, -inf
    %v4114 = vmax.f32 %v4112, %v4113
    %v4115 = vsel %vm4015, %v2684, -inf
    %v4116 = vsel %vm4015, %v2740, -inf
    %v4117 = vmax.f32 %v4115, %v4116
    %v4118 = vsel %vm4015, %v2691, -inf
    %v4119 = vsel %vm4015, %v2747, -inf
    %v4120 = vmax.f32 %v4118, %v4119
    %v4121 = vsel %vm4015, %v2698, -inf
    %v4122 = vsel %vm4015, %v2754, -inf
    %v4123 = vmax.f32 %v4121, %v4122
    %v4124 = vsel %vm4015, %v2705, -inf
    %v4125 = vsel %vm4015, %v2761, -inf
    %v4126 = vmax.f32 %v4124, %v4125
    %v4127 = vsel %vm4015, %v2712, -inf
    %v4128 = vsel %vm4015, %v2768, -inf
    %v4129 = vmax.f32 %v4127, %v4128
    %v4130 = vsel %vm4015, %v2719, -inf
    %v4131 = vsel %vm4015, %v2775, -inf
    %v4132 = vmax.f32 %v4130, %v4131
    %v4133 = vsel %vm4015, %v2726, -inf
    %v4134 = vsel %vm4015, %v2782, -inf
    %v4135 = vmax.f32 %v4133, %v4134
    %v4136 = vsel %vm4015, %v2789, -inf
    %v4137 = vsel %vm4015, %v2845, -inf
    %v4138 = vmax.f32 %v4136, %v4137
    %v4139 = vsel %vm4015, %v2796, -inf
    %v4140 = vsel %vm4015, %v2852, -inf
    %v4141 = vmax.f32 %v4139, %v4140
    %v4142 = vsel %vm4015, %v2803, -inf
    %v4143 = vsel %vm4015, %v2859, -inf
    %v4144 = vmax.f32 %v4142, %v4143
    %v4145 = vsel %vm4015, %v2810, -inf
    %v4146 = vsel %vm4015, %v2866, -inf
    %v4147 = vmax.f32 %v4145, %v4146
    %v4148 = vsel %vm4015, %v2817, -inf
    %v4149 = vsel %vm4015, %v2873, -inf
    %v4150 = vmax.f32 %v4148, %v4149
    %v4151 = vsel %vm4015, %v2824, -inf
    %v4152 = vsel %vm4015, %v2880, -inf
    %v4153 = vmax.f32 %v4151, %v4152
    %v4154 = vsel %vm4015, %v2831, -inf
    %v4155 = vsel %vm4015, %v2887, -inf
    %v4156 = vmax.f32 %v4154, %v4155
    %v4157 = vsel %vm4015, %v2838, -inf
    %v4158 = vsel %vm4015, %v2894, -inf
    %v4159 = vmax.f32 %v4157, %v4158
    %v4160 = vsel %vm4015, %v2901, -inf
    %v4161 = vsel %vm4015, %v2957, -inf
    %v4162 = vmax.f32 %v4160, %v4161
    %v4163 = vsel %vm4015, %v2908, -inf
    %v4164 = vsel %vm4015, %v2964, -inf
    %v4165 = vmax.f32 %v4163, %v4164
    %v4166 = vsel %vm4015, %v2915, -inf
    %v4167 = vsel %vm4015, %v2971, -inf
    %v4168 = vmax.f32 %v4166, %v4167
    %v4169 = vsel %vm4015, %v2922, -inf
    %v4170 = vsel %vm4015, %v2978, -inf
    %v4171 = vmax.f32 %v4169, %v4170
    %v4172 = vsel %vm4015, %v2929, -inf
    %v4173 = vsel %vm4015, %v2985, -inf
    %v4174 = vmax.f32 %v4172, %v4173
    %v4175 = vsel %vm4015, %v2936, -inf
    %v4176 = vsel %vm4015, %v2992, -inf
    %v4177 = vmax.f32 %v4175, %v4176
    %v4178 = vsel %vm4015, %v2943, -inf
    %v4179 = vsel %vm4015, %v2999, -inf
    %v4180 = vmax.f32 %v4178, %v4179
    %v4181 = vsel %vm4015, %v2950, -inf
    %v4182 = vsel %vm4015, %v3006, -inf
    %v4183 = vmax.f32 %v4181, %v4182
    %v4184 = vsel %vm4015, %v3013, -inf
    %v4185 = vsel %vm4015, %v3069, -inf
    %v4186 = vmax.f32 %v4184, %v4185
    %v4187 = vsel %vm4015, %v3020, -inf
    %v4188 = vsel %vm4015, %v3076, -inf
    %v4189 = vmax.f32 %v4187, %v4188
    %v4190 = vsel %vm4015, %v3027, -inf
    %v4191 = vsel %vm4015, %v3083, -inf
    %v4192 = vmax.f32 %v4190, %v4191
    %v4193 = vsel %vm4015, %v3034, -inf
    %v4194 = vsel %vm4015, %v3090, -inf
    %v4195 = vmax.f32 %v4193, %v4194
    %v4196 = vsel %vm4015, %v3041, -inf
    %v4197 = vsel %vm4015, %v3097, -inf
    %v4198 = vmax.f32 %v4196, %v4197
    %v4199 = vsel %vm4015, %v3048, -inf
    %v4200 = vsel %vm4015, %v3104, -inf
    %v4201 = vmax.f32 %v4199, %v4200
    %v4202 = vsel %vm4015, %v3055, -inf
    %v4203 = vsel %vm4015, %v3111, -inf
    %v4204 = vmax.f32 %v4202, %v4203
    %v4205 = vsel %vm4015, %v3062, -inf
    %v4206 = vsel %vm4015, %v3118, -inf
    %v4207 = vmax.f32 %v4205, %v4206
    %v4208 = vsel %vm4015, %v3125, -inf
    %v4209 = vsel %vm4015, %v3181, -inf
    %v4210 = vmax.f32 %v4208, %v4209
    %v4211 = vsel %vm4015, %v3132, -inf
    %v4212 = vsel %vm4015, %v3188, -inf
    %v4213 = vmax.f32 %v4211, %v4212
    %v4214 = vsel %vm4015, %v3139, -inf
    %v4215 = vsel %vm4015, %v3195, -inf
    %v4216 = vmax.f32 %v4214, %v4215
    %v4217 = vsel %vm4015, %v3146, -inf
    %v4218 = vsel %vm4015, %v3202, -inf
    %v4219 = vmax.f32 %v4217, %v4218
    %v4220 = vsel %vm4015, %v3153, -inf
    %v4221 = vsel %vm4015, %v3209, -inf
    %v4222 = vmax.f32 %v4220, %v4221
    %v4223 = vsel %vm4015, %v3160, -inf
    %v4224 = vsel %vm4015, %v3216, -inf
    %v4225 = vmax.f32 %v4223, %v4224
    %v4226 = vsel %vm4015, %v3167, -inf
    %v4227 = vsel %vm4015, %v3223, -inf
    %v4228 = vmax.f32 %v4226, %v4227
    %v4229 = vsel %vm4015, %v3174, -inf
    %v4230 = vsel %vm4015, %v3230, -inf
    %v4231 = vmax.f32 %v4229, %v4230
    %v4232 = vsel %vm4015, %v3237, -inf
    %v4233 = vsel %vm4015, %v3293, -inf
    %v4234 = vmax.f32 %v4232, %v4233
    %v4235 = vsel %vm4015, %v3244, -inf
    %v4236 = vsel %vm4015, %v3300, -inf
    %v4237 = vmax.f32 %v4235, %v4236
    %v4238 = vsel %vm4015, %v3251, -inf
    %v4239 = vsel %vm4015, %v3307, -inf
    %v4240 = vmax.f32 %v4238, %v4239
    %v4241 = vsel %vm4015, %v3258, -inf
    %v4242 = vsel %vm4015, %v3314, -inf
    %v4243 = vmax.f32 %v4241, %v4242
    %v4244 = vsel %vm4015, %v3265, -inf
    %v4245 = vsel %vm4015, %v3321, -inf
    %v4246 = vmax.f32 %v4244, %v4245
    %v4247 = vsel %vm4015, %v3272, -inf
    %v4248 = vsel %vm4015, %v3328, -inf
    %v4249 = vmax.f32 %v4247, %v4248
    %v4250 = vsel %vm4015, %v3279, -inf
    %v4251 = vsel %vm4015, %v3335, -inf
    %v4252 = vmax.f32 %v4250, %v4251
    %v4253 = vsel %vm4015, %v3286, -inf
    %v4254 = vsel %vm4015, %v3342, -inf
    %v4255 = vmax.f32 %v4253, %v4254
    %v4256 = vsel %vm4015, %v3349, -inf
    %v4257 = vsel %vm4015, %v3405, -inf
    %v4258 = vmax.f32 %v4256, %v4257
    %v4259 = vsel %vm4015, %v3356, -inf
    %v4260 = vsel %vm4015, %v3412, -inf
    %v4261 = vmax.f32 %v4259, %v4260
    %v4262 = vsel %vm4015, %v3363, -inf
    %v4263 = vsel %vm4015, %v3419, -inf
    %v4264 = vmax.f32 %v4262, %v4263
    %v4265 = vsel %vm4015, %v3370, -inf
    %v4266 = vsel %vm4015, %v3426, -inf
    %v4267 = vmax.f32 %v4265, %v4266
    %v4268 = vsel %vm4015, %v3377, -inf
    %v4269 = vsel %vm4015, %v3433, -inf
    %v4270 = vmax.f32 %v4268, %v4269
    %v4271 = vsel %vm4015, %v3384, -inf
    %v4272 = vsel %vm4015, %v3440, -inf
    %v4273 = vmax.f32 %v4271, %v4272
    %v4274 = vsel %vm4015, %v3391, -inf
    %v4275 = vsel %vm4015, %v3447, -inf
    %v4276 = vmax.f32 %v4274, %v4275
    %v4277 = vsel %vm4015, %v3398, -inf
    %v4278 = vsel %vm4015, %v3454, -inf
    %v4279 = vmax.f32 %v4277, %v4278
    %v4280 = vsel %vm4015, %v3461, -inf
    %v4281 = vsel %vm4015, %v3517, -inf
    %v4282 = vmax.f32 %v4280, %v4281
    %v4283 = vsel %vm4015, %v3468, -inf
    %v4284 = vsel %vm4015, %v3524, -inf
    %v4285 = vmax.f32 %v4283, %v4284
    %v4286 = vsel %vm4015, %v3475, -inf
    %v4287 = vsel %vm4015, %v3531, -inf
    %v4288 = vmax.f32 %v4286, %v4287
    %v4289 = vsel %vm4015, %v3482, -inf
    %v4290 = vsel %vm4015, %v3538, -inf
    %v4291 = vmax.f32 %v4289, %v4290
    %v4292 = vsel %vm4015, %v3489, -inf
    %v4293 = vsel %vm4015, %v3545, -inf
    %v4294 = vmax.f32 %v4292, %v4293
    %v4295 = vsel %vm4015, %v3496, -inf
    %v4296 = vsel %vm4015, %v3552, -inf
    %v4297 = vmax.f32 %v4295, %v4296
    %v4298 = vsel %vm4015, %v3503, -inf
    %v4299 = vsel %vm4015, %v3559, -inf
    %v4300 = vmax.f32 %v4298, %v4299
    %v4301 = vsel %vm4015, %v3510, -inf
    %v4302 = vsel %vm4015, %v3566, -inf
    %v4303 = vmax.f32 %v4301, %v4302
    %v4304 = vsel %vm4015, %v3573, -inf
    %v4305 = vsel %vm4015, %v3629, -inf
    %v4306 = vmax.f32 %v4304, %v4305
    %v4307 = vsel %vm4015, %v3580, -inf
    %v4308 = vsel %vm4015, %v3636, -inf
    %v4309 = vmax.f32 %v4307, %v4308
    %v4310 = vsel %vm4015, %v3587, -inf
    %v4311 = vsel %vm4015, %v3643, -inf
    %v4312 = vmax.f32 %v4310, %v4311
    %v4313 = vsel %vm4015, %v3594, -inf
    %v4314 = vsel %vm4015, %v3650, -inf
    %v4315 = vmax.f32 %v4313, %v4314
    %v4316 = vsel %vm4015, %v3601, -inf
    %v4317 = vsel %vm4015, %v3657, -inf
    %v4318 = vmax.f32 %v4316, %v4317
    %v4319 = vsel %vm4015, %v3608, -inf
    %v4320 = vsel %vm4015, %v3664, -inf
    %v4321 = vmax.f32 %v4319, %v4320
    %v4322 = vsel %vm4015, %v3615, -inf
    %v4323 = vsel %vm4015, %v3671, -inf
    %v4324 = vmax.f32 %v4322, %v4323
    %v4325 = vsel %vm4015, %v3622, -inf
    %v4326 = vsel %vm4015, %v3678, -inf
    %v4327 = vmax.f32 %v4325, %v4326
    %v4328 = vsel %vm4015, %v3685, -inf
    %v4329 = vsel %vm4015, %v3741, -inf
    %v4330 = vmax.f32 %v4328, %v4329
    %v4331 = vsel %vm4015, %v3692, -inf
    %v4332 = vsel %vm4015, %v3748, -inf
    %v4333 = vmax.f32 %v4331, %v4332
    %v4334 = vsel %vm4015, %v3699, -inf
    %v4335 = vsel %vm4015, %v3755, -inf
    %v4336 = vmax.f32 %v4334, %v4335
    %v4337 = vsel %vm4015, %v3706, -inf
    %v4338 = vsel %vm4015, %v3762, -inf
    %v4339 = vmax.f32 %v4337, %v4338
    %v4340 = vsel %vm4015, %v3713, -inf
    %v4341 = vsel %vm4015, %v3769, -inf
    %v4342 = vmax.f32 %v4340, %v4341
    %v4343 = vsel %vm4015, %v3720, -inf
    %v4344 = vsel %vm4015, %v3776, -inf
    %v4345 = vmax.f32 %v4343, %v4344
    %v4346 = vsel %vm4015, %v3727, -inf
    %v4347 = vsel %vm4015, %v3783, -inf
    %v4348 = vmax.f32 %v4346, %v4347
    %v4349 = vsel %vm4015, %v3734, -inf
    %v4350 = vsel %vm4015, %v3790, -inf
    %v4351 = vmax.f32 %v4349, %v4350
    %v4352 = vsel %vm4015, %v3797, -inf
    %v4353 = vsel %vm4015, %v3853, -inf
    %v4354 = vmax.f32 %v4352, %v4353
    %v4355 = vsel %vm4015, %v3804, -inf
    %v4356 = vsel %vm4015, %v3860, -inf
    %v4357 = vmax.f32 %v4355, %v4356
    %v4358 = vsel %vm4015, %v3811, -inf
    %v4359 = vsel %vm4015, %v3867, -inf
    %v4360 = vmax.f32 %v4358, %v4359
    %v4361 = vsel %vm4015, %v3818, -inf
    %v4362 = vsel %vm4015, %v3874, -inf
    %v4363 = vmax.f32 %v4361, %v4362
    %v4364 = vsel %vm4015, %v3825, -inf
    %v4365 = vsel %vm4015, %v3881, -inf
    %v4366 = vmax.f32 %v4364, %v4365
    %v4367 = vsel %vm4015, %v3832, -inf
    %v4368 = vsel %vm4015, %v3888, -inf
    %v4369 = vmax.f32 %v4367, %v4368
    %v4370 = vsel %vm4015, %v3839, -inf
    %v4371 = vsel %vm4015, %v3895, -inf
    %v4372 = vmax.f32 %v4370, %v4371
    %v4373 = vsel %vm4015, %v3846, -inf
    %v4374 = vsel %vm4015, %v3902, -inf
    %v4375 = vmax.f32 %v4373, %v4374
    %v4376 = vsel %vm4015, %v3909, -inf
    %v4377 = vsel %vm4015, %v3965, -inf
    %v4378 = vmax.f32 %v4376, %v4377
    %v4379 = vsel %vm4015, %v3916, -inf
    %v4380 = vsel %vm4015, %v3972, -inf
    %v4381 = vmax.f32 %v4379, %v4380
    %v4382 = vsel %vm4015, %v3923, -inf
    %v4383 = vsel %vm4015, %v3979, -inf
    %v4384 = vmax.f32 %v4382, %v4383
    %v4385 = vsel %vm4015, %v3930, -inf
    %v4386 = vsel %vm4015, %v3986, -inf
    %v4387 = vmax.f32 %v4385, %v4386
    %v4388 = vsel %vm4015, %v3937, -inf
    %v4389 = vsel %vm4015, %v3993, -inf
    %v4390 = vmax.f32 %v4388, %v4389
    %v4391 = vsel %vm4015, %v3944, -inf
    %v4392 = vsel %vm4015, %v4000, -inf
    %v4393 = vmax.f32 %v4391, %v4392
    %v4394 = vsel %vm4015, %v3951, -inf
    %v4395 = vsel %vm4015, %v4007, -inf
    %v4396 = vmax.f32 %v4394, %v4395
    %v4397 = vsel %vm4015, %v3958, -inf
    %v4398 = vsel %vm4015, %v4014, -inf
    %v4399 = vmax.f32 %v4397, %v4398
    %4400 = vst.msk [vmem:[#allocation2] sm:$0xff] %vm4015, 0.0
    %4401 = vst.msk [vmem:[#allocation2 + $0x8] sm:$0x3] %vm2222, 0.0
    %4402 = vst.msk [vmem:[#allocation2 + $0x10] sm:$0xff] %vm4015, 0.0
    %4403 = vst.msk [vmem:[#allocation2 + $0x18] sm:$0x3] %vm2222, 0.0
    %4404 = vst.msk [vmem:[#allocation2 + $0x20] sm:$0xff] %vm4015, 0.0
    %4405 = vst.msk [vmem:[#allocation2 + $0x28] sm:$0x3] %vm2222, 0.0
    %4406 = vst.msk [vmem:[#allocation2 + $0x30] sm:$0xff] %vm4015, 0.0
    %4407 = vst.msk [vmem:[#allocation2 + $0x38] sm:$0x3] %vm2222, 0.0
    %4408 = vst.msk [vmem:[#allocation2 + $0x40] sm:$0xff] %vm4015, 0.0
    %4409 = vst.msk [vmem:[#allocation2 + $0x48] sm:$0x3] %vm2222, 0.0
    %4410 = vst.msk [vmem:[#allocation2 + $0x50] sm:$0xff] %vm4015, 0.0
    %4411 = vst.msk [vmem:[#allocation2 + $0x58] sm:$0x3] %vm2222, 0.0
    %4412 = vst.msk [vmem:[#allocation2 + $0x60] sm:$0xff] %vm4015, 0.0
    %4413 = vst.msk [vmem:[#allocation2 + $0x68] sm:$0x3] %vm2222, 0.0
    %4414 = vst.msk [vmem:[#allocation2 + $0x70] sm:$0xff] %vm4015, 0.0
    %4415 = vst.msk [vmem:[#allocation2 + $0x78] sm:$0x3] %vm2222, 0.0
    %4416 = vst.msk [vmem:[#allocation2 + $0x80] sm:$0xff] %vm4015, 0.0
    %4417 = vst.msk [vmem:[#allocation2 + $0x88] sm:$0x3] %vm2222, 0.0
    %4418 = vst.msk [vmem:[#allocation2 + $0x90] sm:$0xff] %vm4015, 0.0
    %4419 = vst.msk [vmem:[#allocation2 + $0x98] sm:$0x3] %vm2222, 0.0
    %4420 = vst.msk [vmem:[#allocation2 + $0xa0] sm:$0xff] %vm4015, 0.0
    %4421 = vst.msk [vmem:[#allocation2 + $0xa8] sm:$0x3] %vm2222, 0.0
    %4422 = vst.msk [vmem:[#allocation2 + $0xb0] sm:$0xff] %vm4015, 0.0
    %4423 = vst.msk [vmem:[#allocation2 + $0xb8] sm:$0x3] %vm2222, 0.0
    %4424 = vst.msk [vmem:[#allocation2 + $0xc0] sm:$0xff] %vm4015, 0.0
    %4425 = vst.msk [vmem:[#allocation2 + $0xc8] sm:$0x3] %vm2222, 0.0
    %4426 = vst.msk [vmem:[#allocation2 + $0xd0] sm:$0xff] %vm4015, 0.0
    %4427 = vst.msk [vmem:[#allocation2 + $0xd8] sm:$0x3] %vm2222, 0.0
    %4428 = vst.msk [vmem:[#allocation2 + $0xe0] sm:$0xff] %vm4015, 0.0
    %4429 = vst.msk [vmem:[#allocation2 + $0xe8] sm:$0x3] %vm2222, 0.0
    %4430 = vst.msk [vmem:[#allocation2 + $0xf0] sm:$0xff] %vm4015, 0.0
    %4431 = vst.msk [vmem:[#allocation2 + $0xf8] sm:$0x3] %vm2222, 0.0
    %4432 = vst.msk [vmem:[#allocation2 + $0x100] sm:$0xff] %vm4015, 0.0
    %4433 = vst.msk [vmem:[#allocation2 + $0x108] sm:$0x3] %vm2222, 0.0
    %4434 = vst.msk [vmem:[#allocation2 + $0x110] sm:$0xff] %vm4015, 0.0
    %4435 = vst.msk [vmem:[#allocation2 + $0x118] sm:$0x3] %vm2222, 0.0
    %4436 = vst.msk [vmem:[#allocation2 + $0x120] sm:$0xff] %vm4015, 0.0
    %4437 = vst.msk [vmem:[#allocation2 + $0x128] sm:$0x3] %vm2222, 0.0
    %4438 = vst.msk [vmem:[#allocation2 + $0x130] sm:$0xff] %vm4015, 0.0
    %4439 = vst.msk [vmem:[#allocation2 + $0x138] sm:$0x3] %vm2222, 0.0
    %vm4568 = vcmask 1041409
    %v4569 = vsel %vm4568, %v4021, %v4018
    %vm4570 = vcmask 1042434
    %v4571 = vsel %vm4570, %v4024, %v4569
    %vm4572 = vcmask 1043459
    %v4573 = vsel %vm4572, %v4027, %v4571
    %vm4574 = vcmask 1044484
    %v4575 = vsel %vm4574, %v4030, %v4573
    %vm4576 = vcmask 1045509
    %v4577 = vsel %vm4576, %v4033, %v4575
    %vm4578 = vcmask 1046534
    %v4579 = vsel %vm4578, %v4036, %v4577
    %vm4580 = vcmask 1047559
    %v4581 = vsel %vm4580, %v4039, %v4579
    %v4582 = vsel %vm4568, %v4045, %v4042
    %v4583 = vsel %vm4570, %v4048, %v4582
    %v4584 = vsel %vm4572, %v4051, %v4583
    %v4585 = vsel %vm4574, %v4054, %v4584
    %v4586 = vsel %vm4576, %v4057, %v4585
    %v4587 = vsel %vm4578, %v4060, %v4586
    %v4588 = vsel %vm4580, %v4063, %v4587
    %v4589 = vsel %vm4568, %v4069, %v4066
    %v4590 = vsel %vm4570, %v4072, %v4589
    %v4591 = vsel %vm4572, %v4075, %v4590
    %v4592 = vsel %vm4574, %v4078, %v4591
    %v4593 = vsel %vm4576, %v4081, %v4592
    %v4594 = vsel %vm4578, %v4084, %v4593
    %v4595 = vsel %vm4580, %v4087, %v4594
    %v4596 = vsel %vm4568, %v4093, %v4090
    %v4597 = vsel %vm4570, %v4096, %v4596
    %v4598 = vsel %vm4572, %v4099, %v4597
    %v4599 = vsel %vm4574, %v4102, %v4598
    %v4600 = vsel %vm4576, %v4105, %v4599
    %v4601 = vsel %vm4578, %v4108, %v4600
    %v4602 = vsel %vm4580, %v4111, %v4601
    %v4603 = vsel %vm4568, %v4117, %v4114
    %v4604 = vsel %vm4570, %v4120, %v4603
    %v4605 = vsel %vm4572, %v4123, %v4604
    %v4606 = vsel %vm4574, %v4126, %v4605
    %v4607 = vsel %vm4576, %v4129, %v4606
    %v4608 = vsel %vm4578, %v4132, %v4607
    %v4609 = vsel %vm4580, %v4135, %v4608
    %v4610 = vsel %vm4568, %v4141, %v4138
    %v4611 = vsel %vm4570, %v4144, %v4610
    %v4612 = vsel %vm4572, %v4147, %v4611
    %v4613 = vsel %vm4574, %v4150, %v4612
    %v4614 = vsel %vm4576, %v4153, %v4613
    %v4615 = vsel %vm4578, %v4156, %v4614
    %v4616 = vsel %vm4580, %v4159, %v4615
    %v4617 = vsel %vm4568, %v4165, %v4162
    %v4618 = vsel %vm4570, %v4168, %v4617
    %v4619 = vsel %vm4572, %v4171, %v4618
    %v4620 = vsel %vm4574, %v4174, %v4619
    %v4621 = vsel %vm4576, %v4177, %v4620
    %v4622 = vsel %vm4578, %v4180, %v4621
    %v4623 = vsel %vm4580, %v4183, %v4622
    %v4624 = vsel %vm4568, %v4189, %v4186
    %v4625 = vsel %vm4570, %v4192, %v4624
    %v4626 = vsel %vm4572, %v4195, %v4625
    %v4627 = vsel %vm4574, %v4198, %v4626
    %v4628 = vsel %vm4576, %v4201, %v4627
    %v4629 = vsel %vm4578, %v4204, %v4628
    %v4630 = vsel %vm4580, %v4207, %v4629
    %v4631 = vsel %vm4568, %v4213, %v4210
    %v4632 = vsel %vm4570, %v4216, %v4631
    %v4633 = vsel %vm4572, %v4219, %v4632
    %v4634 = vsel %vm4574, %v4222, %v4633
    %v4635 = vsel %vm4576, %v4225, %v4634
    %v4636 = vsel %vm4578, %v4228, %v4635
    %v4637 = vsel %vm4580, %v4231, %v4636
    %v4638 = vsel %vm4568, %v4237, %v4234
    %v4639 = vsel %vm4570, %v4240, %v4638
    %v4640 = vsel %vm4572, %v4243, %v4639
    %v4641 = vsel %vm4574, %v4246, %v4640
    %v4642 = vsel %vm4576, %v4249, %v4641
    %v4643 = vsel %vm4578, %v4252, %v4642
    %v4644 = vsel %vm4580, %v4255, %v4643
    %v4645 = vsel %vm4568, %v4261, %v4258
    %v4646 = vsel %vm4570, %v4264, %v4645
    %v4647 = vsel %vm4572, %v4267, %v4646
    %v4648 = vsel %vm4574, %v4270, %v4647
    %v4649 = vsel %vm4576, %v4273, %v4648
    %v4650 = vsel %vm4578, %v4276, %v4649
    %v4651 = vsel %vm4580, %v4279, %v4650
    %v4652 = vsel %vm4568, %v4285, %v4282
    %v4653 = vsel %vm4570, %v4288, %v4652
    %v4654 = vsel %vm4572, %v4291, %v4653
    %v4655 = vsel %vm4574, %v4294, %v4654
    %v4656 = vsel %vm4576, %v4297, %v4655
    %v4657 = vsel %vm4578, %v4300, %v4656
    %v4658 = vsel %vm4580, %v4303, %v4657
    %v4659 = vsel %vm4568, %v4309, %v4306
    %v4660 = vsel %vm4570, %v4312, %v4659
    %v4661 = vsel %vm4572, %v4315, %v4660
    %v4662 = vsel %vm4574, %v4318, %v4661
    %v4663 = vsel %vm4576, %v4321, %v4662
    %v4664 = vsel %vm4578, %v4324, %v4663
    %v4665 = vsel %vm4580, %v4327, %v4664
    %v4666 = vsel %vm4568, %v4333, %v4330
    %v4667 = vsel %vm4570, %v4336, %v4666
    %v4668 = vsel %vm4572, %v4339, %v4667
    %v4669 = vsel %vm4574, %v4342, %v4668
    %v4670 = vsel %vm4576, %v4345, %v4669
    %v4671 = vsel %vm4578, %v4348, %v4670
    %v4672 = vsel %vm4580, %v4351, %v4671
    %v4673 = vsel %vm4568, %v4357, %v4354
    %v4674 = vsel %vm4570, %v4360, %v4673
    %v4675 = vsel %vm4572, %v4363, %v4674
    %v4676 = vsel %vm4574, %v4366, %v4675
    %v4677 = vsel %vm4576, %v4369, %v4676
    %v4678 = vsel %vm4578, %v4372, %v4677
    %v4679 = vsel %vm4580, %v4375, %v4678
    %v4680 = vsel %vm4568, %v4381, %v4378
    %v4681 = vsel %vm4570, %v4384, %v4680
    %v4682 = vsel %vm4572, %v4387, %v4681
    %v4683 = vsel %vm4574, %v4390, %v4682
    %v4684 = vsel %vm4576, %v4393, %v4683
    %v4685 = vsel %vm4578, %v4396, %v4684
    %v4686 = vsel %vm4580, %v4399, %v4685
    %s4703 = scalar_lea.vmem [#allocation2], 16
    %4704 = vst.msk [vmem:[%s4703 + $0x1] sm:$0xff] %vm4015, %v4581
    %4705 = vst.msk [vmem:[%s4703 + $0x11] sm:$0xff] %vm4015, %v4588
    %4706 = vst.msk [vmem:[%s4703 + $0x21] sm:$0xff] %vm4015, %v4595
    %4707 = vst.msk [vmem:[%s4703 + $0x31] sm:$0xff] %vm4015, %v4602
    %4708 = vst.msk [vmem:[%s4703 + $0x41] sm:$0xff] %vm4015, %v4609
    %4709 = vst.msk [vmem:[%s4703 + $0x51] sm:$0xff] %vm4015, %v4616
    %4710 = vst.msk [vmem:[%s4703 + $0x61] sm:$0xff] %vm4015, %v4623
    %4711 = vst.msk [vmem:[%s4703 + $0x71] sm:$0xff] %vm4015, %v4630
    %4712 = vst.msk [vmem:[%s4703 + $0xa1] sm:$0xff] %vm4015, %v4637
    %4713 = vst.msk [vmem:[%s4703 + $0xb1] sm:$0xff] %vm4015, %v4644
    %4714 = vst.msk [vmem:[%s4703 + $0xc1] sm:$0xff] %vm4015, %v4651
    %4715 = vst.msk [vmem:[%s4703 + $0xd1] sm:$0xff] %vm4015, %v4658
    %4716 = vst.msk [vmem:[%s4703 + $0xe1] sm:$0xff] %vm4015, %v4665
    %4717 = vst.msk [vmem:[%s4703 + $0xf1] sm:$0xff] %vm4015, %v4672
    %4718 = vst.msk [vmem:[%s4703 + $0x101] sm:$0xff] %vm4015, %v4679
    %4719 = vst.msk [vmem:[%s4703 + $0x111] sm:$0xff] %vm4015, %v4686
    %v4720 = vld [vmem:[#allocation2] sm:$0xff]
    %v4721 = vld [vmem:[#allocation2 + $0x8] sm:$0x3]
    %v4722 = vld [vmem:[#allocation2 + $0x10] sm:$0xff]
    %v4723 = vld [vmem:[#allocation2 + $0x18] sm:$0x3]
    %v4724 = vld [vmem:[#allocation2 + $0x20] sm:$0xff]
    %v4725 = vld [vmem:[#allocation2 + $0x28] sm:$0x3]
    %v4726 = vld [vmem:[#allocation2 + $0x30] sm:$0xff]
    %v4727 = vld [vmem:[#allocation2 + $0x38] sm:$0x3]
    %v4728 = vld [vmem:[#allocation2 + $0x40] sm:$0xff]
    %v4729 = vld [vmem:[#allocation2 + $0x48] sm:$0x3]
    %v4730 = vld [vmem:[#allocation2 + $0x50] sm:$0xff]
    %v4731 = vld [vmem:[#allocation2 + $0x58] sm:$0x3]
    %v4732 = vld [vmem:[#allocation2 + $0x60] sm:$0xff]
    %v4733 = vld [vmem:[#allocation2 + $0x68] sm:$0x3]
    %v4734 = vld [vmem:[#allocation2 + $0x70] sm:$0xff]
    %v4735 = vld [vmem:[#allocation2 + $0x78] sm:$0x3]
    %v4736 = vld [vmem:[#allocation2 + $0x80] sm:$0xff]
    %v4737 = vld [vmem:[#allocation2 + $0x88] sm:$0x3]
    %v4738 = vld [vmem:[#allocation2 + $0x90] sm:$0xff]
    %v4739 = vld [vmem:[#allocation2 + $0x98] sm:$0x3]
    %v4740 = vld [vmem:[#allocation2 + $0xa0] sm:$0xff]
    %v4741 = vld [vmem:[#allocation2 + $0xa8] sm:$0x3]
    %v4742 = vld [vmem:[#allocation2 + $0xb0] sm:$0xff]
    %v4743 = vld [vmem:[#allocation2 + $0xb8] sm:$0x3]
    %v4744 = vld [vmem:[#allocation2 + $0xc0] sm:$0xff]
    %v4745 = vld [vmem:[#allocation2 + $0xc8] sm:$0x3]
    %v4746 = vld [vmem:[#allocation2 + $0xd0] sm:$0xff]
    %v4747 = vld [vmem:[#allocation2 + $0xd8] sm:$0x3]
    %v4748 = vld [vmem:[#allocation2 + $0xe0] sm:$0xff]
    %v4749 = vld [vmem:[#allocation2 + $0xe8] sm:$0x3]
    %v4750 = vld [vmem:[#allocation2 + $0xf0] sm:$0xff]
    %v4751 = vld [vmem:[#allocation2 + $0xf8] sm:$0x3]
    %v4752 = vld [vmem:[#allocation2 + $0x100] sm:$0xff]
    %v4753 = vld [vmem:[#allocation2 + $0x108] sm:$0x3]
    %v4754 = vld [vmem:[#allocation2 + $0x110] sm:$0xff]
    %v4755 = vld [vmem:[#allocation2 + $0x118] sm:$0x3]
    %v4756 = vld [vmem:[#allocation2 + $0x120] sm:$0xff]
    %v4757 = vld [vmem:[#allocation2 + $0x128] sm:$0x3]
    %v4758 = vld [vmem:[#allocation2 + $0x130] sm:$0xff]
    %v4759 = vld [vmem:[#allocation2 + $0x138] sm:$0x3]
    %vm4792 = vcmask 1046528
    %v4793 = vrot.slane %v4720, 1
    %v4794 = vrot.slane %v4721, 1
    %v4795 = vsel %vm4792, %v4793, %v4794
    %v4796 = vrot.slane %v4722, 1
    %v4797 = vrot.slane %v4723, 1
    %v4798 = vsel %vm4792, %v4796, %v4797
    %v4799 = vrot.slane %v4724, 1
    %v4800 = vrot.slane %v4725, 1
    %v4801 = vsel %vm4792, %v4799, %v4800
    %v4802 = vrot.slane %v4726, 1
    %v4803 = vrot.slane %v4727, 1
    %v4804 = vsel %vm4792, %v4802, %v4803
    %v4805 = vrot.slane %v4728, 1
    %v4806 = vrot.slane %v4729, 1
    %v4807 = vsel %vm4792, %v4805, %v4806
    %v4808 = vrot.slane %v4730, 1
    %v4809 = vrot.slane %v4731, 1
    %v4810 = vsel %vm4792, %v4808, %v4809
    %v4811 = vrot.slane %v4732, 1
    %v4812 = vrot.slane %v4733, 1
    %v4813 = vsel %vm4792, %v4811, %v4812
    %v4814 = vrot.slane %v4734, 1
    %v4815 = vrot.slane %v4735, 1
    %v4816 = vsel %vm4792, %v4814, %v4815
    %v4817 = vrot.slane %v4740, 1
    %v4818 = vrot.slane %v4741, 1
    %v4819 = vsel %vm4792, %v4817, %v4818
    %v4820 = vrot.slane %v4742, 1
    %v4821 = vrot.slane %v4743, 1
    %v4822 = vsel %vm4792, %v4820, %v4821
    %v4823 = vrot.slane %v4744, 1
    %v4824 = vrot.slane %v4745, 1
    %v4825 = vsel %vm4792, %v4823, %v4824
    %v4826 = vrot.slane %v4746, 1
    %v4827 = vrot.slane %v4747, 1
    %v4828 = vsel %vm4792, %v4826, %v4827
    %v4829 = vrot.slane %v4748, 1
    %v4830 = vrot.slane %v4749, 1
    %v4831 = vsel %vm4792, %v4829, %v4830
    %v4832 = vrot.slane %v4750, 1
    %v4833 = vrot.slane %v4751, 1
    %v4834 = vsel %vm4792, %v4832, %v4833
    %v4835 = vrot.slane %v4752, 1
    %v4836 = vrot.slane %v4753, 1
    %v4837 = vsel %vm4792, %v4835, %v4836
    %v4838 = vrot.slane %v4754, 1
    %v4839 = vrot.slane %v4755, 1
    %v4840 = vsel %vm4792, %v4838, %v4839
    %vm4841 = vcmask 1045504
    %v4842 = vrot.slane %v4720, 2
    %v4843 = vrot.slane %v4721, 2
    %v4844 = vsel %vm4841, %v4842, %v4843
    %v4845 = vrot.slane %v4722, 2
    %v4846 = vrot.slane %v4723, 2
    %v4847 = vsel %vm4841, %v4845, %v4846
    %v4848 = vrot.slane %v4724, 2
    %v4849 = vrot.slane %v4725, 2
    %v4850 = vsel %vm4841, %v4848, %v4849
    %v4851 = vrot.slane %v4726, 2
    %v4852 = vrot.slane %v4727, 2
    %v4853 = vsel %vm4841, %v4851, %v4852
    %v4854 = vrot.slane %v4728, 2
    %v4855 = vrot.slane %v4729, 2
    %v4856 = vsel %vm4841, %v4854, %v4855
    %v4857 = vrot.slane %v4730, 2
    %v4858 = vrot.slane %v4731, 2
    %v4859 = vsel %vm4841, %v4857, %v4858
    %v4860 = vrot.slane %v4732, 2
    %v4861 = vrot.slane %v4733, 2
    %v4862 = vsel %vm4841, %v4860, %v4861
    %v4863 = vrot.slane %v4734, 2
    %v4864 = vrot.slane %v4735, 2
    %v4865 = vsel %vm4841, %v4863, %v4864
    %v4866 = vrot.slane %v4740, 2
    %v4867 = vrot.slane %v4741, 2
    %v4868 = vsel %vm4841, %v4866, %v4867
    %v4869 = vrot.slane %v4742, 2
    %v4870 = vrot.slane %v4743, 2
    %v4871 = vsel %vm4841, %v4869, %v4870
    %v4872 = vrot.slane %v4744, 2
    %v4873 = vrot.slane %v4745, 2
    %v4874 = vsel %vm4841, %v4872, %v4873
    %v4875 = vrot.slane %v4746, 2
    %v4876 = vrot.slane %v4747, 2
    %v4877 = vsel %vm4841, %v4875, %v4876
    %v4878 = vrot.slane %v4748, 2
    %v4879 = vrot.slane %v4749, 2
    %v4880 = vsel %vm4841, %v4878, %v4879
    %v4881 = vrot.slane %v4750, 2
    %v4882 = vrot.slane %v4751, 2
    %v4883 = vsel %vm4841, %v4881, %v4882
    %v4884 = vrot.slane %v4752, 2
    %v4885 = vrot.slane %v4753, 2
    %v4886 = vsel %vm4841, %v4884, %v4885
    %v4887 = vrot.slane %v4754, 2
    %v4888 = vrot.slane %v4755, 2
    %v4889 = vsel %vm4841, %v4887, %v4888
    %v4894 = vrot.slane %v4736, 1
    %v4895 = vrot.slane %v4737, 1
    %v4896 = vsel %vm4792, %v4894, %v4895
    %v4897 = vrot.slane %v4756, 1
    %v4898 = vrot.slane %v4757, 1
    %v4899 = vsel %vm4792, %v4897, %v4898
    %v4916 = vrot.slane %v4736, 2
    %v4917 = vrot.slane %v4737, 2
    %v4918 = vsel %vm4841, %v4916, %v4917
    %v4919 = vrot.slane %v4756, 2
    %v4920 = vrot.slane %v4757, 2
    %v4921 = vsel %vm4841, %v4919, %v4920
    %v4926 = vrot.slane %v4738, 1
    %v4927 = vrot.slane %v4739, 1
    %v4928 = vsel %vm4792, %v4926, %v4927
    %v4929 = vrot.slane %v4758, 1
    %v4930 = vrot.slane %v4759, 1
    %v4931 = vsel %vm4792, %v4929, %v4930
    %v4932 = vrot.slane %v4738, 2
    %v4933 = vrot.slane %v4739, 2
    %v4934 = vsel %vm4841, %v4932, %v4933
    %v4935 = vrot.slane %v4758, 2
    %v4936 = vrot.slane %v4759, 2
    %v4937 = vsel %vm4841, %v4935, %v4936
    %4938 = vrot.lane.b32.xlu0 %v4795, 32
    %v4939 = vpop.permute.xlu0 %4938
    %4940 = vrot.lane.b32.xlu0 %v4798, 32
    %v4941 = vpop.permute.xlu0 %4940
    %4942 = vrot.lane.b32.xlu0 %v4801, 32
    %v4943 = vpop.permute.xlu0 %4942
    %4944 = vrot.lane.b32.xlu0 %v4804, 32
    %v4945 = vpop.permute.xlu0 %4944
    %4946 = vrot.lane.b32.xlu0 %v4807, 32
    %v4947 = vpop.permute.xlu0 %4946
    %4948 = vrot.lane.b32.xlu0 %v4810, 32
    %v4949 = vpop.permute.xlu0 %4948
    %4950 = vrot.lane.b32.xlu0 %v4813, 32
    %v4951 = vpop.permute.xlu0 %4950
    %4952 = vrot.lane.b32.xlu0 %v4816, 32
    %v4953 = vpop.permute.xlu0 %4952
    %4954 = vrot.lane.b32.xlu0 %v4819, 32
    %v4955 = vpop.permute.xlu0 %4954
    %4956 = vrot.lane.b32.xlu0 %v4822, 32
    %v4957 = vpop.permute.xlu0 %4956
    %4958 = vrot.lane.b32.xlu0 %v4825, 32
    %v4959 = vpop.permute.xlu0 %4958
    %4960 = vrot.lane.b32.xlu0 %v4828, 32
    %v4961 = vpop.permute.xlu0 %4960
    %4962 = vrot.lane.b32.xlu0 %v4831, 32
    %v4963 = vpop.permute.xlu0 %4962
    %4964 = vrot.lane.b32.xlu0 %v4834, 32
    %v4965 = vpop.permute.xlu0 %4964
    %4966 = vrot.lane.b32.xlu0 %v4837, 32
    %v4967 = vpop.permute.xlu0 %4966
    %4968 = vrot.lane.b32.xlu0 %v4840, 32
    %v4969 = vpop.permute.xlu0 %4968
    %4986 = vrot.lane.b32.xlu0 %v4844, 64
    %v4987 = vpop.permute.xlu0 %4986
    %4988 = vrot.lane.b32.xlu0 %v4847, 64
    %v4989 = vpop.permute.xlu0 %4988
    %4990 = vrot.lane.b32.xlu0 %v4850, 64
    %v4991 = vpop.permute.xlu0 %4990
    %4992 = vrot.lane.b32.xlu0 %v4853, 64
    %v4993 = vpop.permute.xlu0 %4992
    %4994 = vrot.lane.b32.xlu0 %v4856, 64
    %v4995 = vpop.permute.xlu0 %4994
    %4996 = vrot.lane.b32.xlu0 %v4859, 64
    %v4997 = vpop.permute.xlu0 %4996
    %4998 = vrot.lane.b32.xlu0 %v4862, 64
    %v4999 = vpop.permute.xlu0 %4998
    %5000 = vrot.lane.b32.xlu0 %v4865, 64
    %v5001 = vpop.permute.xlu0 %5000
    %5002 = vrot.lane.b32.xlu0 %v4868, 64
    %v5003 = vpop.permute.xlu0 %5002
    %5004 = vrot.lane.b32.xlu0 %v4871, 64
    %v5005 = vpop.permute.xlu0 %5004
    %5006 = vrot.lane.b32.xlu0 %v4874, 64
    %v5007 = vpop.permute.xlu0 %5006
    %5008 = vrot.lane.b32.xlu0 %v4877, 64
    %v5009 = vpop.permute.xlu0 %5008
    %5010 = vrot.lane.b32.xlu0 %v4880, 64
    %v5011 = vpop.permute.xlu0 %5010
    %5012 = vrot.lane.b32.xlu0 %v4883, 64
    %v5013 = vpop.permute.xlu0 %5012
    %5014 = vrot.lane.b32.xlu0 %v4886, 64
    %v5015 = vpop.permute.xlu0 %5014
    %5016 = vrot.lane.b32.xlu0 %v4889, 64
    %v5017 = vpop.permute.xlu0 %5016
    %5034 = vrot.lane.b32.xlu0 %v4722, 96
    %v5035 = vpop.permute.xlu0 %5034
    %5036 = vrot.lane.b32.xlu0 %v4724, 96
    %v5037 = vpop.permute.xlu0 %5036
    %5038 = vrot.lane.b32.xlu0 %v4726, 96
    %v5039 = vpop.permute.xlu0 %5038
    %5040 = vrot.lane.b32.xlu0 %v4728, 96
    %v5041 = vpop.permute.xlu0 %5040
    %5042 = vrot.lane.b32.xlu0 %v4730, 96
    %v5043 = vpop.permute.xlu0 %5042
    %5044 = vrot.lane.b32.xlu0 %v4732, 96
    %v5045 = vpop.permute.xlu0 %5044
    %5046 = vrot.lane.b32.xlu0 %v4734, 96
    %v5047 = vpop.permute.xlu0 %5046
    %5048 = vrot.lane.b32.xlu0 %v4736, 96
    %v5049 = vpop.permute.xlu0 %5048
    %5050 = vrot.lane.b32.xlu0 %v4742, 96
    %v5051 = vpop.permute.xlu0 %5050
    %5052 = vrot.lane.b32.xlu0 %v4744, 96
    %v5053 = vpop.permute.xlu0 %5052
    %5054 = vrot.lane.b32.xlu0 %v4746, 96
    %v5055 = vpop.permute.xlu0 %5054
    %5056 = vrot.lane.b32.xlu0 %v4748, 96
    %v5057 = vpop.permute.xlu0 %5056
    %5058 = vrot.lane.b32.xlu0 %v4750, 96
    %v5059 = vpop.permute.xlu0 %5058
    %5060 = vrot.lane.b32.xlu0 %v4752, 96
    %v5061 = vpop.permute.xlu0 %5060
    %5062 = vrot.lane.b32.xlu0 %v4754, 96
    %v5063 = vpop.permute.xlu0 %5062
    %5064 = vrot.lane.b32.xlu0 %v4756, 96
    %v5065 = vpop.permute.xlu0 %5064
    %5082 = vrot.lane.b32.xlu0 %v4847, 32
    %v5083 = vpop.permute.xlu0 %5082
    %5084 = vrot.lane.b32.xlu0 %v4850, 32
    %v5085 = vpop.permute.xlu0 %5084
    %5086 = vrot.lane.b32.xlu0 %v4853, 32
    %v5087 = vpop.permute.xlu0 %5086
    %5088 = vrot.lane.b32.xlu0 %v4856, 32
    %v5089 = vpop.permute.xlu0 %5088
    %5090 = vrot.lane.b32.xlu0 %v4859, 32
    %v5091 = vpop.permute.xlu0 %5090
    %5092 = vrot.lane.b32.xlu0 %v4862, 32
    %v5093 = vpop.permute.xlu0 %5092
    %5094 = vrot.lane.b32.xlu0 %v4865, 32
    %v5095 = vpop.permute.xlu0 %5094
    %5096 = vrot.lane.b32.xlu0 %v4918, 32
    %v5097 = vpop.permute.xlu0 %5096
    %5098 = vrot.lane.b32.xlu0 %v4871, 32
    %v5099 = vpop.permute.xlu0 %5098
    %5100 = vrot.lane.b32.xlu0 %v4874, 32
    %v5101 = vpop.permute.xlu0 %5100
    %5102 = vrot.lane.b32.xlu0 %v4877, 32
    %v5103 = vpop.permute.xlu0 %5102
    %5104 = vrot.lane.b32.xlu0 %v4880, 32
    %v5105 = vpop.permute.xlu0 %5104
    %5106 = vrot.lane.b32.xlu0 %v4883, 32
    %v5107 = vpop.permute.xlu0 %5106
    %5108 = vrot.lane.b32.xlu0 %v4886, 32
    %v5109 = vpop.permute.xlu0 %5108
    %5110 = vrot.lane.b32.xlu0 %v4889, 32
    %v5111 = vpop.permute.xlu0 %5110
    %5112 = vrot.lane.b32.xlu0 %v4921, 32
    %v5113 = vpop.permute.xlu0 %5112
    %5130 = vrot.lane.b32.xlu0 %v4724, 64
    %v5131 = vpop.permute.xlu0 %5130
    %5132 = vrot.lane.b32.xlu0 %v4726, 64
    %v5133 = vpop.permute.xlu0 %5132
    %5134 = vrot.lane.b32.xlu0 %v4728, 64
    %v5135 = vpop.permute.xlu0 %5134
    %5136 = vrot.lane.b32.xlu0 %v4730, 64
    %v5137 = vpop.permute.xlu0 %5136
    %5138 = vrot.lane.b32.xlu0 %v4732, 64
    %v5139 = vpop.permute.xlu0 %5138
    %5140 = vrot.lane.b32.xlu0 %v4734, 64
    %v5141 = vpop.permute.xlu0 %5140
    %5142 = vrot.lane.b32.xlu0 %v4736, 64
    %v5143 = vpop.permute.xlu0 %5142
    %5144 = vrot.lane.b32.xlu0 %v4738, 64
    %v5145 = vpop.permute.xlu0 %5144
    %5146 = vrot.lane.b32.xlu0 %v4744, 64
    %v5147 = vpop.permute.xlu0 %5146
    %5148 = vrot.lane.b32.xlu0 %v4746, 64
    %v5149 = vpop.permute.xlu0 %5148
    %5150 = vrot.lane.b32.xlu0 %v4748, 64
    %v5151 = vpop.permute.xlu0 %5150
    %5152 = vrot.lane.b32.xlu0 %v4750, 64
    %v5153 = vpop.permute.xlu0 %5152
    %5154 = vrot.lane.b32.xlu0 %v4752, 64
    %v5155 = vpop.permute.xlu0 %5154
    %5156 = vrot.lane.b32.xlu0 %v4754, 64
    %v5157 = vpop.permute.xlu0 %5156
    %5158 = vrot.lane.b32.xlu0 %v4756, 64
    %v5159 = vpop.permute.xlu0 %5158
    %5160 = vrot.lane.b32.xlu0 %v4758, 64
    %v5161 = vpop.permute.xlu0 %5160
    %5178 = vrot.lane.b32.xlu0 %v4801, 96
    %v5179 = vpop.permute.xlu0 %5178
    %5180 = vrot.lane.b32.xlu0 %v4804, 96
    %v5181 = vpop.permute.xlu0 %5180
    %5182 = vrot.lane.b32.xlu0 %v4807, 96
    %v5183 = vpop.permute.xlu0 %5182
    %5184 = vrot.lane.b32.xlu0 %v4810, 96
    %v5185 = vpop.permute.xlu0 %5184
    %5186 = vrot.lane.b32.xlu0 %v4813, 96
    %v5187 = vpop.permute.xlu0 %5186
    %5188 = vrot.lane.b32.xlu0 %v4816, 96
    %v5189 = vpop.permute.xlu0 %5188
    %5190 = vrot.lane.b32.xlu0 %v4896, 96
    %v5191 = vpop.permute.xlu0 %5190
    %5192 = vrot.lane.b32.xlu0 %v4928, 96
    %v5193 = vpop.permute.xlu0 %5192
    %5194 = vrot.lane.b32.xlu0 %v4825, 96
    %v5195 = vpop.permute.xlu0 %5194
    %5196 = vrot.lane.b32.xlu0 %v4828, 96
    %v5197 = vpop.permute.xlu0 %5196
    %5198 = vrot.lane.b32.xlu0 %v4831, 96
    %v5199 = vpop.permute.xlu0 %5198
    %5200 = vrot.lane.b32.xlu0 %v4834, 96
    %v5201 = vpop.permute.xlu0 %5200
    %5202 = vrot.lane.b32.xlu0 %v4837, 96
    %v5203 = vpop.permute.xlu0 %5202
    %5204 = vrot.lane.b32.xlu0 %v4840, 96
    %v5205 = vpop.permute.xlu0 %5204
    %5206 = vrot.lane.b32.xlu0 %v4899, 96
    %v5207 = vpop.permute.xlu0 %5206
    %5208 = vrot.lane.b32.xlu0 %v4931, 96
    %v5209 = vpop.permute.xlu0 %5208
    %v5226 = vsel %vm4015, %v4720, %v4939
    %v5227 = vsel %vm4015, %v4722, %v4941
    %v5228 = vsel %vm4015, %v4724, %v4943
    %v5229 = vsel %vm4015, %v4726, %v4945
    %v5230 = vsel %vm4015, %v4728, %v4947
    %v5231 = vsel %vm4015, %v4730, %v4949
    %v5232 = vsel %vm4015, %v4732, %v4951
    %v5233 = vsel %vm4015, %v4734, %v4953
    %v5234 = vsel %vm4015, %v4740, %v4955
    %v5235 = vsel %vm4015, %v4742, %v4957
    %v5236 = vsel %vm4015, %v4744, %v4959
    %v5237 = vsel %vm4015, %v4746, %v4961
    %v5238 = vsel %vm4015, %v4748, %v4963
    %v5239 = vsel %vm4015, %v4750, %v4965
    %v5240 = vsel %vm4015, %v4752, %v4967
    %v5241 = vsel %vm4015, %v4754, %v4969
    %vm5242 = vcmask 523264
    %v5243 = vsel %vm5242, %v5226, %v4987
    %v5244 = vsel %vm5242, %v5227, %v4989
    %v5245 = vsel %vm5242, %v5228, %v4991
    %v5246 = vsel %vm5242, %v5229, %v4993
    %v5247 = vsel %vm5242, %v5230, %v4995
    %v5248 = vsel %vm5242, %v5231, %v4997
    %v5249 = vsel %vm5242, %v5232, %v4999
    %v5250 = vsel %vm5242, %v5233, %v5001
    %v5251 = vsel %vm5242, %v5234, %v5003
    %v5252 = vsel %vm5242, %v5235, %v5005
    %v5253 = vsel %vm5242, %v5236, %v5007
    %v5254 = vsel %vm5242, %v5237, %v5009
    %v5255 = vsel %vm5242, %v5238, %v5011
    %v5256 = vsel %vm5242, %v5239, %v5013
    %v5257 = vsel %vm5242, %v5240, %v5015
    %v5258 = vsel %vm5242, %v5241, %v5017
    %vm5259 = vcmask 785408
    %v5260 = vsel %vm5259, %v5243, %v5035
    %v5261 = vsel %vm5259, %v5244, %v5037
    %v5262 = vsel %vm5259, %v5245, %v5039
    %v5263 = vsel %vm5259, %v5246, %v5041
    %v5264 = vsel %vm5259, %v5247, %v5043
    %v5265 = vsel %vm5259, %v5248, %v5045
    %v5266 = vsel %vm5259, %v5249, %v5047
    %v5267 = vsel %vm5259, %v5250, %v5049
    %v5268 = vsel %vm5259, %v5251, %v5051
    %v5269 = vsel %vm5259, %v5252, %v5053
    %v5270 = vsel %vm5259, %v5253, %v5055
    %v5271 = vsel %vm5259, %v5254, %v5057
    %v5272 = vsel %vm5259, %v5255, %v5059
    %v5273 = vsel %vm5259, %v5256, %v5061
    %v5274 = vsel %vm5259, %v5257, %v5063
    %v5275 = vsel %vm5259, %v5258, %v5065
    %v5276 = vsel %vm4015, %v4798, %v5083
    %v5277 = vsel %vm4015, %v4801, %v5085
    %v5278 = vsel %vm4015, %v4804, %v5087
    %v5279 = vsel %vm4015, %v4807, %v5089
    %v5280 = vsel %vm4015, %v4810, %v5091
    %v5281 = vsel %vm4015, %v4813, %v5093
    %v5282 = vsel %vm4015, %v4816, %v5095
    %v5283 = vsel %vm4015, %v4896, %v5097
    %v5284 = vsel %vm4015, %v4822, %v5099
    %v5285 = vsel %vm4015, %v4825, %v5101
    %v5286 = vsel %vm4015, %v4828, %v5103
    %v5287 = vsel %vm4015, %v4831, %v5105
    %v5288 = vsel %vm4015, %v4834, %v5107
    %v5289 = vsel %vm4015, %v4837, %v5109
    %v5290 = vsel %vm4015, %v4840, %v5111
    %v5291 = vsel %vm4015, %v4899, %v5113
    %v5292 = vsel %vm5242, %v5276, %v5131
    %v5293 = vsel %vm5242, %v5277, %v5133
    %v5294 = vsel %vm5242, %v5278, %v5135
    %v5295 = vsel %vm5242, %v5279, %v5137
    %v5296 = vsel %vm5242, %v5280, %v5139
    %v5297 = vsel %vm5242, %v5281, %v5141
    %v5298 = vsel %vm5242, %v5282, %v5143
    %v5299 = vsel %vm5242, %v5283, %v5145
    %v5300 = vsel %vm5242, %v5284, %v5147
    %v5301 = vsel %vm5242, %v5285, %v5149
    %v5302 = vsel %vm5242, %v5286, %v5151
    %v5303 = vsel %vm5242, %v5287, %v5153
    %v5304 = vsel %vm5242, %v5288, %v5155
    %v5305 = vsel %vm5242, %v5289, %v5157
    %v5306 = vsel %vm5242, %v5290, %v5159
    %v5307 = vsel %vm5242, %v5291, %v5161
    %v5308 = vsel %vm5259, %v5292, %v5179
    %v5309 = vsel %vm5259, %v5293, %v5181
    %v5310 = vsel %vm5259, %v5294, %v5183
    %v5311 = vsel %vm5259, %v5295, %v5185
    %v5312 = vsel %vm5259, %v5296, %v5187
    %v5313 = vsel %vm5259, %v5297, %v5189
    %v5314 = vsel %vm5259, %v5298, %v5191
    %v5315 = vsel %vm5259, %v5299, %v5193
    %v5316 = vsel %vm5259, %v5300, %v5195
    %v5317 = vsel %vm5259, %v5301, %v5197
    %v5318 = vsel %vm5259, %v5302, %v5199
    %v5319 = vsel %vm5259, %v5303, %v5201
    %v5320 = vsel %vm5259, %v5304, %v5203
    %v5321 = vsel %vm5259, %v5305, %v5205
    %v5322 = vsel %vm5259, %v5306, %v5207
    %v5323 = vsel %vm5259, %v5307, %v5209
    %v5324 = vld [vmem:[%s3] sm:$0xff]
    %v5325 = vld [vmem:[%s3 + $0x8] sm:$0xff]
    %v5326 = vld [vmem:[%s3 + $0x10] sm:$0xff]
    %v5327 = vld [vmem:[%s3 + $0x18] sm:$0xff]
    %v5328 = vld [vmem:[%s3 + $0x20] sm:$0xff]
    %v5329 = vld [vmem:[%s3 + $0x28] sm:$0xff]
    %v5330 = vld [vmem:[%s3 + $0x30] sm:$0xff]
    %v5331 = vld [vmem:[%s3 + $0x38] sm:$0xff]
    %v5332 = vld [vmem:[%s3 + $0x40] sm:$0xff]
    %v5333 = vld [vmem:[%s3 + $0x48] sm:$0xff]
    %v5334 = vld [vmem:[%s3 + $0x50] sm:$0xff]
    %v5335 = vld [vmem:[%s3 + $0x58] sm:$0xff]
    %v5336 = vld [vmem:[%s3 + $0x60] sm:$0xff]
    %v5337 = vld [vmem:[%s3 + $0x68] sm:$0xff]
    %v5338 = vld [vmem:[%s3 + $0x70] sm:$0xff]
    %v5339 = vld [vmem:[%s3 + $0x78] sm:$0xff]
    %v5340 = vld [vmem:[%s3 + $0x80] sm:$0xff]
    %v5341 = vld [vmem:[%s3 + $0x88] sm:$0xff]
    %v5342 = vld [vmem:[%s3 + $0x90] sm:$0xff]
    %v5343 = vld [vmem:[%s3 + $0x98] sm:$0xff]
    %v5344 = vld [vmem:[%s3 + $0xa0] sm:$0xff]
    %v5345 = vld [vmem:[%s3 + $0xa8] sm:$0xff]
    %v5346 = vld [vmem:[%s3 + $0xb0] sm:$0xff]
    %v5347 = vld [vmem:[%s3 + $0xb8] sm:$0xff]
    %v5348 = vld [vmem:[%s3 + $0xc0] sm:$0xff]
    %v5349 = vld [vmem:[%s3 + $0xc8] sm:$0xff]
    %v5350 = vld [vmem:[%s3 + $0xd0] sm:$0xff]
    %v5351 = vld [vmem:[%s3 + $0xd8] sm:$0xff]
    %v5352 = vld [vmem:[%s3 + $0xe0] sm:$0xff]
    %v5353 = vld [vmem:[%s3 + $0xe8] sm:$0xff]
    %v5354 = vld [vmem:[%s3 + $0xf0] sm:$0xff]
    %v5355 = vld [vmem:[%s3 + $0xf8] sm:$0xff]
    %v5356 = vld [vmem:[%s3 + $0x100] sm:$0xff]
    %v5357 = vld [vmem:[%s3 + $0x108] sm:$0xff]
    %v5358 = vld [vmem:[%s3 + $0x110] sm:$0xff]
    %v5359 = vld [vmem:[%s3 + $0x118] sm:$0xff]
    %v5360 = vld [vmem:[%s4] sm:$0x1]
    %v5362 = vlaneseq
    %v5363 = vshrl.u32 %v5362, 7
    %v5364 = vsub.s32 0, %v5363
    %v5365 = vrot.slane %v5360, %v5364
    %v5367 = vsel %vm4015, %v4850, 0
    %v5369 = vsel %vm4015, %v4853, 0
    %v5371 = vsel %vm4015, %v4856, 0
    %v5373 = vsel %vm4015, %v4859, 0
    %v5375 = vsel %vm4015, %v4862, 0
    %v5377 = vsel %vm4015, %v4865, 0
    %v5379 = vsel %vm4015, %v4918, 0
    %v5381 = vsel %vm4015, %v4934, 0
    %v5383 = vsel %vm4015, %v4874, 0
    %v5385 = vsel %vm4015, %v4877, 0
    %v5387 = vsel %vm4015, %v4880, 0
    %v5389 = vsel %vm4015, %v4883, 0
    %v5391 = vsel %vm4015, %v4886, 0
    %v5393 = vsel %vm4015, %v4889, 0
    %v5395 = vsel %vm4015, %v4921, 0
    %v5397 = vsel %vm4015, %v4937, 0
    %5399 = vmatprep.subr.mxu0 0.0
    %5400 = vmatpush1.msra.mxu0 %v5339
    %5401 = vmatprep.subr.mxu0 0.0
    %5402 = vmatpush1.msra.mxu0 %v5338
    %5403 = vmatprep.subr.mxu0 0.0
    %5404 = vmatpush1.msra.mxu0 %v5337
    %5405 = vmatprep.subr.mxu0 0.0
    %5406 = vmatpush1.msra.mxu0 %v5336
    %5407 = vmatprep.subr.mxu0 0.0
    %5408 = vmatpush1.msra.mxu0 %v5335
    %5409 = vmatprep.subr.mxu0 0.0
    %5410 = vmatpush1.msra.mxu0 %v5334
    %5411 = vmatprep.subr.mxu0 0.0
    %5412 = vmatpush1.msra.mxu0 %v5333
    %5413 = vmatprep.subr.mxu0 0.0
    %5414 = vmatpush1.msra.mxu0 %v5332
    %5415 = vmatprep.subr.mxu0 0.0
    %5416 = vmatpush1.msra.mxu0 %v5331
    %5417 = vmatprep.subr.mxu0 0.0
    %5418 = vmatpush1.msra.mxu0 %v5330
    %5419 = vmatprep.subr.mxu0 0.0
    %5420 = vmatpush1.msra.mxu0 %v5329
    %5421 = vmatprep.subr.mxu0 0.0
    %5422 = vmatpush1.msra.mxu0 %v5328
    %5423 = vmatprep.subr.mxu0 0.0
    %5424 = vmatpush1.msra.mxu0 %v5327
    %5425 = vmatprep.subr.mxu0 0.0
    %5426 = vmatpush1.msra.mxu0 %v5326
    %5427 = vmatprep.subr.mxu0 0.0
    %5428 = vmatpush1.msra.mxu0 %v5325
    %5429 = vmatprep.subr.mxu0 0.0
    %5430 = vmatpush1.msra.mxu0 %v5324
    %5431 = vmatprep.subr.mxu0 0.0
    %5432 = vmatpush2.msra.mxu0 %v5355
    %5433 = vmatprep.subr.mxu0 0.0
    %5434 = vmatpush2.msra.mxu0 %v5354
    %5435 = vmatprep.subr.mxu0 0.0
    %5436 = vmatpush2.msra.mxu0 %v5353
    %5437 = vmatprep.subr.mxu0 0.0
    %5438 = vmatpush2.msra.mxu0 %v5352
    %5439 = vmatprep.subr.mxu0 0.0
    %5440 = vmatpush2.msra.mxu0 %v5351
    %5441 = vmatprep.subr.mxu0 0.0
    %5442 = vmatpush2.msra.mxu0 %v5350
    %5443 = vmatprep.subr.mxu0 0.0
    %5444 = vmatpush2.msra.mxu0 %v5349
    %5445 = vmatprep.subr.mxu0 0.0
    %5446 = vmatpush2.msra.mxu0 %v5348
    %5447 = vmatprep.subr.mxu0 0.0
    %5448 = vmatpush2.msra.mxu0 %v5347
    %5449 = vmatprep.subr.mxu0 0.0
    %5450 = vmatpush2.msra.mxu0 %v5346
    %5451 = vmatprep.subr.mxu0 0.0
    %5452 = vmatpush2.msra.mxu0 %v5345
    %5453 = vmatprep.subr.mxu0 0.0
    %5454 = vmatpush2.msra.mxu0 %v5344
    %5455 = vmatprep.subr.mxu0 0.0
    %5456 = vmatpush2.msra.mxu0 %v5343
    %5457 = vmatprep.subr.mxu0 0.0
    %5458 = vmatpush2.msra.mxu0 %v5342
    %5459 = vmatprep.subr.mxu0 0.0
    %5460 = vmatpush2.msra.mxu0 %v5341
    %5461 = vmatprep.subr.mxu0 0.0
    %5462 = vmatpush2.msra.mxu0 %v5340
    %5463 = vmatprep.mubr.f32.mxu0 %v5308
    %5464 = vmatmul.mubr.f32.gmra.mxu0 %v5260
    %v5465 = vpop.f32.mrf.mxu0
    %v5466 = vadd.f32 %v5365, %v5465
    %v5467 = vpop.f32.mrf.mxu0
    %5468 = vmatprep.mubr.f32.mxu0 %v5309
    %5469 = vmatmul.mubr.f32.gmra.mxu0 %v5261
    %v5470 = vpop.f32.mrf.mxu0
    %v5471 = vadd.f32 %v5365, %v5470
    %v5472 = vpop.f32.mrf.mxu0
    %5473 = vmatprep.mubr.f32.mxu0 %v5310
    %5474 = vmatmul.mubr.f32.gmra.mxu0 %v5262
    %v5475 = vpop.f32.mrf.mxu0
    %v5476 = vadd.f32 %v5365, %v5475
    %v5477 = vpop.f32.mrf.mxu0
    %5478 = vmatprep.mubr.f32.mxu0 %v5311
    %5479 = vmatmul.mubr.f32.gmra.mxu0 %v5263
    %v5480 = vpop.f32.mrf.mxu0
    %v5481 = vadd.f32 %v5365, %v5480
    %v5482 = vpop.f32.mrf.mxu0
    %5483 = vmatprep.mubr.f32.mxu0 %v5312
    %5484 = vmatmul.mubr.f32.gmra.mxu0 %v5264
    %v5485 = vpop.f32.mrf.mxu0
    %v5486 = vadd.f32 %v5365, %v5485
    %v5487 = vpop.f32.mrf.mxu0
    %5488 = vmatprep.mubr.f32.mxu0 %v5313
    %5489 = vmatmul.mubr.f32.gmra.mxu0 %v5265
    %v5490 = vpop.f32.mrf.mxu0
    %v5491 = vadd.f32 %v5365, %v5490
    %v5492 = vpop.f32.mrf.mxu0
    %5493 = vmatprep.mubr.f32.mxu0 %v5314
    %5494 = vmatmul.mubr.f32.gmra.mxu0 %v5266
    %v5495 = vpop.f32.mrf.mxu0
    %v5496 = vadd.f32 %v5365, %v5495
    %v5497 = vpop.f32.mrf.mxu0
    %5498 = vmatprep.mubr.f32.mxu0 %v5315
    %5499 = vmatmul.mubr.f32.gmra.mxu0 %v5267
    %v5500 = vpop.f32.mrf.mxu0
    %v5501 = vadd.f32 %v5365, %v5500
    %v5502 = vpop.f32.mrf.mxu0
    %5503 = vmatprep.mubr.f32.mxu0 %v5316
    %5504 = vmatmul.mubr.f32.gmra.mxu0 %v5268
    %v5505 = vpop.f32.mrf.mxu0
    %v5506 = vadd.f32 %v5365, %v5505
    %v5507 = vpop.f32.mrf.mxu0
    %5508 = vmatprep.mubr.f32.mxu0 %v5317
    %5509 = vmatmul.mubr.f32.gmra.mxu0 %v5269
    %v5510 = vpop.f32.mrf.mxu0
    %v5511 = vadd.f32 %v5365, %v5510
    %v5512 = vpop.f32.mrf.mxu0
    %5513 = vmatprep.mubr.f32.mxu0 %v5318
    %5514 = vmatmul.mubr.f32.gmra.mxu0 %v5270
    %v5515 = vpop.f32.mrf.mxu0
    %v5516 = vadd.f32 %v5365, %v5515
    %v5517 = vpop.f32.mrf.mxu0
    %5518 = vmatprep.mubr.f32.mxu0 %v5319
    %5519 = vmatmul.mubr.f32.gmra.mxu0 %v5271
    %v5520 = vpop.f32.mrf.mxu0
    %v5521 = vadd.f32 %v5365, %v5520
    %v5522 = vpop.f32.mrf.mxu0
    %5523 = vmatprep.mubr.f32.mxu0 %v5320
    %5524 = vmatmul.mubr.f32.gmra.mxu0 %v5272
    %v5525 = vpop.f32.mrf.mxu0
    %v5526 = vadd.f32 %v5365, %v5525
    %v5527 = vpop.f32.mrf.mxu0
    %5528 = vmatprep.mubr.f32.mxu0 %v5321
    %5529 = vmatmul.mubr.f32.gmra.mxu0 %v5273
    %v5530 = vpop.f32.mrf.mxu0
    %v5531 = vadd.f32 %v5365, %v5530
    %v5532 = vpop.f32.mrf.mxu0
    %5533 = vmatprep.mubr.f32.mxu0 %v5322
    %5534 = vmatmul.mubr.f32.gmra.mxu0 %v5274
    %v5535 = vpop.f32.mrf.mxu0
    %v5536 = vadd.f32 %v5365, %v5535
    %v5537 = vpop.f32.mrf.mxu0
    %5538 = vmatprep.mubr.f32.mxu0 %v5323
    %5539 = vmatmul.mubr.f32.gmra.mxu0 %v5275
    %v5540 = vpop.f32.mrf.mxu0
    %v5541 = vadd.f32 %v5365, %v5540
    %v5542 = vpop.f32.mrf.mxu0
    %5543 = vdwg.mxu0
    %5544 = vmatprep.subr.mxu0 0.0
    %5545 = vmatpush1.msra.mxu0 0.0
    %5546 = vmatprep.subr.mxu0 0.0
    %5547 = vmatpush1.msra.mxu0 0.0
    %5548 = vmatprep.subr.mxu0 0.0
    %5549 = vmatpush1.msra.mxu0 0.0
    %5550 = vmatprep.subr.mxu0 0.0
    %5551 = vmatpush1.msra.mxu0 0.0
    %5552 = vmatprep.subr.mxu0 0.0
    %5553 = vmatpush1.msra.mxu0 0.0
    %5554 = vmatprep.subr.mxu0 0.0
    %5555 = vmatpush1.msra.mxu0 0.0
    %5556 = vmatprep.subr.mxu0 0.0
    %5557 = vmatpush1.msra.mxu0 0.0
    %5558 = vmatprep.subr.mxu0 0.0
    %5559 = vmatpush1.msra.mxu0 0.0
    %5560 = vmatprep.subr.mxu0 0.0
    %5561 = vmatpush1.msra.mxu0 0.0
    %5562 = vmatprep.subr.mxu0 0.0
    %5563 = vmatpush1.msra.mxu0 0.0
    %5564 = vmatprep.subr.mxu0 0.0
    %5565 = vmatpush1.msra.mxu0 0.0
    %5566 = vmatprep.subr.mxu0 0.0
    %5567 = vmatpush1.msra.mxu0 0.0
    %5568 = vmatprep.subr.mxu0 0.0
    %5569 = vmatpush1.msra.mxu0 %v5359
    %5570 = vmatprep.subr.mxu0 0.0
    %5571 = vmatpush1.msra.mxu0 %v5358
    %5572 = vmatprep.subr.mxu0 0.0
    %5573 = vmatpush1.msra.mxu0 %v5357
    %5574 = vmatprep.subr.mxu0 0.0
    %5575 = vmatpush1.msra.mxu0 %v5356
    %5576 = vmatprep.subr.mxu0 0.0
    %5577 = vmatpush2.msra.mxu0 0.0
    %5578 = vmatprep.subr.mxu0 0.0
    %5579 = vmatpush2.msra.mxu0 0.0
    %5580 = vmatprep.subr.mxu0 0.0
    %5581 = vmatpush2.msra.mxu0 0.0
    %5582 = vmatprep.subr.mxu0 0.0
    %5583 = vmatpush2.msra.mxu0 0.0
    %5584 = vmatprep.subr.mxu0 0.0
    %5585 = vmatpush2.msra.mxu0 0.0
    %5586 = vmatprep.subr.mxu0 0.0
    %5587 = vmatpush2.msra.mxu0 0.0
    %5588 = vmatprep.subr.mxu0 0.0
    %5589 = vmatpush2.msra.mxu0 0.0
    %5590 = vmatprep.subr.mxu0 0.0
    %5591 = vmatpush2.msra.mxu0 0.0
    %5592 = vmatprep.subr.mxu0 0.0
    %5593 = vmatpush2.msra.mxu0 0.0
    %5594 = vmatprep.subr.mxu0 0.0
    %5595 = vmatpush2.msra.mxu0 0.0
    %5596 = vmatprep.subr.mxu0 0.0
    %5597 = vmatpush2.msra.mxu0 0.0
    %5598 = vmatprep.subr.mxu0 0.0
    %5599 = vmatpush2.msra.mxu0 0.0
    %5600 = vmatprep.subr.mxu0 0.0
    %5601 = vmatpush2.msra.mxu0 0.0
    %5602 = vmatprep.subr.mxu0 0.0
    %5603 = vmatpush2.msra.mxu0 0.0
    %5604 = vmatprep.subr.mxu0 0.0
    %5605 = vmatpush2.msra.mxu0 0.0
    %5606 = vmatprep.subr.mxu0 0.0
    %5607 = vmatpush2.msra.mxu0 0.0
    %5608 = vmatprep.mubr.f32.mxu0 0.0
    %5609 = vmatmul.mubr.f32.gmra.mxu0 %v5367
    %v5610 = vpop.f32.mrf.mxu0
    %v5611 = vadd.f32 %v5466, %v5610
    %v5612 = vpop.f32.mrf.mxu0
    %5613 = vmatprep.mubr.f32.mxu0 0.0
    %5614 = vmatmul.mubr.f32.gmra.mxu0 %v5369
    %v5615 = vpop.f32.mrf.mxu0
    %v5616 = vadd.f32 %v5471, %v5615
    %v5617 = vpop.f32.mrf.mxu0
    %5618 = vmatprep.mubr.f32.mxu0 0.0
    %5619 = vmatmul.mubr.f32.gmra.mxu0 %v5371
    %v5620 = vpop.f32.mrf.mxu0
    %v5621 = vadd.f32 %v5476, %v5620
    %v5622 = vpop.f32.mrf.mxu0
    %5623 = vmatprep.mubr.f32.mxu0 0.0
    %5624 = vmatmul.mubr.f32.gmra.mxu0 %v5373
    %v5625 = vpop.f32.mrf.mxu0
    %v5626 = vadd.f32 %v5481, %v5625
    %v5627 = vpop.f32.mrf.mxu0
    %5628 = vmatprep.mubr.f32.mxu0 0.0
    %5629 = vmatmul.mubr.f32.gmra.mxu0 %v5375
    %v5630 = vpop.f32.mrf.mxu0
    %v5631 = vadd.f32 %v5486, %v5630
    %v5632 = vpop.f32.mrf.mxu0
    %5633 = vmatprep.mubr.f32.mxu0 0.0
    %5634 = vmatmul.mubr.f32.gmra.mxu0 %v5377
    %v5635 = vpop.f32.mrf.mxu0
    %v5636 = vadd.f32 %v5491, %v5635
    %v5637 = vpop.f32.mrf.mxu0
    %5638 = vmatprep.mubr.f32.mxu0 0.0
    %5639 = vmatmul.mubr.f32.gmra.mxu0 %v5379
    %v5640 = vpop.f32.mrf.mxu0
    %v5641 = vadd.f32 %v5496, %v5640
    %v5642 = vpop.f32.mrf.mxu0
    %5643 = vmatprep.mubr.f32.mxu0 0.0
    %5644 = vmatmul.mubr.f32.gmra.mxu0 %v5381
    %v5645 = vpop.f32.mrf.mxu0
    %v5646 = vadd.f32 %v5501, %v5645
    %v5647 = vpop.f32.mrf.mxu0
    %5648 = vmatprep.mubr.f32.mxu0 0.0
    %5649 = vmatmul.mubr.f32.gmra.mxu0 %v5383
    %v5650 = vpop.f32.mrf.mxu0
    %v5651 = vadd.f32 %v5506, %v5650
    %v5652 = vpop.f32.mrf.mxu0
    %5653 = vmatprep.mubr.f32.mxu0 0.0
    %5654 = vmatmul.mubr.f32.gmra.mxu0 %v5385
    %v5655 = vpop.f32.mrf.mxu0
    %v5656 = vadd.f32 %v5511, %v5655
    %v5657 = vpop.f32.mrf.mxu0
    %5658 = vmatprep.mubr.f32.mxu0 0.0
    %5659 = vmatmul.mubr.f32.gmra.mxu0 %v5387
    %v5660 = vpop.f32.mrf.mxu0
    %v5661 = vadd.f32 %v5516, %v5660
    %v5662 = vpop.f32.mrf.mxu0
    %5663 = vmatprep.mubr.f32.mxu0 0.0
    %5664 = vmatmul.mubr.f32.gmra.mxu0 %v5389
    %v5665 = vpop.f32.mrf.mxu0
    %v5666 = vadd.f32 %v5521, %v5665
    %v5667 = vpop.f32.mrf.mxu0
    %5668 = vmatprep.mubr.f32.mxu0 0.0
    %5669 = vmatmul.mubr.f32.gmra.mxu0 %v5391
    %v5670 = vpop.f32.mrf.mxu0
    %v5671 = vadd.f32 %v5526, %v5670
    %v5672 = vpop.f32.mrf.mxu0
    %5673 = vmatprep.mubr.f32.mxu0 0.0
    %5674 = vmatmul.mubr.f32.gmra.mxu0 %v5393
    %v5675 = vpop.f32.mrf.mxu0
    %v5676 = vadd.f32 %v5531, %v5675
    %v5677 = vpop.f32.mrf.mxu0
    %5678 = vmatprep.mubr.f32.mxu0 0.0
    %5679 = vmatmul.mubr.f32.gmra.mxu0 %v5395
    %v5680 = vpop.f32.mrf.mxu0
    %v5681 = vadd.f32 %v5536, %v5680
    %v5682 = vpop.f32.mrf.mxu0
    %5683 = vmatprep.mubr.f32.mxu0 0.0
    %5684 = vmatmul.mubr.f32.gmra.mxu0 %v5397
    %v5685 = vpop.f32.mrf.mxu0
    %v5686 = vadd.f32 %v5541, %v5685
    %v5687 = vpop.f32.mrf.mxu0
    %5688 = vdwg.mxu0
    %v5689 = vmax.f32 %v5611, 0.0
    %v5690 = vmax.f32 %v5616, 0.0
    %v5691 = vmax.f32 %v5621, 0.0
    %v5692 = vmax.f32 %v5626, 0.0
    %v5693 = vmax.f32 %v5631, 0.0
    %v5694 = vmax.f32 %v5636, 0.0
    %v5695 = vmax.f32 %v5641, 0.0
    %v5696 = vmax.f32 %v5646, 0.0
    %v5697 = vmax.f32 %v5651, 0.0
    %v5698 = vmax.f32 %v5656, 0.0
    %v5699 = vmax.f32 %v5661, 0.0
    %v5700 = vmax.f32 %v5666, 0.0
    %v5701 = vmax.f32 %v5671, 0.0
    %v5702 = vmax.f32 %v5676, 0.0
    %v5703 = vmax.f32 %v5681, 0.0
    %v5704 = vmax.f32 %v5686, 0.0
    %v5705 = vsel %vm5242, %v5689, 0.0
    %v5706 = vsel %vm5242, %v5690, 0.0
    %v5707 = vadd.f32 %v5705, %v5706
    %v5708 = vsel %vm5242, %v5691, 0.0
    %v5709 = vadd.f32 %v5707, %v5708
    %v5710 = vsel %vm5242, %v5692, 0.0
    %v5711 = vadd.f32 %v5709, %v5710
    %v5712 = vsel %vm5242, %v5693, 0.0
    %v5713 = vadd.f32 %v5711, %v5712
    %v5714 = vsel %vm5242, %v5694, 0.0
    %v5715 = vadd.f32 %v5713, %v5714
    %v5716 = vsel %vm5242, %v5695, 0.0
    %v5717 = vadd.f32 %v5715, %v5716
    %v5718 = vsel %vm5242, %v5696, 0.0
    %v5719 = vadd.f32 %v5717, %v5718
    %v5720 = vrot.slane %v5719, 4
    %v5721 = vadd.f32 %v5719, %v5720
    %v5722 = vrot.slane %v5721, 2
    %v5723 = vadd.f32 %v5721, %v5722
    %v5724 = vrot.slane %v5723, 1
    %v5725 = vadd.f32 %v5723, %v5724
    %v5726 = vsel %vm5242, %v5697, 0.0
    %v5727 = vsel %vm5242, %v5698, 0.0
    %v5728 = vadd.f32 %v5726, %v5727
    %v5729 = vsel %vm5242, %v5699, 0.0
    %v5730 = vadd.f32 %v5728, %v5729
    %v5731 = vsel %vm5242, %v5700, 0.0
    %v5732 = vadd.f32 %v5730, %v5731
    %v5733 = vsel %vm5242, %v5701, 0.0
    %v5734 = vadd.f32 %v5732, %v5733
    %v5735 = vsel %vm5242, %v5702, 0.0
    %v5736 = vadd.f32 %v5734, %v5735
    %v5737 = vsel %vm5242, %v5703, 0.0
    %v5738 = vadd.f32 %v5736, %v5737
    %v5739 = vsel %vm5242, %v5704, 0.0
    %v5740 = vadd.f32 %v5738, %v5739
    %v5741 = vrot.slane %v5740, 4
    %v5742 = vadd.f32 %v5740, %v5741
    %v5743 = vrot.slane %v5742, 2
    %v5744 = vadd.f32 %v5742, %v5743
    %v5745 = vrot.slane %v5744, 1
    %v5746 = vadd.f32 %v5744, %v5745
    %v5747 = vrcp.pop 64.0
    %v5748 = vmul.f32 %v5725, %v5747
    %v5749 = vmul.f32 %v5746, %v5747
    %v5750 = vld [vmem:[%s5] sm:$0xff]
    %v5751 = vld [vmem:[%s5 + $0x8] sm:$0xff]
    %v5752 = vld [vmem:[%s5 + $0x10] sm:$0xff]
    %v5753 = vld [vmem:[%s5 + $0x18] sm:$0xff]
    %v5754 = vld [vmem:[%s5 + $0x20] sm:$0xff]
    %v5755 = vld [vmem:[%s5 + $0x28] sm:$0xff]
    %v5756 = vld [vmem:[%s5 + $0x30] sm:$0xff]
    %v5757 = vld [vmem:[%s5 + $0x38] sm:$0xff]
    %v5758 = vld [vmem:[%s6] sm:$0x1]
    %v5760 = vlaneseq
    %v5761 = vshrl.u32 %v5760, 7
    %v5762 = vsub.s32 0, %v5761
    %v5763 = vrot.slane %v5758, %v5762
    %v5767 = vsel %vm4568, %v5749, %v5748
    %v5768 = vsel %vm5242, %v5767, 0
    %5770 = vmatprep.subr.mxu0 0.0
    %5771 = vmatpush1.msra.mxu0 0.0
    %5772 = vmatprep.subr.mxu0 0.0
    %5773 = vmatpush1.msra.mxu0 0.0
    %5774 = vmatprep.subr.mxu0 0.0
    %5775 = vmatpush1.msra.mxu0 0.0
    %5776 = vmatprep.subr.mxu0 0.0
    %5777 = vmatpush1.msra.mxu0 0.0
    %5778 = vmatprep.subr.mxu0 0.0
    %5779 = vmatpush1.msra.mxu0 0.0
    %5780 = vmatprep.subr.mxu0 0.0
    %5781 = vmatpush1.msra.mxu0 0.0
    %5782 = vmatprep.subr.mxu0 0.0
    %5783 = vmatpush1.msra.mxu0 0.0
    %5784 = vmatprep.subr.mxu0 0.0
    %5785 = vmatpush1.msra.mxu0 0.0
    %5786 = vmatprep.subr.mxu0 0.0
    %5787 = vmatpush1.msra.mxu0 %v5757
    %5788 = vmatprep.subr.mxu0 0.0
    %5789 = vmatpush1.msra.mxu0 %v5756
    %5790 = vmatprep.subr.mxu0 0.0
    %5791 = vmatpush1.msra.mxu0 %v5755
    %5792 = vmatprep.subr.mxu0 0.0
    %5793 = vmatpush1.msra.mxu0 %v5754
    %5794 = vmatprep.subr.mxu0 0.0
    %5795 = vmatpush1.msra.mxu0 %v5753
    %5796 = vmatprep.subr.mxu0 0.0
    %5797 = vmatpush1.msra.mxu0 %v5752
    %5798 = vmatprep.subr.mxu0 0.0
    %5799 = vmatpush1.msra.mxu0 %v5751
    %5800 = vmatprep.subr.mxu0 0.0
    %5801 = vmatpush1.msra.mxu0 %v5750
    %5802 = vmatprep.subr.mxu0 0.0
    %5803 = vmatpush2.msra.mxu0 0.0
    %5804 = vmatprep.subr.mxu0 0.0
    %5805 = vmatpush2.msra.mxu0 0.0
    %5806 = vmatprep.subr.mxu0 0.0
    %5807 = vmatpush2.msra.mxu0 0.0
    %5808 = vmatprep.subr.mxu0 0.0
    %5809 = vmatpush2.msra.mxu0 0.0
    %5810 = vmatprep.subr.mxu0 0.0
    %5811 = vmatpush2.msra.mxu0 0.0
    %5812 = vmatprep.subr.mxu0 0.0
    %5813 = vmatpush2.msra.mxu0 0.0
    %5814 = vmatprep.subr.mxu0 0.0
    %5815 = vmatpush2.msra.mxu0 0.0
    %5816 = vmatprep.subr.mxu0 0.0
    %5817 = vmatpush2.msra.mxu0 0.0
    %5818 = vmatprep.subr.mxu0 0.0
    %5819 = vmatpush2.msra.mxu0 0.0
    %5820 = vmatprep.subr.mxu0 0.0
    %5821 = vmatpush2.msra.mxu0 0.0
    %5822 = vmatprep.subr.mxu0 0.0
    %5823 = vmatpush2.msra.mxu0 0.0
    %5824 = vmatprep.subr.mxu0 0.0
    %5825 = vmatpush2.msra.mxu0 0.0
    %5826 = vmatprep.subr.mxu0 0.0
    %5827 = vmatpush2.msra.mxu0 0.0
    %5828 = vmatprep.subr.mxu0 0.0
    %5829 = vmatpush2.msra.mxu0 0.0
    %5830 = vmatprep.subr.mxu0 0.0
    %5831 = vmatpush2.msra.mxu0 0.0
    %5832 = vmatprep.subr.mxu0 0.0
    %5833 = vmatpush2.msra.mxu0 0.0
    %5834 = vmatprep.mubr.f32.mxu0 0.0
    %5835 = vmatmul.mubr.f32.gmra.mxu0 %v5768
    %v5836 = vpop.f32.mrf.mxu0
    %v5837 = vadd.f32 %v5763, %v5836
    %v5838 = vpop.f32.mrf.mxu0
    %5839 = vdwg.mxu0
    %vm5840 = vcmask 74752
    %5841 = vst.msk [vmem:[#allocation3] sm:$0x3] %vm5840, %v5837
    // Predicated region
    $region30: #{tpu_custom_call.1} parent=1 // pred_check
      _
    $region31: #{tpu_custom_call.1} parent=1 // pred_check_branch
      %5843 = sbr.rel (0) target = $region33
    $region32: #{tpu_custom_call.1} parent=1 // pred_region
      %s5845 = ssub.s32 32, 32
      %5846 = vsyncadd [#allocation4], %s5845
      %s5848 = sshll.u32 [#allocation3], 4
      %s5849 = int_to_ptr.vmem [resolvable:$true] %s5848
      %5851 = dma.vmem_to_hbm [thread:$0]  %s5849, 32, %s7, [#allocation4]
    $region33: #{tpu_custom_call.1} parent=1 // pred_fallthru
      _
    // Predicated region
    $region34: #{tpu_custom_call.1} parent=1 // pred_check
      _
    $region35: #{tpu_custom_call.1} parent=1 // pred_check_branch
      %5853 = sbr.rel (0) target = $region37
    $region36: #{tpu_custom_call.1} parent=1 // pred_region
      %5854 = dma.done [#allocation4], 32
    $region37: #{tpu_custom_call.1} parent=1 // pred_fallthru
      _
    %5855 = vsyncpa [#allocation4], 1

</llo_original>
